<compile_context>
chip_gen: v5e
topology: v5e:2x2
jax: 0.10.0
libtpu: 0.0.40
codegen_flags: <defaults>
</compile_context>

<pallas_src>
import functools

import jax
import jax.numpy as jnp
from jax import lax
from jax.experimental import pallas as pl
from jax.experimental.pallas import tpu as pltpu


def _round_up(x, m):
    return (x + m - 1) // m * m


def gru_recurrent_kernel(s_ref, xp_ref, wru_ref, wc_ref, out_ref, h_ref, *,
                         unroll):
    """One batch block, one chunk of timesteps.

    s_ref  : (1,)            int32 SMEM  true (unpadded) sequence length
    xp_ref : (tc, TB, 3*Hp)  bf16  precomputed x-projections (+ all biases)
    wru_ref: (Hp, 2*Hp)      bf16  fused [Wr.T | Wu.T]
    wc_ref : (Hp, Hp)        bf16  W.T (candidate, applied to h*r)
    out_ref: (TB, Hp)        f32   final hidden state (written on last chunk)
    h_ref  : (TB, Hp)        f32   persistent hidden-state scratch
    """
    t_blk = pl.program_id(1)
    n_t = pl.num_programs(1)
    tc = xp_ref.shape[0]
    hp = out_ref.shape[1]
    s_true = s_ref[0]

    @pl.when(t_blk == 0)
    def _():
        h_ref[...] = jnp.zeros_like(h_ref)

    # Hoist the weight loads out of the (partially) unrolled time loop.
    w_ru = wru_ref[...]
    w_c = wc_ref[...]

    def step(t, h):
        xp = xp_ref[t].astype(jnp.float32)                    # (TB, 3*Hp)
        # Fused reset/update pre-activations: h @ [Wr.T | Wu.T].
        g = jnp.dot(h.astype(jnp.bfloat16), w_ru,
                    preferred_element_type=jnp.float32)       # (TB, 2*Hp)
        r = jax.nn.sigmoid(g[:, :hp] + xp[:, :hp])
        u = jax.nn.sigmoid(g[:, hp:] + xp[:, hp:2 * hp])
        # Candidate: reset applied BEFORE the matmul (matches the module spec).
        hc = jnp.tanh(
            jnp.dot((h * r).astype(jnp.bfloat16), w_c,
                    preferred_element_type=jnp.float32) + xp[:, 2 * hp:])
        h_new = (1.0 - u) * h + u * hc
        # Mask padded tail timesteps: hidden state passes through unchanged.
        valid = (t_blk * tc + t) < s_true
        return jnp.where(valid, h_new, h)

    h_new = lax.fori_loop(0, tc, step, h_ref[...], unroll=unroll)
    h_ref[...] = h_new

    @pl.when(t_blk == n_t - 1)
    def _():
        out_ref[...] = h_new.astype(out_ref.dtype)


def gru_forward(inputs, params, *, time_chunk=16, batch_block_cap=256):
    """inputs: (batch, seq, d_model) f32 -> final hidden state (batch, hidden) f32."""
    B, S, D = inputs.shape
    H = params["Wr"].shape[0]
    f32 = jnp.float32
    bf16 = jnp.bfloat16

    Hp = _round_up(H, 128)

    # Time chunking: never fall back to tc=1 for awkward S — pad the time axis
    # of x_proj instead and mask the padded steps inside the kernel.
    tc = max(1, min(time_chunk, S))
    S_pad = _round_up(S, tc)
    n_t = S_pad // tc
    unroll = min(8, tc)

    # Batch tiling: cap the block at an MXU-friendly row count; large batches
    # yield n_b >= 2 so the "parallel" axis can shard across v7x's 2 TCs.
    Bp = _round_up(B, 8)
    if Bp <= batch_block_cap:
        TB, n_b = Bp, 1
    else:
        n_b = -(-Bp // batch_block_cap)
        TB = _round_up(-(-Bp // n_b), 8)
        Bp = n_b * TB

    # ---------------- hoisted, fully parallel input projection -----------------
    def pad_cols(w_t):                       # (D, H) -> (D, Hp)
        return jnp.pad(w_t, ((0, 0), (0, Hp - H)))

    # U_cat: (D, 3*Hp), column blocks [Ur.T | Uu.T | U.T], each padded to Hp lanes.
    u_cat = jnp.concatenate(
        [pad_cols(params["Ur"].T), pad_cols(params["Uu"].T), pad_cols(params["U"].T)],
        axis=1).astype(f32)                                              # (D, 3*Hp)
    # Fold *all* biases into the projection (b_Ur+b_Wr | b_Uu+b_Wu | b_U+b_W).
    b_cat = jnp.concatenate(
        [jnp.pad(params["b_Ur"] + params["b_Wr"], (0, Hp - H)),
         jnp.pad(params["b_Uu"] + params["b_Wu"], (0, Hp - H)),
         jnp.pad(params["b_U"] + params["b_W"], (0, Hp - H))]).astype(f32)  # (3*Hp,)

    x_pad = jnp.pad(inputs.astype(f32), ((0, Bp - B), (0, 0), (0, 0)))
    # Transpose the *small* input once so the projection is emitted directly in
    # (S, Bp, 3*Hp) without a second transpose pass over the large output.
    x_t = jnp.transpose(x_pad, (1, 0, 2))                                # (S, Bp, D)
    x_proj = jnp.einsum("sbd,dh->sbh", x_t, u_cat,
                        precision=lax.Precision.HIGHEST) + b_cat
    # Stream the only S-scaling HBM tensor in bf16 (halves DMA + xp VMEM).
    x_proj = x_proj.astype(bf16)
    if S_pad > S:
        x_proj = jnp.pad(x_proj, ((0, S_pad - S), (0, 0), (0, 0)))

    # ---------------- recurrent weights: fused, padded, bf16 -------------------
    def pad_hh(w_t):                          # (H, H) -> (Hp, Hp)
        return jnp.pad(w_t, ((0, Hp - H), (0, Hp - H)))

    w_ru = jnp.concatenate([pad_hh(params["Wr"].T), pad_hh(params["Wu"].T)],
                           axis=1).astype(bf16)                          # (Hp, 2*Hp)
    w_c = pad_hh(params["W"].T).astype(bf16)                             # (Hp, Hp)

    s_true = jnp.array([S], jnp.int32)
    kernel = functools.partial(gru_recurrent_kernel, unroll=unroll)

    # Generation-aware scoped-VMEM cap (v7x has only 64 MiB physical per TC).
    try:
        phys_vmem = int(pltpu.get_tpu_info().vmem_capacity_bytes)
    except Exception:
        phys_vmem = 64 * 1024 * 1024
    vmem_cap = max(32 * 1024 * 1024,
                   min(96 * 1024 * 1024, phys_vmem - 8 * 1024 * 1024))

    def build(weight_buffers):
        w_kw = ({"pipeline_mode": pl.Buffered(1)} if weight_buffers == 1 else {})
        bytes_needed = (
            weight_buffers * (w_ru.size + w_c.size) * 2     # bf16 weights
            + 2 * (tc * TB * 3 * Hp * 2)                    # bf16 xp chunk, 2 bufs
            + 2 * (TB * Hp * 4)                             # output block
            + TB * Hp * 4                                   # h scratch
        )
        vmem_limit = int(min(max(bytes_needed * 3 // 2, 32 * 1024 * 1024),
                             vmem_cap))
        return pl.pallas_call(
            kernel,
            out_shape=jax.ShapeDtypeStruct((Bp, Hp), f32),
            grid_spec=pltpu.PrefetchScalarGridSpec(
                num_scalar_prefetch=1,
                grid=(n_b, n_t),
                in_specs=[
                    pl.BlockSpec((tc, TB, 3 * Hp), lambda b, t, s: (t, b, 0)),
                    pl.BlockSpec((Hp, 2 * Hp), lambda b, t, s: (0, 0), **w_kw),
                    pl.BlockSpec((Hp, Hp), lambda b, t, s: (0, 0), **w_kw),
                ],
                out_specs=pl.BlockSpec((TB, Hp), lambda b, t, s: (b, 0)),
                scratch_shapes=[pltpu.VMEM((TB, Hp), f32)],
            ),
            compiler_params=pltpu.CompilerParams(
                dimension_semantics=("parallel", "arbitrary"),
                vmem_limit_bytes=vmem_limit,
            ),
        )

    try:
        # Grid-invariant weights never change across grid steps -> a single
        # buffer halves their VMEM footprint at zero perf cost.
        out_padded = build(1)(s_true, x_proj, w_ru, w_c)
    except Exception:
        # Fallback if this Pallas/Mosaic version rejects single-buffer specs.
        out_padded = build(2)(s_true, x_proj, w_ru, w_c)

    return out_padded[:B, :H]


def init_params(key, input_size, hidden_size):
    """Deterministic init mimicking nn.Linear's U(-1/sqrt(fan_in), 1/sqrt(fan_in))."""
    names_shapes = [
        ("Wr", (hidden_size, hidden_size)), ("Ur", (hidden_size, input_size)),
        ("Wu", (hidden_size, hidden_size)), ("Uu", (hidden_size, input_size)),
        ("W", (hidden_size, hidden_size)), ("U", (hidden_size, input_size)),
    ]
    params = {}
    keys = jax.random.split(key, len(names_shapes) * 2)
    for i, (name, shape) in enumerate(names_shapes):
        bound = 1.0 / jnp.sqrt(shape[1])
        params[name] = jax.random.uniform(
            keys[2 * i], shape, jnp.float32, -bound, bound)
        params["b_" + name] = jax.random.uniform(
            keys[2 * i + 1], (shape[0],), jnp.float32, -bound, bound)
    return params


def gru_reference(inputs, params):
    """Pure-JAX f32 reference of the PyTorch module."""
    B, S, D = inputs.shape
    H = params["Wr"].shape[0]
    h = jnp.zeros((B, H), jnp.float32)
    for t in range(S):
        x = inputs[:, t, :]
        r = jax.nn.sigmoid(h @ params["Wr"].T + params["b_Wr"]
                           + x @ params["Ur"].T + params["b_Ur"])
        u = jax.nn.sigmoid(h @ params["Wu"].T + params["b_Wu"]
                           + x @ params["Uu"].T + params["b_Uu"])
        h_tilde = jnp.tanh((h * r) @ params["W"].T + params["b_W"]
                           + x @ params["U"].T + params["b_U"])
        h = (1.0 - u) * h + u * h_tilde
    return h


if __name__ == "__main__":
    batch, seq, d_model, hidden = 2, 8, 16, 32

    key = jax.random.PRNGKey(0)
    k_x, k_p = jax.random.split(key)
    x = jax.random.normal(k_x, (batch, seq, d_model), jnp.float32)
    params = init_params(k_p, d_model, hidden)

    out = jax.block_until_ready(gru_forward(x, params))
    ref = gru_reference(x, params)

    assert out.shape == (batch, hidden)
    # x_proj is streamed in bf16 and recurrent matmul operands are bf16
    # (f32 accumulation), so the tolerance vs the pure-f32 reference is relaxed.
    assert jnp.allclose(out, ref, atol=3e-2, rtol=3e-2), "mismatch vs reference"

    print("KERNEL_OK")
</pallas_src>

<mosaic_0001>
module attributes {stable_mosaic.version = 11 : i64} {
  func.func @gru_recurrent_kernel(%arg0: i32, %arg1: i32, %arg2: memref<1xi32, #tpu.memory_space<smem>>, %arg3: memref<8x8x384xbf16, #tpu.memory_space<vmem>>, %arg4: memref<128x256xbf16, #tpu.memory_space<vmem>>, %arg5: memref<128x128xbf16, #tpu.memory_space<vmem>>, %arg6: memref<8x128xf32, #tpu.memory_space<vmem>>, %arg7: memref<8x128xf32, #tpu.memory_space<vmem>>) attributes {dimension_semantics = [#tpu.dimension_semantics<parallel>, #tpu.dimension_semantics<arbitrary>], iteration_bounds = array<i64: 1, 1>, scalar_prefetch = 1 : i64, scratch_operands = 1 : i64, tpu.core_type = #tpu.core_type<tc>, window_params = [{transform_indices = @transform_0, window_bounds = array<i64: 8, 8, 384>}, {pipeline_mode = #tpu.pipeline_mode<synchronous>, transform_indices = @transform_1, window_bounds = array<i64: 128, 256>}, {pipeline_mode = #tpu.pipeline_mode<synchronous>, transform_indices = @transform_2, window_bounds = array<i64: 128, 128>}, {transform_indices = @transform_3, window_bounds = array<i64: 8, 128>}]} {
    %c0 = arith.constant 0 : index
    %0 = memref.load %arg2[%c0] : memref<1xi32, #tpu.memory_space<smem>>
    %c0_i32 = arith.constant 0 : i32
    %1 = arith.cmpi eq, %arg1, %c0_i32 : i32
    %2 = arith.extui %1 : i1 to i32
    %c0_i32_0 = arith.constant 0 : i32
    %3 = arith.cmpi ne, %2, %c0_i32_0 : i32
    scf.if %3 {
      %cst_75 = arith.constant 0.000000e+00 : f32
      %307 = vector.broadcast %cst_75 : f32 to vector<8x128xf32>
      %c0_76 = arith.constant 0 : index
      %c0_77 = arith.constant 0 : index
      %308 = vector.load %arg7[%c0_76, %c0_77] : memref<8x128xf32, #tpu.memory_space<vmem>>, vector<8x128xf32>
      tpu.vector_store %arg7[%c0_76, %c0_77], %307 {strides = array<i32>} : memref<8x128xf32, #tpu.memory_space<vmem>>, vector<8x128xf32>,
    } else {
    }
    %c0_1 = arith.constant 0 : index
    %c0_2 = arith.constant 0 : index
    %4 = vector.load %arg4[%c0_1, %c0_2] : memref<128x256xbf16, #tpu.memory_space<vmem>>, vector<128x256xbf16>
    %c0_3 = arith.constant 0 : index
    %c0_4 = arith.constant 0 : index
    %5 = vector.load %arg5[%c0_3, %c0_4] : memref<128x128xbf16, #tpu.memory_space<vmem>>, vector<128x128xbf16>
    %c0_5 = arith.constant 0 : index
    %c0_6 = arith.constant 0 : index
    %6 = vector.load %arg7[%c0_5, %c0_6] : memref<8x128xf32, #tpu.memory_space<vmem>>, vector<8x128xf32>
    %c0_i32_7 = arith.constant 0 : i32
    %7 = arith.index_cast %c0_i32_7 : i32 to index
    %c0_8 = arith.constant 0 : index
    %c0_9 = arith.constant 0 : index
    %8 = vector.load %arg3[%7, %c0_8, %c0_9] : memref<8x8x384xbf16, #tpu.memory_space<vmem>>, vector<1x8x384xbf16>
    %9 = vector.shape_cast %8 : vector<1x8x384xbf16> to vector<8x384xbf16>
    %10 = arith.extf %9 : vector<8x384xbf16> to vector<8x384xf32>
    %11 = arith.truncf %6 : vector<8x128xf32> to vector<8x128xbf16>
    %cst = arith.constant dense<0.000000e+00> : vector<8x256xf32>
    %12 = tpu.matmul %11, %4, %cst {dimension_numbers = #tpu.dot_dimension_numbers<[1], [0], [0], [1], [0, 0, 1, 1], [], []>} : vector<8x128xbf16>, vector<128x256xbf16>, vector<8x256xf32> -> vector<8x256xf32>
    %13 = vector.extract_strided_slice %12 {offsets = [0, 0], sizes = [8, 128], strides = [1, 1]} : vector<8x256xf32> to vector<8x128xf32>
    %14 = vector.extract_strided_slice %10 {offsets = [0, 0], sizes = [8, 128], strides = [1, 1]} : vector<8x384xf32> to vector<8x128xf32>
    %15 = arith.addf %13, %14 : vector<8x128xf32>
    %16 = arith.negf %15 : vector<8x128xf32>
    %17 = math.exp %16 : vector<8x128xf32>
    %cst_10 = arith.constant 1.000000e+00 : f32
    %18 = vector.broadcast %cst_10 : f32 to vector<8x128xf32>
    %19 = arith.addf %18, %17 : vector<8x128xf32>
    %20 = arith.divf %18, %19 : vector<8x128xf32>
    %21 = vector.extract_strided_slice %12 {offsets = [0, 128], sizes = [8, 128], strides = [1, 1]} : vector<8x256xf32> to vector<8x128xf32>
    %22 = vector.extract_strided_slice %10 {offsets = [0, 128], sizes = [8, 128], strides = [1, 1]} : vector<8x384xf32> to vector<8x128xf32>
    %23 = arith.addf %21, %22 : vector<8x128xf32>
    %24 = arith.negf %23 : vector<8x128xf32>
    %25 = math.exp %24 : vector<8x128xf32>
    %cst_11 = arith.constant 1.000000e+00 : f32
    %26 = vector.broadcast %cst_11 : f32 to vector<8x128xf32>
    %27 = arith.addf %26, %25 : vector<8x128xf32>
    %28 = arith.divf %26, %27 : vector<8x128xf32>
    %29 = arith.mulf %6, %20 : vector<8x128xf32>
    %30 = arith.truncf %29 : vector<8x128xf32> to vector<8x128xbf16>
    %cst_12 = arith.constant dense<0.000000e+00> : vector<8x128xf32>
    %31 = tpu.matmul %30, %5, %cst_12 {dimension_numbers = #tpu.dot_dimension_numbers<[1], [0], [0], [1], [0, 0, 1, 1], [], []>} : vector<8x128xbf16>, vector<128x128xbf16>, vector<8x128xf32> -> vector<8x128xf32>
    %32 = vector.extract_strided_slice %10 {offsets = [0, 256], sizes = [8, 128], strides = [1, 1]} : vector<8x384xf32> to vector<8x128xf32>
    %33 = arith.addf %31, %32 : vector<8x128xf32>
    %34 = math.tanh %33 : vector<8x128xf32>
    %cst_13 = arith.constant 1.000000e+00 : f32
    %35 = vector.broadcast %cst_13 : f32 to vector<8x128xf32>
    %36 = arith.subf %35, %28 : vector<8x128xf32>
    %37 = arith.mulf %36, %6 : vector<8x128xf32>
    %38 = arith.mulf %28, %34 : vector<8x128xf32>
    %39 = arith.addf %37, %38 : vector<8x128xf32>
    %c8_i32 = arith.constant 8 : i32
    %40 = arith.muli %arg1, %c8_i32 : i32
    %41 = arith.addi %40, %c0_i32_7 : i32
    %42 = arith.cmpi slt, %41, %0 : i32
    %43 = arith.select %42, %39, %6 : vector<8x128xf32>
    %c1_i32 = arith.constant 1 : i32
    %44 = arith.index_cast %c1_i32 : i32 to index
    %c0_14 = arith.constant 0 : index
    %c0_15 = arith.constant 0 : index
    %45 = vector.load %arg3[%44, %c0_14, %c0_15] : memref<8x8x384xbf16, #tpu.memory_space<vmem>>, vector<1x8x384xbf16>
    %46 = vector.shape_cast %45 : vector<1x8x384xbf16> to vector<8x384xbf16>
    %47 = arith.extf %46 : vector<8x384xbf16> to vector<8x384xf32>
    %48 = arith.truncf %43 : vector<8x128xf32> to vector<8x128xbf16>
    %cst_16 = arith.constant dense<0.000000e+00> : vector<8x256xf32>
    %49 = tpu.matmul %48, %4, %cst_16 {dimension_numbers = #tpu.dot_dimension_numbers<[1], [0], [0], [1], [0, 0, 1, 1], [], []>} : vector<8x128xbf16>, vector<128x256xbf16>, vector<8x256xf32> -> vector<8x256xf32>
    %50 = vector.extract_strided_slice %49 {offsets = [0, 0], sizes = [8, 128], strides = [1, 1]} : vector<8x256xf32> to vector<8x128xf32>
    %51 = vector.extract_strided_slice %47 {offsets = [0, 0], sizes = [8, 128], strides = [1, 1]} : vector<8x384xf32> to vector<8x128xf32>
    %52 = arith.addf %50, %51 : vector<8x128xf32>
    %53 = arith.negf %52 : vector<8x128xf32>
    %54 = math.exp %53 : vector<8x128xf32>
    %cst_17 = arith.constant 1.000000e+00 : f32
    %55 = vector.broadcast %cst_17 : f32 to vector<8x128xf32>
    %56 = arith.addf %55, %54 : vector<8x128xf32>
    %57 = arith.divf %55, %56 : vector<8x128xf32>
    %58 = vector.extract_strided_slice %49 {offsets = [0, 128], sizes = [8, 128], strides = [1, 1]} : vector<8x256xf32> to vector<8x128xf32>
    %59 = vector.extract_strided_slice %47 {offsets = [0, 128], sizes = [8, 128], strides = [1, 1]} : vector<8x384xf32> to vector<8x128xf32>
    %60 = arith.addf %58, %59 : vector<8x128xf32>
    %61 = arith.negf %60 : vector<8x128xf32>
    %62 = math.exp %61 : vector<8x128xf32>
    %cst_18 = arith.constant 1.000000e+00 : f32
    %63 = vector.broadcast %cst_18 : f32 to vector<8x128xf32>
    %64 = arith.addf %63, %62 : vector<8x128xf32>
    %65 = arith.divf %63, %64 : vector<8x128xf32>
    %66 = arith.mulf %43, %57 : vector<8x128xf32>
    %67 = arith.truncf %66 : vector<8x128xf32> to vector<8x128xbf16>
    %cst_19 = arith.constant dense<0.000000e+00> : vector<8x128xf32>
    %68 = tpu.matmul %67, %5, %cst_19 {dimension_numbers = #tpu.dot_dimension_numbers<[1], [0], [0], [1], [0, 0, 1, 1], [], []>} : vector<8x128xbf16>, vector<128x128xbf16>, vector<8x128xf32> -> vector<8x128xf32>
    %69 = vector.extract_strided_slice %47 {offsets = [0, 256], sizes = [8, 128], strides = [1, 1]} : vector<8x384xf32> to vector<8x128xf32>
    %70 = arith.addf %68, %69 : vector<8x128xf32>
    %71 = math.tanh %70 : vector<8x128xf32>
    %cst_20 = arith.constant 1.000000e+00 : f32
    %72 = vector.broadcast %cst_20 : f32 to vector<8x128xf32>
    %73 = arith.subf %72, %65 : vector<8x128xf32>
    %74 = arith.mulf %73, %43 : vector<8x128xf32>
    %75 = arith.mulf %65, %71 : vector<8x128xf32>
    %76 = arith.addf %74, %75 : vector<8x128xf32>
    %c8_i32_21 = arith.constant 8 : i32
    %77 = arith.muli %arg1, %c8_i32_21 : i32
    %78 = arith.addi %77, %c1_i32 : i32
    %79 = arith.cmpi slt, %78, %0 : i32
    %80 = arith.select %79, %76, %43 : vector<8x128xf32>
    %c2_i32 = arith.constant 2 : i32
    %81 = arith.index_cast %c2_i32 : i32 to index
    %c0_22 = arith.constant 0 : index
    %c0_23 = arith.constant 0 : index
    %82 = vector.load %arg3[%81, %c0_22, %c0_23] : memref<8x8x384xbf16, #tpu.memory_space<vmem>>, vector<1x8x384xbf16>
    %83 = vector.shape_cast %82 : vector<1x8x384xbf16> to vector<8x384xbf16>
    %84 = arith.extf %83 : vector<8x384xbf16> to vector<8x384xf32>
    %85 = arith.truncf %80 : vector<8x128xf32> to vector<8x128xbf16>
    %cst_24 = arith.constant dense<0.000000e+00> : vector<8x256xf32>
    %86 = tpu.matmul %85, %4, %cst_24 {dimension_numbers = #tpu.dot_dimension_numbers<[1], [0], [0], [1], [0, 0, 1, 1], [], []>} : vector<8x128xbf16>, vector<128x256xbf16>, vector<8x256xf32> -> vector<8x256xf32>
    %87 = vector.extract_strided_slice %86 {offsets = [0, 0], sizes = [8, 128], strides = [1, 1]} : vector<8x256xf32> to vector<8x128xf32>
    %88 = vector.extract_strided_slice %84 {offsets = [0, 0], sizes = [8, 128], strides = [1, 1]} : vector<8x384xf32> to vector<8x128xf32>
    %89 = arith.addf %87, %88 : vector<8x128xf32>
    %90 = arith.negf %89 : vector<8x128xf32>
    %91 = math.exp %90 : vector<8x128xf32>
    %cst_25 = arith.constant 1.000000e+00 : f32
    %92 = vector.broadcast %cst_25 : f32 to vector<8x128xf32>
    %93 = arith.addf %92, %91 : vector<8x128xf32>
    %94 = arith.divf %92, %93 : vector<8x128xf32>
    %95 = vector.extract_strided_slice %86 {offsets = [0, 128], sizes = [8, 128], strides = [1, 1]} : vector<8x256xf32> to vector<8x128xf32>
    %96 = vector.extract_strided_slice %84 {offsets = [0, 128], sizes = [8, 128], strides = [1, 1]} : vector<8x384xf32> to vector<8x128xf32>
    %97 = arith.addf %95, %96 : vector<8x128xf32>
    %98 = arith.negf %97 : vector<8x128xf32>
    %99 = math.exp %98 : vector<8x128xf32>
    %cst_26 = arith.constant 1.000000e+00 : f32
    %100 = vector.broadcast %cst_26 : f32 to vector<8x128xf32>
    %101 = arith.addf %100, %99 : vector<8x128xf32>
    %102 = arith.divf %100, %101 : vector<8x128xf32>
    %103 = arith.mulf %80, %94 : vector<8x128xf32>
    %104 = arith.truncf %103 : vector<8x128xf32> to vector<8x128xbf16>
    %cst_27 = arith.constant dense<0.000000e+00> : vector<8x128xf32>
    %105 = tpu.matmul %104, %5, %cst_27 {dimension_numbers = #tpu.dot_dimension_numbers<[1], [0], [0], [1], [0, 0, 1, 1], [], []>} : vector<8x128xbf16>, vector<128x128xbf16>, vector<8x128xf32> -> vector<8x128xf32>
    %106 = vector.extract_strided_slice %84 {offsets = [0, 256], sizes = [8, 128], strides = [1, 1]} : vector<8x384xf32> to vector<8x128xf32>
    %107 = arith.addf %105, %106 : vector<8x128xf32>
    %108 = math.tanh %107 : vector<8x128xf32>
    %cst_28 = arith.constant 1.000000e+00 : f32
    %109 = vector.broadcast %cst_28 : f32 to vector<8x128xf32>
    %110 = arith.subf %109, %102 : vector<8x128xf32>
    %111 = arith.mulf %110, %80 : vector<8x128xf32>
    %112 = arith.mulf %102, %108 : vector<8x128xf32>
    %113 = arith.addf %111, %112 : vector<8x128xf32>
    %c8_i32_29 = arith.constant 8 : i32
    %114 = arith.muli %arg1, %c8_i32_29 : i32
    %115 = arith.addi %114, %c2_i32 : i32
    %116 = arith.cmpi slt, %115, %0 : i32
    %117 = arith.select %116, %113, %80 : vector<8x128xf32>
    %c3_i32 = arith.constant 3 : i32
    %118 = arith.index_cast %c3_i32 : i32 to index
    %c0_30 = arith.constant 0 : index
    %c0_31 = arith.constant 0 : index
    %119 = vector.load %arg3[%118, %c0_30, %c0_31] : memref<8x8x384xbf16, #tpu.memory_space<vmem>>, vector<1x8x384xbf16>
    %120 = vector.shape_cast %119 : vector<1x8x384xbf16> to vector<8x384xbf16>
    %121 = arith.extf %120 : vector<8x384xbf16> to vector<8x384xf32>
    %122 = arith.truncf %117 : vector<8x128xf32> to vector<8x128xbf16>
    %cst_32 = arith.constant dense<0.000000e+00> : vector<8x256xf32>
    %123 = tpu.matmul %122, %4, %cst_32 {dimension_numbers = #tpu.dot_dimension_numbers<[1], [0], [0], [1], [0, 0, 1, 1], [], []>} : vector<8x128xbf16>, vector<128x256xbf16>, vector<8x256xf32> -> vector<8x256xf32>
    %124 = vector.extract_strided_slice %123 {offsets = [0, 0], sizes = [8, 128], strides = [1, 1]} : vector<8x256xf32> to vector<8x128xf32>
    %125 = vector.extract_strided_slice %121 {offsets = [0, 0], sizes = [8, 128], strides = [1, 1]} : vector<8x384xf32> to vector<8x128xf32>
    %126 = arith.addf %124, %125 : vector<8x128xf32>
    %127 = arith.negf %126 : vector<8x128xf32>
    %128 = math.exp %127 : vector<8x128xf32>
    %cst_33 = arith.constant 1.000000e+00 : f32
    %129 = vector.broadcast %cst_33 : f32 to vector<8x128xf32>
    %130 = arith.addf %129, %128 : vector<8x128xf32>
    %131 = arith.divf %129, %130 : vector<8x128xf32>
    %132 = vector.extract_strided_slice %123 {offsets = [0, 128], sizes = [8, 128], strides = [1, 1]} : vector<8x256xf32> to vector<8x128xf32>
    %133 = vector.extract_strided_slice %121 {offsets = [0, 128], sizes = [8, 128], strides = [1, 1]} : vector<8x384xf32> to vector<8x128xf32>
    %134 = arith.addf %132, %133 : vector<8x128xf32>
    %135 = arith.negf %134 : vector<8x128xf32>
    %136 = math.exp %135 : vector<8x128xf32>
    %cst_34 = arith.constant 1.000000e+00 : f32
    %137 = vector.broadcast %cst_34 : f32 to vector<8x128xf32>
    %138 = arith.addf %137, %136 : vector<8x128xf32>
    %139 = arith.divf %137, %138 : vector<8x128xf32>
    %140 = arith.mulf %117, %131 : vector<8x128xf32>
    %141 = arith.truncf %140 : vector<8x128xf32> to vector<8x128xbf16>
    %cst_35 = arith.constant dense<0.000000e+00> : vector<8x128xf32>
    %142 = tpu.matmul %141, %5, %cst_35 {dimension_numbers = #tpu.dot_dimension_numbers<[1], [0], [0], [1], [0, 0, 1, 1], [], []>} : vector<8x128xbf16>, vector<128x128xbf16>, vector<8x128xf32> -> vector<8x128xf32>
    %143 = vector.extract_strided_slice %121 {offsets = [0, 256], sizes = [8, 128], strides = [1, 1]} : vector<8x384xf32> to vector<8x128xf32>
    %144 = arith.addf %142, %143 : vector<8x128xf32>
    %145 = math.tanh %144 : vector<8x128xf32>
    %cst_36 = arith.constant 1.000000e+00 : f32
    %146 = vector.broadcast %cst_36 : f32 to vector<8x128xf32>
    %147 = arith.subf %146, %139 : vector<8x128xf32>
    %148 = arith.mulf %147, %117 : vector<8x128xf32>
    %149 = arith.mulf %139, %145 : vector<8x128xf32>
    %150 = arith.addf %148, %149 : vector<8x128xf32>
    %c8_i32_37 = arith.constant 8 : i32
    %151 = arith.muli %arg1, %c8_i32_37 : i32
    %152 = arith.addi %151, %c3_i32 : i32
    %153 = arith.cmpi slt, %152, %0 : i32
    %154 = arith.select %153, %150, %117 : vector<8x128xf32>
    %c4_i32 = arith.constant 4 : i32
    %155 = arith.index_cast %c4_i32 : i32 to index
    %c0_38 = arith.constant 0 : index
    %c0_39 = arith.constant 0 : index
    %156 = vector.load %arg3[%155, %c0_38, %c0_39] : memref<8x8x384xbf16, #tpu.memory_space<vmem>>, vector<1x8x384xbf16>
    %157 = vector.shape_cast %156 : vector<1x8x384xbf16> to vector<8x384xbf16>
    %158 = arith.extf %157 : vector<8x384xbf16> to vector<8x384xf32>
    %159 = arith.truncf %154 : vector<8x128xf32> to vector<8x128xbf16>
    %cst_40 = arith.constant dense<0.000000e+00> : vector<8x256xf32>
    %160 = tpu.matmul %159, %4, %cst_40 {dimension_numbers = #tpu.dot_dimension_numbers<[1], [0], [0], [1], [0, 0, 1, 1], [], []>} : vector<8x128xbf16>, vector<128x256xbf16>, vector<8x256xf32> -> vector<8x256xf32>
    %161 = vector.extract_strided_slice %160 {offsets = [0, 0], sizes = [8, 128], strides = [1, 1]} : vector<8x256xf32> to vector<8x128xf32>
    %162 = vector.extract_strided_slice %158 {offsets = [0, 0], sizes = [8, 128], strides = [1, 1]} : vector<8x384xf32> to vector<8x128xf32>
    %163 = arith.addf %161, %162 : vector<8x128xf32>
    %164 = arith.negf %163 : vector<8x128xf32>
    %165 = math.exp %164 : vector<8x128xf32>
    %cst_41 = arith.constant 1.000000e+00 : f32
    %166 = vector.broadcast %cst_41 : f32 to vector<8x128xf32>
    %167 = arith.addf %166, %165 : vector<8x128xf32>
    %168 = arith.divf %166, %167 : vector<8x128xf32>
    %169 = vector.extract_strided_slice %160 {offsets = [0, 128], sizes = [8, 128], strides = [1, 1]} : vector<8x256xf32> to vector<8x128xf32>
    %170 = vector.extract_strided_slice %158 {offsets = [0, 128], sizes = [8, 128], strides = [1, 1]} : vector<8x384xf32> to vector<8x128xf32>
    %171 = arith.addf %169, %170 : vector<8x128xf32>
    %172 = arith.negf %171 : vector<8x128xf32>
    %173 = math.exp %172 : vector<8x128xf32>
    %cst_42 = arith.constant 1.000000e+00 : f32
    %174 = vector.broadcast %cst_42 : f32 to vector<8x128xf32>
    %175 = arith.addf %174, %173 : vector<8x128xf32>
    %176 = arith.divf %174, %175 : vector<8x128xf32>
    %177 = arith.mulf %154, %168 : vector<8x128xf32>
    %178 = arith.truncf %177 : vector<8x128xf32> to vector<8x128xbf16>
    %cst_43 = arith.constant dense<0.000000e+00> : vector<8x128xf32>
    %179 = tpu.matmul %178, %5, %cst_43 {dimension_numbers = #tpu.dot_dimension_numbers<[1], [0], [0], [1], [0, 0, 1, 1], [], []>} : vector<8x128xbf16>, vector<128x128xbf16>, vector<8x128xf32> -> vector<8x128xf32>
    %180 = vector.extract_strided_slice %158 {offsets = [0, 256], sizes = [8, 128], strides = [1, 1]} : vector<8x384xf32> to vector<8x128xf32>
    %181 = arith.addf %179, %180 : vector<8x128xf32>
    %182 = math.tanh %181 : vector<8x128xf32>
    %cst_44 = arith.constant 1.000000e+00 : f32
    %183 = vector.broadcast %cst_44 : f32 to vector<8x128xf32>
    %184 = arith.subf %183, %176 : vector<8x128xf32>
    %185 = arith.mulf %184, %154 : vector<8x128xf32>
    %186 = arith.mulf %176, %182 : vector<8x128xf32>
    %187 = arith.addf %185, %186 : vector<8x128xf32>
    %c8_i32_45 = arith.constant 8 : i32
    %188 = arith.muli %arg1, %c8_i32_45 : i32
    %189 = arith.addi %188, %c4_i32 : i32
    %190 = arith.cmpi slt, %189, %0 : i32
    %191 = arith.select %190, %187, %154 : vector<8x128xf32>
    %c5_i32 = arith.constant 5 : i32
    %192 = arith.index_cast %c5_i32 : i32 to index
    %c0_46 = arith.constant 0 : index
    %c0_47 = arith.constant 0 : index
    %193 = vector.load %arg3[%192, %c0_46, %c0_47] : memref<8x8x384xbf16, #tpu.memory_space<vmem>>, vector<1x8x384xbf16>
    %194 = vector.shape_cast %193 : vector<1x8x384xbf16> to vector<8x384xbf16>
    %195 = arith.extf %194 : vector<8x384xbf16> to vector<8x384xf32>
    %196 = arith.truncf %191 : vector<8x128xf32> to vector<8x128xbf16>
    %cst_48 = arith.constant dense<0.000000e+00> : vector<8x256xf32>
    %197 = tpu.matmul %196, %4, %cst_48 {dimension_numbers = #tpu.dot_dimension_numbers<[1], [0], [0], [1], [0, 0, 1, 1], [], []>} : vector<8x128xbf16>, vector<128x256xbf16>, vector<8x256xf32> -> vector<8x256xf32>
    %198 = vector.extract_strided_slice %197 {offsets = [0, 0], sizes = [8, 128], strides = [1, 1]} : vector<8x256xf32> to vector<8x128xf32>
    %199 = vector.extract_strided_slice %195 {offsets = [0, 0], sizes = [8, 128], strides = [1, 1]} : vector<8x384xf32> to vector<8x128xf32>
    %200 = arith.addf %198, %199 : vector<8x128xf32>
    %201 = arith.negf %200 : vector<8x128xf32>
    %202 = math.exp %201 : vector<8x128xf32>
    %cst_49 = arith.constant 1.000000e+00 : f32
    %203 = vector.broadcast %cst_49 : f32 to vector<8x128xf32>
    %204 = arith.addf %203, %202 : vector<8x128xf32>
    %205 = arith.divf %203, %204 : vector<8x128xf32>
    %206 = vector.extract_strided_slice %197 {offsets = [0, 128], sizes = [8, 128], strides = [1, 1]} : vector<8x256xf32> to vector<8x128xf32>
    %207 = vector.extract_strided_slice %195 {offsets = [0, 128], sizes = [8, 128], strides = [1, 1]} : vector<8x384xf32> to vector<8x128xf32>
    %208 = arith.addf %206, %207 : vector<8x128xf32>
    %209 = arith.negf %208 : vector<8x128xf32>
    %210 = math.exp %209 : vector<8x128xf32>
    %cst_50 = arith.constant 1.000000e+00 : f32
    %211 = vector.broadcast %cst_50 : f32 to vector<8x128xf32>
    %212 = arith.addf %211, %210 : vector<8x128xf32>
    %213 = arith.divf %211, %212 : vector<8x128xf32>
    %214 = arith.mulf %191, %205 : vector<8x128xf32>
    %215 = arith.truncf %214 : vector<8x128xf32> to vector<8x128xbf16>
    %cst_51 = arith.constant dense<0.000000e+00> : vector<8x128xf32>
    %216 = tpu.matmul %215, %5, %cst_51 {dimension_numbers = #tpu.dot_dimension_numbers<[1], [0], [0], [1], [0, 0, 1, 1], [], []>} : vector<8x128xbf16>, vector<128x128xbf16>, vector<8x128xf32> -> vector<8x128xf32>
    %217 = vector.extract_strided_slice %195 {offsets = [0, 256], sizes = [8, 128], strides = [1, 1]} : vector<8x384xf32> to vector<8x128xf32>
    %218 = arith.addf %216, %217 : vector<8x128xf32>
    %219 = math.tanh %218 : vector<8x128xf32>
    %cst_52 = arith.constant 1.000000e+00 : f32
    %220 = vector.broadcast %cst_52 : f32 to vector<8x128xf32>
    %221 = arith.subf %220, %213 : vector<8x128xf32>
    %222 = arith.mulf %221, %191 : vector<8x128xf32>
    %223 = arith.mulf %213, %219 : vector<8x128xf32>
    %224 = arith.addf %222, %223 : vector<8x128xf32>
    %c8_i32_53 = arith.constant 8 : i32
    %225 = arith.muli %arg1, %c8_i32_53 : i32
    %226 = arith.addi %225, %c5_i32 : i32
    %227 = arith.cmpi slt, %226, %0 : i32
    %228 = arith.select %227, %224, %191 : vector<8x128xf32>
    %c6_i32 = arith.constant 6 : i32
    %229 = arith.index_cast %c6_i32 : i32 to index
    %c0_54 = arith.constant 0 : index
    %c0_55 = arith.constant 0 : index
    %230 = vector.load %arg3[%229, %c0_54, %c0_55] : memref<8x8x384xbf16, #tpu.memory_space<vmem>>, vector<1x8x384xbf16>
    %231 = vector.shape_cast %230 : vector<1x8x384xbf16> to vector<8x384xbf16>
    %232 = arith.extf %231 : vector<8x384xbf16> to vector<8x384xf32>
    %233 = arith.truncf %228 : vector<8x128xf32> to vector<8x128xbf16>
    %cst_56 = arith.constant dense<0.000000e+00> : vector<8x256xf32>
    %234 = tpu.matmul %233, %4, %cst_56 {dimension_numbers = #tpu.dot_dimension_numbers<[1], [0], [0], [1], [0, 0, 1, 1], [], []>} : vector<8x128xbf16>, vector<128x256xbf16>, vector<8x256xf32> -> vector<8x256xf32>
    %235 = vector.extract_strided_slice %234 {offsets = [0, 0], sizes = [8, 128], strides = [1, 1]} : vector<8x256xf32> to vector<8x128xf32>
    %236 = vector.extract_strided_slice %232 {offsets = [0, 0], sizes = [8, 128], strides = [1, 1]} : vector<8x384xf32> to vector<8x128xf32>
    %237 = arith.addf %235, %236 : vector<8x128xf32>
    %238 = arith.negf %237 : vector<8x128xf32>
    %239 = math.exp %238 : vector<8x128xf32>
    %cst_57 = arith.constant 1.000000e+00 : f32
    %240 = vector.broadcast %cst_57 : f32 to vector<8x128xf32>
    %241 = arith.addf %240, %239 : vector<8x128xf32>
    %242 = arith.divf %240, %241 : vector<8x128xf32>
    %243 = vector.extract_strided_slice %234 {offsets = [0, 128], sizes = [8, 128], strides = [1, 1]} : vector<8x256xf32> to vector<8x128xf32>
    %244 = vector.extract_strided_slice %232 {offsets = [0, 128], sizes = [8, 128], strides = [1, 1]} : vector<8x384xf32> to vector<8x128xf32>
    %245 = arith.addf %243, %244 : vector<8x128xf32>
    %246 = arith.negf %245 : vector<8x128xf32>
    %247 = math.exp %246 : vector<8x128xf32>
    %cst_58 = arith.constant 1.000000e+00 : f32
    %248 = vector.broadcast %cst_58 : f32 to vector<8x128xf32>
    %249 = arith.addf %248, %247 : vector<8x128xf32>
    %250 = arith.divf %248, %249 : vector<8x128xf32>
    %251 = arith.mulf %228, %242 : vector<8x128xf32>
    %252 = arith.truncf %251 : vector<8x128xf32> to vector<8x128xbf16>
    %cst_59 = arith.constant dense<0.000000e+00> : vector<8x128xf32>
    %253 = tpu.matmul %252, %5, %cst_59 {dimension_numbers = #tpu.dot_dimension_numbers<[1], [0], [0], [1], [0, 0, 1, 1], [], []>} : vector<8x128xbf16>, vector<128x128xbf16>, vector<8x128xf32> -> vector<8x128xf32>
    %254 = vector.extract_strided_slice %232 {offsets = [0, 256], sizes = [8, 128], strides = [1, 1]} : vector<8x384xf32> to vector<8x128xf32>
    %255 = arith.addf %253, %254 : vector<8x128xf32>
    %256 = math.tanh %255 : vector<8x128xf32>
    %cst_60 = arith.constant 1.000000e+00 : f32
    %257 = vector.broadcast %cst_60 : f32 to vector<8x128xf32>
    %258 = arith.subf %257, %250 : vector<8x128xf32>
    %259 = arith.mulf %258, %228 : vector<8x128xf32>
    %260 = arith.mulf %250, %256 : vector<8x128xf32>
    %261 = arith.addf %259, %260 : vector<8x128xf32>
    %c8_i32_61 = arith.constant 8 : i32
    %262 = arith.muli %arg1, %c8_i32_61 : i32
    %263 = arith.addi %262, %c6_i32 : i32
    %264 = arith.cmpi slt, %263, %0 : i32
    %265 = arith.select %264, %261, %228 : vector<8x128xf32>
    %c7_i32 = arith.constant 7 : i32
    %266 = arith.index_cast %c7_i32 : i32 to index
    %c0_62 = arith.constant 0 : index
    %c0_63 = arith.constant 0 : index
    %267 = vector.load %arg3[%266, %c0_62, %c0_63] : memref<8x8x384xbf16, #tpu.memory_space<vmem>>, vector<1x8x384xbf16>
    %268 = vector.shape_cast %267 : vector<1x8x384xbf16> to vector<8x384xbf16>
    %269 = arith.extf %268 : vector<8x384xbf16> to vector<8x384xf32>
    %270 = arith.truncf %265 : vector<8x128xf32> to vector<8x128xbf16>
    %cst_64 = arith.constant dense<0.000000e+00> : vector<8x256xf32>
    %271 = tpu.matmul %270, %4, %cst_64 {dimension_numbers = #tpu.dot_dimension_numbers<[1], [0], [0], [1], [0, 0, 1, 1], [], []>} : vector<8x128xbf16>, vector<128x256xbf16>, vector<8x256xf32> -> vector<8x256xf32>
    %272 = vector.extract_strided_slice %271 {offsets = [0, 0], sizes = [8, 128], strides = [1, 1]} : vector<8x256xf32> to vector<8x128xf32>
    %273 = vector.extract_strided_slice %269 {offsets = [0, 0], sizes = [8, 128], strides = [1, 1]} : vector<8x384xf32> to vector<8x128xf32>
    %274 = arith.addf %272, %273 : vector<8x128xf32>
    %275 = arith.negf %274 : vector<8x128xf32>
    %276 = math.exp %275 : vector<8x128xf32>
    %cst_65 = arith.constant 1.000000e+00 : f32
    %277 = vector.broadcast %cst_65 : f32 to vector<8x128xf32>
    %278 = arith.addf %277, %276 : vector<8x128xf32>
    %279 = arith.divf %277, %278 : vector<8x128xf32>
    %280 = vector.extract_strided_slice %271 {offsets = [0, 128], sizes = [8, 128], strides = [1, 1]} : vector<8x256xf32> to vector<8x128xf32>
    %281 = vector.extract_strided_slice %269 {offsets = [0, 128], sizes = [8, 128], strides = [1, 1]} : vector<8x384xf32> to vector<8x128xf32>
    %282 = arith.addf %280, %281 : vector<8x128xf32>
    %283 = arith.negf %282 : vector<8x128xf32>
    %284 = math.exp %283 : vector<8x128xf32>
    %cst_66 = arith.constant 1.000000e+00 : f32
    %285 = vector.broadcast %cst_66 : f32 to vector<8x128xf32>
    %286 = arith.addf %285, %284 : vector<8x128xf32>
    %287 = arith.divf %285, %286 : vector<8x128xf32>
    %288 = arith.mulf %265, %279 : vector<8x128xf32>
    %289 = arith.truncf %288 : vector<8x128xf32> to vector<8x128xbf16>
    %cst_67 = arith.constant dense<0.000000e+00> : vector<8x128xf32>
    %290 = tpu.matmul %289, %5, %cst_67 {dimension_numbers = #tpu.dot_dimension_numbers<[1], [0], [0], [1], [0, 0, 1, 1], [], []>} : vector<8x128xbf16>, vector<128x128xbf16>, vector<8x128xf32> -> vector<8x128xf32>
    %291 = vector.extract_strided_slice %269 {offsets = [0, 256], sizes = [8, 128], strides = [1, 1]} : vector<8x384xf32> to vector<8x128xf32>
    %292 = arith.addf %290, %291 : vector<8x128xf32>
    %293 = math.tanh %292 : vector<8x128xf32>
    %cst_68 = arith.constant 1.000000e+00 : f32
    %294 = vector.broadcast %cst_68 : f32 to vector<8x128xf32>
    %295 = arith.subf %294, %287 : vector<8x128xf32>
    %296 = arith.mulf %295, %265 : vector<8x128xf32>
    %297 = arith.mulf %287, %293 : vector<8x128xf32>
    %298 = arith.addf %296, %297 : vector<8x128xf32>
    %c8_i32_69 = arith.constant 8 : i32
    %299 = arith.muli %arg1, %c8_i32_69 : i32
    %300 = arith.addi %299, %c7_i32 : i32
    %301 = arith.cmpi slt, %300, %0 : i32
    %302 = arith.select %301, %298, %265 : vector<8x128xf32>
    %c8_i32_70 = arith.constant 8 : i32
    %c0_71 = arith.constant 0 : index
    %c0_72 = arith.constant 0 : index
    %303 = vector.load %arg7[%c0_71, %c0_72] : memref<8x128xf32, #tpu.memory_space<vmem>>, vector<8x128xf32>
    tpu.vector_store %arg7[%c0_71, %c0_72], %302 {strides = array<i32>} : memref<8x128xf32, #tpu.memory_space<vmem>>, vector<8x128xf32>,
    %c0_i32_73 = arith.constant 0 : i32
    %304 = arith.cmpi eq, %arg1, %c0_i32_73 : i32
    %305 = arith.extui %304 : i1 to i32
    %c0_i32_74 = arith.constant 0 : i32
    %306 = arith.cmpi ne, %305, %c0_i32_74 : i32
    scf.if %306 {
      %c0_75 = arith.constant 0 : index
      %c0_76 = arith.constant 0 : index
      %307 = vector.load %arg6[%c0_75, %c0_76] : memref<8x128xf32, #tpu.memory_space<vmem>>, vector<8x128xf32>
      tpu.vector_store %arg6[%c0_75, %c0_76], %302 {strides = array<i32>} : memref<8x128xf32, #tpu.memory_space<vmem>>, vector<8x128xf32>,
    } else {
    }
    return
  }
  func.func @transform_0(%arg0: i32, %arg1: i32, %arg2: memref<1xi32, #tpu.memory_space<smem>>) -> (i32, i32, i32) {
    %c0_i32 = arith.constant 0 : i32
    %c0_i32_0 = arith.constant 0 : i32
    return %arg1, %arg0, %c0_i32 : i32, i32, i32
  }
  func.func @transform_1(%arg0: i32, %arg1: i32, %arg2: memref<1xi32, #tpu.memory_space<smem>>) -> (i32, i32) {
    %c0_i32 = arith.constant 0 : i32
    %c0_i32_0 = arith.constant 0 : i32
    %c0_i32_1 = arith.constant 0 : i32
    return %c0_i32, %c0_i32_0 : i32, i32
  }
  func.func @transform_2(%arg0: i32, %arg1: i32, %arg2: memref<1xi32, #tpu.memory_space<smem>>) -> (i32, i32) {
    %c0_i32 = arith.constant 0 : i32
    %c0_i32_0 = arith.constant 0 : i32
    %c0_i32_1 = arith.constant 0 : i32
    return %c0_i32, %c0_i32_0 : i32, i32
  }
  func.func @transform_3(%arg0: i32, %arg1: i32, %arg2: memref<1xi32, #tpu.memory_space<smem>>) -> (i32, i32) {
    %c0_i32 = arith.constant 0 : i32
    %c0_i32_0 = arith.constant 0 : i32
    return %arg0, %c0_i32 : i32, i32
  }
}

module attributes {stable_mosaic.version = 11 : i64} {
  func.func @gru_recurrent_kernel(%arg0: i32, %arg1: i32, %arg2: memref<1xi32, #tpu.memory_space<smem>>, %arg3: memref<8x8x384xbf16, #tpu.memory_space<vmem>>, %arg4: memref<128x256xbf16, #tpu.memory_space<vmem>>, %arg5: memref<128x128xbf16, #tpu.memory_space<vmem>>, %arg6: memref<8x128xf32, #tpu.memory_space<vmem>>, %arg7: memref<8x128xf32, #tpu.memory_space<vmem>>) attributes {dimension_semantics = [#tpu.dimension_semantics<parallel>, #tpu.dimension_semantics<arbitrary>], iteration_bounds = array<i64: 1, 1>, scalar_prefetch = 1 : i64, scratch_operands = 1 : i64, tpu.core_type = #tpu.core_type<tc>, window_params = [{transform_indices = @transform_0, window_bounds = array<i64: 8, 8, 384>}, {pipeline_mode = #tpu.pipeline_mode<synchronous>, transform_indices = @transform_1, window_bounds = array<i64: 128, 256>}, {pipeline_mode = #tpu.pipeline_mode<synchronous>, transform_indices = @transform_2, window_bounds = array<i64: 128, 128>}, {transform_indices = @transform_3, window_bounds = array<i64: 8, 128>}]} {
    %c0 = arith.constant 0 : index
    %0 = memref.load %arg2[%c0] : memref<1xi32, #tpu.memory_space<smem>>
    %c0_i32 = arith.constant 0 : i32
    %1 = arith.cmpi eq, %arg1, %c0_i32 : i32
    %2 = arith.extui %1 : i1 to i32
    %c0_i32_0 = arith.constant 0 : i32
    %3 = arith.cmpi ne, %2, %c0_i32_0 : i32
    scf.if %3 {
      %cst_75 = arith.constant 0.000000e+00 : f32
      %307 = vector.broadcast %cst_75 : f32 to vector<8x128xf32>
      %c0_76 = arith.constant 0 : index
      %c0_77 = arith.constant 0 : index
      %308 = vector.load %arg7[%c0_76, %c0_77] : memref<8x128xf32, #tpu.memory_space<vmem>>, vector<8x128xf32>
      tpu.vector_store %arg7[%c0_76, %c0_77], %307 {strides = array<i32>} : memref<8x128xf32, #tpu.memory_space<vmem>>, vector<8x128xf32>,
    } else {
    }
    %c0_1 = arith.constant 0 : index
    %c0_2 = arith.constant 0 : index
    %4 = vector.load %arg4[%c0_1, %c0_2] : memref<128x256xbf16, #tpu.memory_space<vmem>>, vector<128x256xbf16>
    %c0_3 = arith.constant 0 : index
    %c0_4 = arith.constant 0 : index
    %5 = vector.load %arg5[%c0_3, %c0_4] : memref<128x128xbf16, #tpu.memory_space<vmem>>, vector<128x128xbf16>
    %c0_5 = arith.constant 0 : index
    %c0_6 = arith.constant 0 : index
    %6 = vector.load %arg7[%c0_5, %c0_6] : memref<8x128xf32, #tpu.memory_space<vmem>>, vector<8x128xf32>
    %c0_i32_7 = arith.constant 0 : i32
    %7 = arith.index_cast %c0_i32_7 : i32 to index
    %c0_8 = arith.constant 0 : index
    %c0_9 = arith.constant 0 : index
    %8 = vector.load %arg3[%7, %c0_8, %c0_9] : memref<8x8x384xbf16, #tpu.memory_space<vmem>>, vector<1x8x384xbf16>
    %9 = vector.shape_cast %8 : vector<1x8x384xbf16> to vector<8x384xbf16>
    %10 = arith.extf %9 : vector<8x384xbf16> to vector<8x384xf32>
    %11 = arith.truncf %6 : vector<8x128xf32> to vector<8x128xbf16>
    %cst = arith.constant dense<0.000000e+00> : vector<8x256xf32>
    %12 = tpu.matmul %11, %4, %cst {dimension_numbers = #tpu.dot_dimension_numbers<[1], [0], [0], [1], [0, 0, 1, 1], [], []>} : vector<8x128xbf16>, vector<128x256xbf16>, vector<8x256xf32> -> vector<8x256xf32>
    %13 = vector.extract_strided_slice %12 {offsets = [0, 0], sizes = [8, 128], strides = [1, 1]} : vector<8x256xf32> to vector<8x128xf32>
    %14 = vector.extract_strided_slice %10 {offsets = [0, 0], sizes = [8, 128], strides = [1, 1]} : vector<8x384xf32> to vector<8x128xf32>
    %15 = arith.addf %13, %14 : vector<8x128xf32>
    %16 = arith.negf %15 : vector<8x128xf32>
    %17 = math.exp %16 : vector<8x128xf32>
    %cst_10 = arith.constant 1.000000e+00 : f32
    %18 = vector.broadcast %cst_10 : f32 to vector<8x128xf32>
    %19 = arith.addf %18, %17 : vector<8x128xf32>
    %20 = arith.divf %18, %19 : vector<8x128xf32>
    %21 = vector.extract_strided_slice %12 {offsets = [0, 128], sizes = [8, 128], strides = [1, 1]} : vector<8x256xf32> to vector<8x128xf32>
    %22 = vector.extract_strided_slice %10 {offsets = [0, 128], sizes = [8, 128], strides = [1, 1]} : vector<8x384xf32> to vector<8x128xf32>
    %23 = arith.addf %21, %22 : vector<8x128xf32>
    %24 = arith.negf %23 : vector<8x128xf32>
    %25 = math.exp %24 : vector<8x128xf32>
    %cst_11 = arith.constant 1.000000e+00 : f32
    %26 = vector.broadcast %cst_11 : f32 to vector<8x128xf32>
    %27 = arith.addf %26, %25 : vector<8x128xf32>
    %28 = arith.divf %26, %27 : vector<8x128xf32>
    %29 = arith.mulf %6, %20 : vector<8x128xf32>
    %30 = arith.truncf %29 : vector<8x128xf32> to vector<8x128xbf16>
    %cst_12 = arith.constant dense<0.000000e+00> : vector<8x128xf32>
    %31 = tpu.matmul %30, %5, %cst_12 {dimension_numbers = #tpu.dot_dimension_numbers<[1], [0], [0], [1], [0, 0, 1, 1], [], []>} : vector<8x128xbf16>, vector<128x128xbf16>, vector<8x128xf32> -> vector<8x128xf32>
    %32 = vector.extract_strided_slice %10 {offsets = [0, 256], sizes = [8, 128], strides = [1, 1]} : vector<8x384xf32> to vector<8x128xf32>
    %33 = arith.addf %31, %32 : vector<8x128xf32>
    %34 = math.tanh %33 : vector<8x128xf32>
    %cst_13 = arith.constant 1.000000e+00 : f32
    %35 = vector.broadcast %cst_13 : f32 to vector<8x128xf32>
    %36 = arith.subf %35, %28 : vector<8x128xf32>
    %37 = arith.mulf %36, %6 : vector<8x128xf32>
    %38 = arith.mulf %28, %34 : vector<8x128xf32>
    %39 = arith.addf %37, %38 : vector<8x128xf32>
    %c8_i32 = arith.constant 8 : i32
    %40 = arith.muli %arg1, %c8_i32 : i32
    %41 = arith.addi %40, %c0_i32_7 : i32
    %42 = arith.cmpi slt, %41, %0 : i32
    %43 = arith.select %42, %39, %6 : vector<8x128xf32>
    %c1_i32 = arith.constant 1 : i32
    %44 = arith.index_cast %c1_i32 : i32 to index
    %c0_14 = arith.constant 0 : index
    %c0_15 = arith.constant 0 : index
    %45 = vector.load %arg3[%44, %c0_14, %c0_15] : memref<8x8x384xbf16, #tpu.memory_space<vmem>>, vector<1x8x384xbf16>
    %46 = vector.shape_cast %45 : vector<1x8x384xbf16> to vector<8x384xbf16>
    %47 = arith.extf %46 : vector<8x384xbf16> to vector<8x384xf32>
    %48 = arith.truncf %43 : vector<8x128xf32> to vector<8x128xbf16>
    %cst_16 = arith.constant dense<0.000000e+00> : vector<8x256xf32>
    %49 = tpu.matmul %48, %4, %cst_16 {dimension_numbers = #tpu.dot_dimension_numbers<[1], [0], [0], [1], [0, 0, 1, 1], [], []>} : vector<8x128xbf16>, vector<128x256xbf16>, vector<8x256xf32> -> vector<8x256xf32>
    %50 = vector.extract_strided_slice %49 {offsets = [0, 0], sizes = [8, 128], strides = [1, 1]} : vector<8x256xf32> to vector<8x128xf32>
    %51 = vector.extract_strided_slice %47 {offsets = [0, 0], sizes = [8, 128], strides = [1, 1]} : vector<8x384xf32> to vector<8x128xf32>
    %52 = arith.addf %50, %51 : vector<8x128xf32>
    %53 = arith.negf %52 : vector<8x128xf32>
    %54 = math.exp %53 : vector<8x128xf32>
    %cst_17 = arith.constant 1.000000e+00 : f32
    %55 = vector.broadcast %cst_17 : f32 to vector<8x128xf32>
    %56 = arith.addf %55, %54 : vector<8x128xf32>
    %57 = arith.divf %55, %56 : vector<8x128xf32>
    %58 = vector.extract_strided_slice %49 {offsets = [0, 128], sizes = [8, 128], strides = [1, 1]} : vector<8x256xf32> to vector<8x128xf32>
    %59 = vector.extract_strided_slice %47 {offsets = [0, 128], sizes = [8, 128], strides = [1, 1]} : vector<8x384xf32> to vector<8x128xf32>
    %60 = arith.addf %58, %59 : vector<8x128xf32>
    %61 = arith.negf %60 : vector<8x128xf32>
    %62 = math.exp %61 : vector<8x128xf32>
    %cst_18 = arith.constant 1.000000e+00 : f32
    %63 = vector.broadcast %cst_18 : f32 to vector<8x128xf32>
    %64 = arith.addf %63, %62 : vector<8x128xf32>
    %65 = arith.divf %63, %64 : vector<8x128xf32>
    %66 = arith.mulf %43, %57 : vector<8x128xf32>
    %67 = arith.truncf %66 : vector<8x128xf32> to vector<8x128xbf16>
    %cst_19 = arith.constant dense<0.000000e+00> : vector<8x128xf32>
    %68 = tpu.matmul %67, %5, %cst_19 {dimension_numbers = #tpu.dot_dimension_numbers<[1], [0], [0], [1], [0, 0, 1, 1], [], []>} : vector<8x128xbf16>, vector<128x128xbf16>, vector<8x128xf32> -> vector<8x128xf32>
    %69 = vector.extract_strided_slice %47 {offsets = [0, 256], sizes = [8, 128], strides = [1, 1]} : vector<8x384xf32> to vector<8x128xf32>
    %70 = arith.addf %68, %69 : vector<8x128xf32>
    %71 = math.tanh %70 : vector<8x128xf32>
    %cst_20 = arith.constant 1.000000e+00 : f32
    %72 = vector.broadcast %cst_20 : f32 to vector<8x128xf32>
    %73 = arith.subf %72, %65 : vector<8x128xf32>
    %74 = arith.mulf %73, %43 : vector<8x128xf32>
    %75 = arith.mulf %65, %71 : vector<8x128xf32>
    %76 = arith.addf %74, %75 : vector<8x128xf32>
    %c8_i32_21 = arith.constant 8 : i32
    %77 = arith.muli %arg1, %c8_i32_21 : i32
    %78 = arith.addi %77, %c1_i32 : i32
    %79 = arith.cmpi slt, %78, %0 : i32
    %80 = arith.select %79, %76, %43 : vector<8x128xf32>
    %c2_i32 = arith.constant 2 : i32
    %81 = arith.index_cast %c2_i32 : i32 to index
    %c0_22 = arith.constant 0 : index
    %c0_23 = arith.constant 0 : index
    %82 = vector.load %arg3[%81, %c0_22, %c0_23] : memref<8x8x384xbf16, #tpu.memory_space<vmem>>, vector<1x8x384xbf16>
    %83 = vector.shape_cast %82 : vector<1x8x384xbf16> to vector<8x384xbf16>
    %84 = arith.extf %83 : vector<8x384xbf16> to vector<8x384xf32>
    %85 = arith.truncf %80 : vector<8x128xf32> to vector<8x128xbf16>
    %cst_24 = arith.constant dense<0.000000e+00> : vector<8x256xf32>
    %86 = tpu.matmul %85, %4, %cst_24 {dimension_numbers = #tpu.dot_dimension_numbers<[1], [0], [0], [1], [0, 0, 1, 1], [], []>} : vector<8x128xbf16>, vector<128x256xbf16>, vector<8x256xf32> -> vector<8x256xf32>
    %87 = vector.extract_strided_slice %86 {offsets = [0, 0], sizes = [8, 128], strides = [1, 1]} : vector<8x256xf32> to vector<8x128xf32>
    %88 = vector.extract_strided_slice %84 {offsets = [0, 0], sizes = [8, 128], strides = [1, 1]} : vector<8x384xf32> to vector<8x128xf32>
    %89 = arith.addf %87, %88 : vector<8x128xf32>
    %90 = arith.negf %89 : vector<8x128xf32>
    %91 = math.exp %90 : vector<8x128xf32>
    %cst_25 = arith.constant 1.000000e+00 : f32
    %92 = vector.broadcast %cst_25 : f32 to vector<8x128xf32>
    %93 = arith.addf %92, %91 : vector<8x128xf32>
    %94 = arith.divf %92, %93 : vector<8x128xf32>
    %95 = vector.extract_strided_slice %86 {offsets = [0, 128], sizes = [8, 128], strides = [1, 1]} : vector<8x256xf32> to vector<8x128xf32>
    %96 = vector.extract_strided_slice %84 {offsets = [0, 128], sizes = [8, 128], strides = [1, 1]} : vector<8x384xf32> to vector<8x128xf32>
    %97 = arith.addf %95, %96 : vector<8x128xf32>
    %98 = arith.negf %97 : vector<8x128xf32>
    %99 = math.exp %98 : vector<8x128xf32>
    %cst_26 = arith.constant 1.000000e+00 : f32
    %100 = vector.broadcast %cst_26 : f32 to vector<8x128xf32>
    %101 = arith.addf %100, %99 : vector<8x128xf32>
    %102 = arith.divf %100, %101 : vector<8x128xf32>
    %103 = arith.mulf %80, %94 : vector<8x128xf32>
    %104 = arith.truncf %103 : vector<8x128xf32> to vector<8x128xbf16>
    %cst_27 = arith.constant dense<0.000000e+00> : vector<8x128xf32>
    %105 = tpu.matmul %104, %5, %cst_27 {dimension_numbers = #tpu.dot_dimension_numbers<[1], [0], [0], [1], [0, 0, 1, 1], [], []>} : vector<8x128xbf16>, vector<128x128xbf16>, vector<8x128xf32> -> vector<8x128xf32>
    %106 = vector.extract_strided_slice %84 {offsets = [0, 256], sizes = [8, 128], strides = [1, 1]} : vector<8x384xf32> to vector<8x128xf32>
    %107 = arith.addf %105, %106 : vector<8x128xf32>
    %108 = math.tanh %107 : vector<8x128xf32>
    %cst_28 = arith.constant 1.000000e+00 : f32
    %109 = vector.broadcast %cst_28 : f32 to vector<8x128xf32>
    %110 = arith.subf %109, %102 : vector<8x128xf32>
    %111 = arith.mulf %110, %80 : vector<8x128xf32>
    %112 = arith.mulf %102, %108 : vector<8x128xf32>
    %113 = arith.addf %111, %112 : vector<8x128xf32>
    %c8_i32_29 = arith.constant 8 : i32
    %114 = arith.muli %arg1, %c8_i32_29 : i32
    %115 = arith.addi %114, %c2_i32 : i32
    %116 = arith.cmpi slt, %115, %0 : i32
    %117 = arith.select %116, %113, %80 : vector<8x128xf32>
    %c3_i32 = arith.constant 3 : i32
    %118 = arith.index_cast %c3_i32 : i32 to index
    %c0_30 = arith.constant 0 : index
    %c0_31 = arith.constant 0 : index
    %119 = vector.load %arg3[%118, %c0_30, %c0_31] : memref<8x8x384xbf16, #tpu.memory_space<vmem>>, vector<1x8x384xbf16>
    %120 = vector.shape_cast %119 : vector<1x8x384xbf16> to vector<8x384xbf16>
    %121 = arith.extf %120 : vector<8x384xbf16> to vector<8x384xf32>
    %122 = arith.truncf %117 : vector<8x128xf32> to vector<8x128xbf16>
    %cst_32 = arith.constant dense<0.000000e+00> : vector<8x256xf32>
    %123 = tpu.matmul %122, %4, %cst_32 {dimension_numbers = #tpu.dot_dimension_numbers<[1], [0], [0], [1], [0, 0, 1, 1], [], []>} : vector<8x128xbf16>, vector<128x256xbf16>, vector<8x256xf32> -> vector<8x256xf32>
    %124 = vector.extract_strided_slice %123 {offsets = [0, 0], sizes = [8, 128], strides = [1, 1]} : vector<8x256xf32> to vector<8x128xf32>
    %125 = vector.extract_strided_slice %121 {offsets = [0, 0], sizes = [8, 128], strides = [1, 1]} : vector<8x384xf32> to vector<8x128xf32>
    %126 = arith.addf %124, %125 : vector<8x128xf32>
    %127 = arith.negf %126 : vector<8x128xf32>
    %128 = math.exp %127 : vector<8x128xf32>
    %cst_33 = arith.constant 1.000000e+00 : f32
    %129 = vector.broadcast %cst_33 : f32 to vector<8x128xf32>
    %130 = arith.addf %129, %128 : vector<8x128xf32>
    %131 = arith.divf %129, %130 : vector<8x128xf32>
    %132 = vector.extract_strided_slice %123 {offsets = [0, 128], sizes = [8, 128], strides = [1, 1]} : vector<8x256xf32> to vector<8x128xf32>
    %133 = vector.extract_strided_slice %121 {offsets = [0, 128], sizes = [8, 128], strides = [1, 1]} : vector<8x384xf32> to vector<8x128xf32>
    %134 = arith.addf %132, %133 : vector<8x128xf32>
    %135 = arith.negf %134 : vector<8x128xf32>
    %136 = math.exp %135 : vector<8x128xf32>
    %cst_34 = arith.constant 1.000000e+00 : f32
    %137 = vector.broadcast %cst_34 : f32 to vector<8x128xf32>
    %138 = arith.addf %137, %136 : vector<8x128xf32>
    %139 = arith.divf %137, %138 : vector<8x128xf32>
    %140 = arith.mulf %117, %131 : vector<8x128xf32>
    %141 = arith.truncf %140 : vector<8x128xf32> to vector<8x128xbf16>
    %cst_35 = arith.constant dense<0.000000e+00> : vector<8x128xf32>
    %142 = tpu.matmul %141, %5, %cst_35 {dimension_numbers = #tpu.dot_dimension_numbers<[1], [0], [0], [1], [0, 0, 1, 1], [], []>} : vector<8x128xbf16>, vector<128x128xbf16>, vector<8x128xf32> -> vector<8x128xf32>
    %143 = vector.extract_strided_slice %121 {offsets = [0, 256], sizes = [8, 128], strides = [1, 1]} : vector<8x384xf32> to vector<8x128xf32>
    %144 = arith.addf %142, %143 : vector<8x128xf32>
    %145 = math.tanh %144 : vector<8x128xf32>
    %cst_36 = arith.constant 1.000000e+00 : f32
    %146 = vector.broadcast %cst_36 : f32 to vector<8x128xf32>
    %147 = arith.subf %146, %139 : vector<8x128xf32>
    %148 = arith.mulf %147, %117 : vector<8x128xf32>
    %149 = arith.mulf %139, %145 : vector<8x128xf32>
    %150 = arith.addf %148, %149 : vector<8x128xf32>
    %c8_i32_37 = arith.constant 8 : i32
    %151 = arith.muli %arg1, %c8_i32_37 : i32
    %152 = arith.addi %151, %c3_i32 : i32
    %153 = arith.cmpi slt, %152, %0 : i32
    %154 = arith.select %153, %150, %117 : vector<8x128xf32>
    %c4_i32 = arith.constant 4 : i32
    %155 = arith.index_cast %c4_i32 : i32 to index
    %c0_38 = arith.constant 0 : index
    %c0_39 = arith.constant 0 : index
    %156 = vector.load %arg3[%155, %c0_38, %c0_39] : memref<8x8x384xbf16, #tpu.memory_space<vmem>>, vector<1x8x384xbf16>
    %157 = vector.shape_cast %156 : vector<1x8x384xbf16> to vector<8x384xbf16>
    %158 = arith.extf %157 : vector<8x384xbf16> to vector<8x384xf32>
    %159 = arith.truncf %154 : vector<8x128xf32> to vector<8x128xbf16>
    %cst_40 = arith.constant dense<0.000000e+00> : vector<8x256xf32>
    %160 = tpu.matmul %159, %4, %cst_40 {dimension_numbers = #tpu.dot_dimension_numbers<[1], [0], [0], [1], [0, 0, 1, 1], [], []>} : vector<8x128xbf16>, vector<128x256xbf16>, vector<8x256xf32> -> vector<8x256xf32>
    %161 = vector.extract_strided_slice %160 {offsets = [0, 0], sizes = [8, 128], strides = [1, 1]} : vector<8x256xf32> to vector<8x128xf32>
    %162 = vector.extract_strided_slice %158 {offsets = [0, 0], sizes = [8, 128], strides = [1, 1]} : vector<8x384xf32> to vector<8x128xf32>
    %163 = arith.addf %161, %162 : vector<8x128xf32>
    %164 = arith.negf %163 : vector<8x128xf32>
    %165 = math.exp %164 : vector<8x128xf32>
    %cst_41 = arith.constant 1.000000e+00 : f32
    %166 = vector.broadcast %cst_41 : f32 to vector<8x128xf32>
    %167 = arith.addf %166, %165 : vector<8x128xf32>
    %168 = arith.divf %166, %167 : vector<8x128xf32>
    %169 = vector.extract_strided_slice %160 {offsets = [0, 128], sizes = [8, 128], strides = [1, 1]} : vector<8x256xf32> to vector<8x128xf32>
    %170 = vector.extract_strided_slice %158 {offsets = [0, 128], sizes = [8, 128], strides = [1, 1]} : vector<8x384xf32> to vector<8x128xf32>
    %171 = arith.addf %169, %170 : vector<8x128xf32>
    %172 = arith.negf %171 : vector<8x128xf32>
    %173 = math.exp %172 : vector<8x128xf32>
    %cst_42 = arith.constant 1.000000e+00 : f32
    %174 = vector.broadcast %cst_42 : f32 to vector<8x128xf32>
    %175 = arith.addf %174, %173 : vector<8x128xf32>
    %176 = arith.divf %174, %175 : vector<8x128xf32>
    %177 = arith.mulf %154, %168 : vector<8x128xf32>
    %178 = arith.truncf %177 : vector<8x128xf32> to vector<8x128xbf16>
    %cst_43 = arith.constant dense<0.000000e+00> : vector<8x128xf32>
    %179 = tpu.matmul %178, %5, %cst_43 {dimension_numbers = #tpu.dot_dimension_numbers<[1], [0], [0], [1], [0, 0, 1, 1], [], []>} : vector<8x128xbf16>, vector<128x128xbf16>, vector<8x128xf32> -> vector<8x128xf32>
    %180 = vector.extract_strided_slice %158 {offsets = [0, 256], sizes = [8, 128], strides = [1, 1]} : vector<8x384xf32> to vector<8x128xf32>
    %181 = arith.addf %179, %180 : vector<8x128xf32>
    %182 = math.tanh %181 : vector<8x128xf32>
    %cst_44 = arith.constant 1.000000e+00 : f32
    %183 = vector.broadcast %cst_44 : f32 to vector<8x128xf32>
    %184 = arith.subf %183, %176 : vector<8x128xf32>
    %185 = arith.mulf %184, %154 : vector<8x128xf32>
    %186 = arith.mulf %176, %182 : vector<8x128xf32>
    %187 = arith.addf %185, %186 : vector<8x128xf32>
    %c8_i32_45 = arith.constant 8 : i32
    %188 = arith.muli %arg1, %c8_i32_45 : i32
    %189 = arith.addi %188, %c4_i32 : i32
    %190 = arith.cmpi slt, %189, %0 : i32
    %191 = arith.select %190, %187, %154 : vector<8x128xf32>
    %c5_i32 = arith.constant 5 : i32
    %192 = arith.index_cast %c5_i32 : i32 to index
    %c0_46 = arith.constant 0 : index
    %c0_47 = arith.constant 0 : index
    %193 = vector.load %arg3[%192, %c0_46, %c0_47] : memref<8x8x384xbf16, #tpu.memory_space<vmem>>, vector<1x8x384xbf16>
    %194 = vector.shape_cast %193 : vector<1x8x384xbf16> to vector<8x384xbf16>
    %195 = arith.extf %194 : vector<8x384xbf16> to vector<8x384xf32>
    %196 = arith.truncf %191 : vector<8x128xf32> to vector<8x128xbf16>
    %cst_48 = arith.constant dense<0.000000e+00> : vector<8x256xf32>
    %197 = tpu.matmul %196, %4, %cst_48 {dimension_numbers = #tpu.dot_dimension_numbers<[1], [0], [0], [1], [0, 0, 1, 1], [], []>} : vector<8x128xbf16>, vector<128x256xbf16>, vector<8x256xf32> -> vector<8x256xf32>
    %198 = vector.extract_strided_slice %197 {offsets = [0, 0], sizes = [8, 128], strides = [1, 1]} : vector<8x256xf32> to vector<8x128xf32>
    %199 = vector.extract_strided_slice %195 {offsets = [0, 0], sizes = [8, 128], strides = [1, 1]} : vector<8x384xf32> to vector<8x128xf32>
    %200 = arith.addf %198, %199 : vector<8x128xf32>
    %201 = arith.negf %200 : vector<8x128xf32>
    %202 = math.exp %201 : vector<8x128xf32>
    %cst_49 = arith.constant 1.000000e+00 : f32
    %203 = vector.broadcast %cst_49 : f32 to vector<8x128xf32>
    %204 = arith.addf %203, %202 : vector<8x128xf32>
    %205 = arith.divf %203, %204 : vector<8x128xf32>
    %206 = vector.extract_strided_slice %197 {offsets = [0, 128], sizes = [8, 128], strides = [1, 1]} : vector<8x256xf32> to vector<8x128xf32>
    %207 = vector.extract_strided_slice %195 {offsets = [0, 128], sizes = [8, 128], strides = [1, 1]} : vector<8x384xf32> to vector<8x128xf32>
    %208 = arith.addf %206, %207 : vector<8x128xf32>
    %209 = arith.negf %208 : vector<8x128xf32>
    %210 = math.exp %209 : vector<8x128xf32>
    %cst_50 = arith.constant 1.000000e+00 : f32
    %211 = vector.broadcast %cst_50 : f32 to vector<8x128xf32>
    %212 = arith.addf %211, %210 : vector<8x128xf32>
    %213 = arith.divf %211, %212 : vector<8x128xf32>
    %214 = arith.mulf %191, %205 : vector<8x128xf32>
    %215 = arith.truncf %214 : vector<8x128xf32> to vector<8x128xbf16>
    %cst_51 = arith.constant dense<0.000000e+00> : vector<8x128xf32>
    %216 = tpu.matmul %215, %5, %cst_51 {dimension_numbers = #tpu.dot_dimension_numbers<[1], [0], [0], [1], [0, 0, 1, 1], [], []>} : vector<8x128xbf16>, vector<128x128xbf16>, vector<8x128xf32> -> vector<8x128xf32>
    %217 = vector.extract_strided_slice %195 {offsets = [0, 256], sizes = [8, 128], strides = [1, 1]} : vector<8x384xf32> to vector<8x128xf32>
    %218 = arith.addf %216, %217 : vector<8x128xf32>
    %219 = math.tanh %218 : vector<8x128xf32>
    %cst_52 = arith.constant 1.000000e+00 : f32
    %220 = vector.broadcast %cst_52 : f32 to vector<8x128xf32>
    %221 = arith.subf %220, %213 : vector<8x128xf32>
    %222 = arith.mulf %221, %191 : vector<8x128xf32>
    %223 = arith.mulf %213, %219 : vector<8x128xf32>
    %224 = arith.addf %222, %223 : vector<8x128xf32>
    %c8_i32_53 = arith.constant 8 : i32
    %225 = arith.muli %arg1, %c8_i32_53 : i32
    %226 = arith.addi %225, %c5_i32 : i32
    %227 = arith.cmpi slt, %226, %0 : i32
    %228 = arith.select %227, %224, %191 : vector<8x128xf32>
    %c6_i32 = arith.constant 6 : i32
    %229 = arith.index_cast %c6_i32 : i32 to index
    %c0_54 = arith.constant 0 : index
    %c0_55 = arith.constant 0 : index
    %230 = vector.load %arg3[%229, %c0_54, %c0_55] : memref<8x8x384xbf16, #tpu.memory_space<vmem>>, vector<1x8x384xbf16>
    %231 = vector.shape_cast %230 : vector<1x8x384xbf16> to vector<8x384xbf16>
    %232 = arith.extf %231 : vector<8x384xbf16> to vector<8x384xf32>
    %233 = arith.truncf %228 : vector<8x128xf32> to vector<8x128xbf16>
    %cst_56 = arith.constant dense<0.000000e+00> : vector<8x256xf32>
    %234 = tpu.matmul %233, %4, %cst_56 {dimension_numbers = #tpu.dot_dimension_numbers<[1], [0], [0], [1], [0, 0, 1, 1], [], []>} : vector<8x128xbf16>, vector<128x256xbf16>, vector<8x256xf32> -> vector<8x256xf32>
    %235 = vector.extract_strided_slice %234 {offsets = [0, 0], sizes = [8, 128], strides = [1, 1]} : vector<8x256xf32> to vector<8x128xf32>
    %236 = vector.extract_strided_slice %232 {offsets = [0, 0], sizes = [8, 128], strides = [1, 1]} : vector<8x384xf32> to vector<8x128xf32>
    %237 = arith.addf %235, %236 : vector<8x128xf32>
    %238 = arith.negf %237 : vector<8x128xf32>
    %239 = math.exp %238 : vector<8x128xf32>
    %cst_57 = arith.constant 1.000000e+00 : f32
    %240 = vector.broadcast %cst_57 : f32 to vector<8x128xf32>
    %241 = arith.addf %240, %239 : vector<8x128xf32>
    %242 = arith.divf %240, %241 : vector<8x128xf32>
    %243 = vector.extract_strided_slice %234 {offsets = [0, 128], sizes = [8, 128], strides = [1, 1]} : vector<8x256xf32> to vector<8x128xf32>
    %244 = vector.extract_strided_slice %232 {offsets = [0, 128], sizes = [8, 128], strides = [1, 1]} : vector<8x384xf32> to vector<8x128xf32>
    %245 = arith.addf %243, %244 : vector<8x128xf32>
    %246 = arith.negf %245 : vector<8x128xf32>
    %247 = math.exp %246 : vector<8x128xf32>
    %cst_58 = arith.constant 1.000000e+00 : f32
    %248 = vector.broadcast %cst_58 : f32 to vector<8x128xf32>
    %249 = arith.addf %248, %247 : vector<8x128xf32>
    %250 = arith.divf %248, %249 : vector<8x128xf32>
    %251 = arith.mulf %228, %242 : vector<8x128xf32>
    %252 = arith.truncf %251 : vector<8x128xf32> to vector<8x128xbf16>
    %cst_59 = arith.constant dense<0.000000e+00> : vector<8x128xf32>
    %253 = tpu.matmul %252, %5, %cst_59 {dimension_numbers = #tpu.dot_dimension_numbers<[1], [0], [0], [1], [0, 0, 1, 1], [], []>} : vector<8x128xbf16>, vector<128x128xbf16>, vector<8x128xf32> -> vector<8x128xf32>
    %254 = vector.extract_strided_slice %232 {offsets = [0, 256], sizes = [8, 128], strides = [1, 1]} : vector<8x384xf32> to vector<8x128xf32>
    %255 = arith.addf %253, %254 : vector<8x128xf32>
    %256 = math.tanh %255 : vector<8x128xf32>
    %cst_60 = arith.constant 1.000000e+00 : f32
    %257 = vector.broadcast %cst_60 : f32 to vector<8x128xf32>
    %258 = arith.subf %257, %250 : vector<8x128xf32>
    %259 = arith.mulf %258, %228 : vector<8x128xf32>
    %260 = arith.mulf %250, %256 : vector<8x128xf32>
    %261 = arith.addf %259, %260 : vector<8x128xf32>
    %c8_i32_61 = arith.constant 8 : i32
    %262 = arith.muli %arg1, %c8_i32_61 : i32
    %263 = arith.addi %262, %c6_i32 : i32
    %264 = arith.cmpi slt, %263, %0 : i32
    %265 = arith.select %264, %261, %228 : vector<8x128xf32>
    %c7_i32 = arith.constant 7 : i32
    %266 = arith.index_cast %c7_i32 : i32 to index
    %c0_62 = arith.constant 0 : index
    %c0_63 = arith.constant 0 : index
    %267 = vector.load %arg3[%266, %c0_62, %c0_63] : memref<8x8x384xbf16, #tpu.memory_space<vmem>>, vector<1x8x384xbf16>
    %268 = vector.shape_cast %267 : vector<1x8x384xbf16> to vector<8x384xbf16>
    %269 = arith.extf %268 : vector<8x384xbf16> to vector<8x384xf32>
    %270 = arith.truncf %265 : vector<8x128xf32> to vector<8x128xbf16>
    %cst_64 = arith.constant dense<0.000000e+00> : vector<8x256xf32>
    %271 = tpu.matmul %270, %4, %cst_64 {dimension_numbers = #tpu.dot_dimension_numbers<[1], [0], [0], [1], [0, 0, 1, 1], [], []>} : vector<8x128xbf16>, vector<128x256xbf16>, vector<8x256xf32> -> vector<8x256xf32>
    %272 = vector.extract_strided_slice %271 {offsets = [0, 0], sizes = [8, 128], strides = [1, 1]} : vector<8x256xf32> to vector<8x128xf32>
    %273 = vector.extract_strided_slice %269 {offsets = [0, 0], sizes = [8, 128], strides = [1, 1]} : vector<8x384xf32> to vector<8x128xf32>
    %274 = arith.addf %272, %273 : vector<8x128xf32>
    %275 = arith.negf %274 : vector<8x128xf32>
    %276 = math.exp %275 : vector<8x128xf32>
    %cst_65 = arith.constant 1.000000e+00 : f32
    %277 = vector.broadcast %cst_65 : f32 to vector<8x128xf32>
    %278 = arith.addf %277, %276 : vector<8x128xf32>
    %279 = arith.divf %277, %278 : vector<8x128xf32>
    %280 = vector.extract_strided_slice %271 {offsets = [0, 128], sizes = [8, 128], strides = [1, 1]} : vector<8x256xf32> to vector<8x128xf32>
    %281 = vector.extract_strided_slice %269 {offsets = [0, 128], sizes = [8, 128], strides = [1, 1]} : vector<8x384xf32> to vector<8x128xf32>
    %282 = arith.addf %280, %281 : vector<8x128xf32>
    %283 = arith.negf %282 : vector<8x128xf32>
    %284 = math.exp %283 : vector<8x128xf32>
    %cst_66 = arith.constant 1.000000e+00 : f32
    %285 = vector.broadcast %cst_66 : f32 to vector<8x128xf32>
    %286 = arith.addf %285, %284 : vector<8x128xf32>
    %287 = arith.divf %285, %286 : vector<8x128xf32>
    %288 = arith.mulf %265, %279 : vector<8x128xf32>
    %289 = arith.truncf %288 : vector<8x128xf32> to vector<8x128xbf16>
    %cst_67 = arith.constant dense<0.000000e+00> : vector<8x128xf32>
    %290 = tpu.matmul %289, %5, %cst_67 {dimension_numbers = #tpu.dot_dimension_numbers<[1], [0], [0], [1], [0, 0, 1, 1], [], []>} : vector<8x128xbf16>, vector<128x128xbf16>, vector<8x128xf32> -> vector<8x128xf32>
    %291 = vector.extract_strided_slice %269 {offsets = [0, 256], sizes = [8, 128], strides = [1, 1]} : vector<8x384xf32> to vector<8x128xf32>
    %292 = arith.addf %290, %291 : vector<8x128xf32>
    %293 = math.tanh %292 : vector<8x128xf32>
    %cst_68 = arith.constant 1.000000e+00 : f32
    %294 = vector.broadcast %cst_68 : f32 to vector<8x128xf32>
    %295 = arith.subf %294, %287 : vector<8x128xf32>
    %296 = arith.mulf %295, %265 : vector<8x128xf32>
    %297 = arith.mulf %287, %293 : vector<8x128xf32>
    %298 = arith.addf %296, %297 : vector<8x128xf32>
    %c8_i32_69 = arith.constant 8 : i32
    %299 = arith.muli %arg1, %c8_i32_69 : i32
    %300 = arith.addi %299, %c7_i32 : i32
    %301 = arith.cmpi slt, %300, %0 : i32
    %302 = arith.select %301, %298, %265 : vector<8x128xf32>
    %c8_i32_70 = arith.constant 8 : i32
    %c0_71 = arith.constant 0 : index
    %c0_72 = arith.constant 0 : index
    %303 = vector.load %arg7[%c0_71, %c0_72] : memref<8x128xf32, #tpu.memory_space<vmem>>, vector<8x128xf32>
    tpu.vector_store %arg7[%c0_71, %c0_72], %302 {strides = array<i32>} : memref<8x128xf32, #tpu.memory_space<vmem>>, vector<8x128xf32>,
    %c0_i32_73 = arith.constant 0 : i32
    %304 = arith.cmpi eq, %arg1, %c0_i32_73 : i32
    %305 = arith.extui %304 : i1 to i32
    %c0_i32_74 = arith.constant 0 : i32
    %306 = arith.cmpi ne, %305, %c0_i32_74 : i32
    scf.if %306 {
      %c0_75 = arith.constant 0 : index
      %c0_76 = arith.constant 0 : index
      %307 = vector.load %arg6[%c0_75, %c0_76] : memref<8x128xf32, #tpu.memory_space<vmem>>, vector<8x128xf32>
      tpu.vector_store %arg6[%c0_75, %c0_76], %302 {strides = array<i32>} : memref<8x128xf32, #tpu.memory_space<vmem>>, vector<8x128xf32>,
    } else {
    }
    return
  }
  func.func @transform_0(%arg0: i32, %arg1: i32, %arg2: memref<1xi32, #tpu.memory_space<smem>>) -> (i32, i32, i32) {
    %c0_i32 = arith.constant 0 : i32
    %c0_i32_0 = arith.constant 0 : i32
    return %arg1, %arg0, %c0_i32 : i32, i32, i32
  }
  func.func @transform_1(%arg0: i32, %arg1: i32, %arg2: memref<1xi32, #tpu.memory_space<smem>>) -> (i32, i32) {
    %c0_i32 = arith.constant 0 : i32
    %c0_i32_0 = arith.constant 0 : i32
    %c0_i32_1 = arith.constant 0 : i32
    return %c0_i32, %c0_i32_0 : i32, i32
  }
  func.func @transform_2(%arg0: i32, %arg1: i32, %arg2: memref<1xi32, #tpu.memory_space<smem>>) -> (i32, i32) {
    %c0_i32 = arith.constant 0 : i32
    %c0_i32_0 = arith.constant 0 : i32
    %c0_i32_1 = arith.constant 0 : i32
    return %c0_i32, %c0_i32_0 : i32, i32
  }
  func.func @transform_3(%arg0: i32, %arg1: i32, %arg2: memref<1xi32, #tpu.memory_space<smem>>) -> (i32, i32) {
    %c0_i32 = arith.constant 0 : i32
    %c0_i32_0 = arith.constant 0 : i32
    return %arg0, %c0_i32 : i32, i32
  }
}

</mosaic_0001>

<llo_original>
// kernel: tpu_custom_call.1
$region0: #{tpu_custom_call.1}
  #allocation0 [shape = 'u32[]', space=smem, size = 0x4, offset = 0x4, fixed_abs, tag = 'smem constant byte address 0x4 - core index']
  #allocation1 [shape = 'u32[72,128]{1,0:T(1,128)}', space=vmem, size = 0x9000, scoped, tag = 'internal scratch']
  #allocation2 [shape = 'f32[8,128]{1,0:T(8,128)}', space=vmem, size = 0x1000, scoped, tag = 'scratch operand']
  #allocation3 [shape = 's32[1]{0}', space=sflag, size = 0x4, scoped, tag = 'scoped memory for tpu_custom_call.1']
  #allocation4 [shape = 's32[1]{0:T(128)S(6)}', space=smem, size = 0x200, scoped, tag = 'prefetched SMEM operand 0']
  %s0 = inlined_call_operand.<no memory space> [shape: s32[1], index: 0, kind: input, shape index: {}]
  %s1 = inlined_call_operand.hbm [shape: bf16[8,8,384], index: 1, kind: input, shape index: {}]
  %s2 = inlined_call_operand.hbm [shape: bf16[128,256], index: 2, kind: input, shape index: {}]
  %s3 = inlined_call_operand.hbm [shape: bf16[128,128], index: 3, kind: input, shape index: {}]
  %s4 = inlined_call_operand.hbm [shape: f32[8,128], index: 4, kind: output, shape index: {}]
  %s5 = sld [smem:[#allocation0]]
  $region42: #{tpu_custom_call.1} parent=0
    _
  %s7 = ssub.s32 1, %s5
  %s8 = scalar_select 0, %s7, %s5
  %9 = sst [smem:[#allocation4]] %s0
  $region1: #{tpu_custom_call.1} parent=0
    #allocation5 [shape = 'u8[49152]{0}', space=vmem, size = 0xc000, scoped, tag = 'input window, operand 1, single buffered']
    #allocation6 [shape = 's32[1]{0}', space=sflag, size = 0x4, scoped, tag = 'scoped memory for tpu_custom_call.1']
    #allocation7 [shape = 's32[1]{0}', space=sflag, size = 0x4, scoped, tag = 'scoped memory for tpu_custom_call.1']
    #allocation8 [shape = 'u8[65536]{0}', space=vmem, size = 0x10000, scoped, tag = 'input window, operand 2, single buffered']
    #allocation9 [shape = 's32[1]{0}', space=sflag, size = 0x4, scoped, tag = 'scoped memory for tpu_custom_call.1']
    #allocation10 [shape = 'u8[32768]{0}', space=vmem, size = 0x8000, scoped, tag = 'input window, operand 3, single buffered']
    #allocation11 [shape = 'u8[4096]{0}', space=vmem, size = 0x1000, scoped, tag = 'output window, operand 0, single buffered']
    %10 = vsyncpa [#allocation6], 0
    %11 = vsyncpa [#allocation9], 0
    %12 = vsyncpa [#allocation7], 0
    // Predicated region
    $region2: #{tpu_custom_call.1} parent=1 // pred_check
      _
    $region3: #{tpu_custom_call.1} parent=1 // pred_check_branch
      %14 = sbr.rel (0) target = $region5
    $region4: #{tpu_custom_call.1} parent=1 // pred_region
      %16 = vsyncadd [#allocation6], 0
      %s17 = sshll.u32 %s1, 4
      %s18 = int_to_ptr.hbm [resolvable:$true] %s17
      %s19 = sshll.u32 [#allocation5], 4
      %s20 = int_to_ptr.vmem [resolvable:$true] %s19
      %25 = dma.hbm_to_vmem [thread:$0]  %s18, 1536, %s20, [#allocation6], 192, 192, 12
    $region5: #{tpu_custom_call.1} parent=1 // pred_fallthru
      _
    // Predicated region
    $region6: #{tpu_custom_call.1} parent=1 // pred_check
      _
    $region7: #{tpu_custom_call.1} parent=1 // pred_check_branch
      %27 = sbr.rel (0) target = $region9
    $region8: #{tpu_custom_call.1} parent=1 // pred_region
      %29 = vsyncadd [#allocation9], 0
      %s30 = sshll.u32 %s2, 4
      %s31 = int_to_ptr.hbm [resolvable:$true] %s30
      %s32 = sshll.u32 [#allocation8], 4
      %s33 = int_to_ptr.vmem [resolvable:$true] %s32
      %38 = dma.hbm_to_vmem [thread:$0]  %s31, 2048, %s33, [#allocation9], 128, 128, 8
    $region9: #{tpu_custom_call.1} parent=1 // pred_fallthru
      _
    // Predicated region
    $region10: #{tpu_custom_call.1} parent=1 // pred_check
      _
    $region11: #{tpu_custom_call.1} parent=1 // pred_check_branch
      %40 = sbr.rel (0) target = $region13
    $region12: #{tpu_custom_call.1} parent=1 // pred_region
      %42 = vsyncadd [#allocation9], 0
      %s43 = sshll.u32 %s3, 4
      %s44 = int_to_ptr.hbm [resolvable:$true] %s43
      %s45 = sshll.u32 [#allocation10], 4
      %s46 = int_to_ptr.vmem [resolvable:$true] %s45
      %51 = dma.hbm_to_vmem [thread:$0]  %s44, 1024, %s46, [#allocation9], 64, 64, 4
    $region13: #{tpu_custom_call.1} parent=1 // pred_fallthru
      _
    // Predicated region
    $region14: #{tpu_custom_call.1} parent=1 // pred_check
      _
    $region15: #{tpu_custom_call.1} parent=1 // pred_check_branch
      %53 = sbr.rel (0) target = $region17
    $region16: #{tpu_custom_call.1} parent=1 // pred_region
      %55 = dma.done [#allocation6], 1536
    $region17: #{tpu_custom_call.1} parent=1 // pred_fallthru
      _
    // Predicated region
    $region18: #{tpu_custom_call.1} parent=1 // pred_check
      _
    $region19: #{tpu_custom_call.1} parent=1 // pred_check_branch
      %57 = sbr.rel (0) target = $region21
    $region20: #{tpu_custom_call.1} parent=1 // pred_region
      %59 = dma.done [#allocation9], 2048
    $region21: #{tpu_custom_call.1} parent=1 // pred_fallthru
      _
    // Predicated region
    $region22: #{tpu_custom_call.1} parent=1 // pred_check
      _
    $region23: #{tpu_custom_call.1} parent=1 // pred_check_branch
      %61 = sbr.rel (0) target = $region25
    $region24: #{tpu_custom_call.1} parent=1 // pred_region
      %63 = dma.done [#allocation9], 1024
    $region25: #{tpu_custom_call.1} parent=1 // pred_fallthru
      _
    %s64 = sld [smem:[#allocation4]]
    %p65 = scmp.eq.s32.totalorder 0, 0
    // Predicated region
    $region26: #{tpu_custom_call.1} parent=1 // pred_check
      %p66 = pneg %p65
    $region27: #{tpu_custom_call.1} parent=1 // pred_check_branch
      %68 = sbr.rel (%p66) target = $region29
    $region28: #{tpu_custom_call.1} parent=1 // pred_region
      %69 = vst [vmem:[#allocation2] sm:$0xff] 0.0
    $region29: #{tpu_custom_call.1} parent=1 // pred_fallthru
      _
    %v70 = vld [vmem:[#allocation8] sm:$0xff]
    %v71 = vld [vmem:[#allocation8 + $0x8] sm:$0xff]
    %v72 = vld [vmem:[#allocation8 + $0x10] sm:$0xff]
    %v73 = vld [vmem:[#allocation8 + $0x18] sm:$0xff]
    %v74 = vld [vmem:[#allocation8 + $0x20] sm:$0xff]
    %v75 = vld [vmem:[#allocation8 + $0x28] sm:$0xff]
    %v76 = vld [vmem:[#allocation8 + $0x30] sm:$0xff]
    %v77 = vld [vmem:[#allocation8 + $0x38] sm:$0xff]
    %v78 = vld [vmem:[#allocation8 + $0x40] sm:$0xff]
    %v79 = vld [vmem:[#allocation8 + $0x48] sm:$0xff]
    %v80 = vld [vmem:[#allocation8 + $0x50] sm:$0xff]
    %v81 = vld [vmem:[#allocation8 + $0x58] sm:$0xff]
    %v82 = vld [vmem:[#allocation8 + $0x60] sm:$0xff]
    %v83 = vld [vmem:[#allocation8 + $0x68] sm:$0xff]
    %v84 = vld [vmem:[#allocation8 + $0x70] sm:$0xff]
    %v85 = vld [vmem:[#allocation8 + $0x78] sm:$0xff]
    %v86 = vld [vmem:[#allocation10] sm:$0xf]
    %v87 = vld [vmem:[#allocation10 + $0x4] sm:$0xf]
    %v88 = vld [vmem:[#allocation10 + $0x8] sm:$0xf]
    %v89 = vld [vmem:[#allocation10 + $0xc] sm:$0xf]
    %v90 = vld [vmem:[#allocation10 + $0x10] sm:$0xf]
    %v91 = vld [vmem:[#allocation10 + $0x14] sm:$0xf]
    %v92 = vld [vmem:[#allocation10 + $0x18] sm:$0xf]
    %v93 = vld [vmem:[#allocation10 + $0x1c] sm:$0xf]
    %v94 = vld [vmem:[#allocation10 + $0x20] sm:$0xf]
    %v95 = vld [vmem:[#allocation10 + $0x24] sm:$0xf]
    %v96 = vld [vmem:[#allocation10 + $0x28] sm:$0xf]
    %v97 = vld [vmem:[#allocation10 + $0x2c] sm:$0xf]
    %v98 = vld [vmem:[#allocation10 + $0x30] sm:$0xf]
    %v99 = vld [vmem:[#allocation10 + $0x34] sm:$0xf]
    %v100 = vld [vmem:[#allocation10 + $0x38] sm:$0xf]
    %v101 = vld [vmem:[#allocation10 + $0x3c] sm:$0xf]
    %v102 = vld [vmem:[#allocation2] sm:$0xff]
    %v103 = vld [vmem:[#allocation5] sm:$0xff]
    %v104 = vld [vmem:[#allocation5 + $0x8] sm:$0xf]
    %v105 = vunpack.c.l.bf16 %v103
    %v106 = vunpack.c.h.bf16 %v103
    %v107 = vunpack.c.l.bf16 %v104
    %v108 = vpack.c.bf16 %v102, %v102
    %v125 = vunpack.c.l.b16 %v70
    %v126 = vunpack.c.h.b16 %v70
    %v127 = vunpack.c.l.b16 %v71
    %v128 = vunpack.c.h.b16 %v71
    %v129 = vunpack.c.l.b16 %v72
    %v130 = vunpack.c.h.b16 %v72
    %v131 = vunpack.c.l.b16 %v73
    %v132 = vunpack.c.h.b16 %v73
    %v133 = vunpack.c.l.b16 %v74
    %v134 = vunpack.c.h.b16 %v74
    %v135 = vunpack.c.l.b16 %v75
    %v136 = vunpack.c.h.b16 %v75
    %v137 = vunpack.c.l.b16 %v76
    %v138 = vunpack.c.h.b16 %v76
    %v139 = vunpack.c.l.b16 %v77
    %v140 = vunpack.c.h.b16 %v77
    %v141 = vunpack.c.l.b16 %v78
    %v142 = vunpack.c.h.b16 %v78
    %v143 = vunpack.c.l.b16 %v79
    %v144 = vunpack.c.h.b16 %v79
    %v145 = vunpack.c.l.b16 %v80
    %v146 = vunpack.c.h.b16 %v80
    %v147 = vunpack.c.l.b16 %v81
    %v148 = vunpack.c.h.b16 %v81
    %v149 = vunpack.c.l.b16 %v82
    %v150 = vunpack.c.h.b16 %v82
    %v151 = vunpack.c.l.b16 %v83
    %v152 = vunpack.c.h.b16 %v83
    %v153 = vunpack.c.l.b16 %v84
    %v154 = vunpack.c.h.b16 %v84
    %v155 = vunpack.c.l.b16 %v85
    %v156 = vunpack.c.h.b16 %v85
    %v157 = vpack.c.b16 %v127, %v125
    %v158 = vpack.c.b16 %v128, %v126
    %v159 = vpack.c.b16 %v131, %v129
    %v160 = vpack.c.b16 %v132, %v130
    %v161 = vpack.c.b16 %v135, %v133
    %v162 = vpack.c.b16 %v136, %v134
    %v163 = vpack.c.b16 %v139, %v137
    %v164 = vpack.c.b16 %v140, %v138
    %v165 = vpack.c.b16 %v143, %v141
    %v166 = vpack.c.b16 %v144, %v142
    %v167 = vpack.c.b16 %v147, %v145
    %v168 = vpack.c.b16 %v148, %v146
    %v169 = vpack.c.b16 %v151, %v149
    %v170 = vpack.c.b16 %v152, %v150
    %v171 = vpack.c.b16 %v155, %v153
    %v172 = vpack.c.b16 %v156, %v154
    %189 = vmatpush.bf16.msra.mxu0 %v171
    %190 = vmatpush.bf16.msra.mxu0 %v169
    %191 = vmatpush.bf16.msra.mxu0 %v167
    %192 = vmatpush.bf16.msra.mxu0 %v165
    %193 = vmatpush.bf16.msra.mxu0 %v163
    %194 = vmatpush.bf16.msra.mxu0 %v161
    %195 = vmatpush.bf16.msra.mxu0 %v159
    %196 = vmatpush.bf16.msra.mxu0 %v157
    %197 = vmatmul.bf16.gmra.mxu0 %v108
    %v198 = vpop.f32.mrf.mxu0
    %v199 = vadd.f32 0.0, %v198
    %v200 = vpop.f32.mrf.mxu0
    %201 = vdwg.mxu0
    %202 = vmatpush.bf16.msra.mxu0 %v172
    %203 = vmatpush.bf16.msra.mxu0 %v170
    %204 = vmatpush.bf16.msra.mxu0 %v168
    %205 = vmatpush.bf16.msra.mxu0 %v166
    %206 = vmatpush.bf16.msra.mxu0 %v164
    %207 = vmatpush.bf16.msra.mxu0 %v162
    %208 = vmatpush.bf16.msra.mxu0 %v160
    %209 = vmatpush.bf16.msra.mxu0 %v158
    %210 = vmatmul.bf16.gmra.mxu0 %v108
    %v211 = vpop.f32.mrf.mxu0
    %v212 = vadd.f32 0.0, %v211
    %v213 = vpop.f32.mrf.mxu0
    %214 = vdwg.mxu0
    %v215 = vadd.f32 %v199, %v105
    %v216 = vxor.u32 %v215, 2147483648
    %v217 = vmul.f32 %v216, 1.442695
    %v218 = vpow.pop %v217
    %v219 = vadd.f32 %v218, 1.0
    %v220 = vrcp.pop %v219
    %v221 = vmul.f32 %v219, %v220
    %v222 = vsub.f32 1.0, %v221
    %v223 = vmul.f32 %v220, %v222
    %v224 = vadd.f32 %v220, %v223
    %vm225 = vweird.f32 %v219
    %vm226 = vweird.f32 %v220
    %vm227 = vmor %vm225, %vm226
    %v228 = vsel %vm227, %v220, %v224
    %v229 = vand.u32 2147483647, %v219
    %vm230 = vcmp.eq.f32.partialorder %v229, 8.507059e+37
    %v231 = vand.u32 %v219, 2147483648
    %v232 = vor.u32 1.1754944e-38, %v231
    %v233 = vsel %vm230, %v232, %v228
    %v234 = vmul.f32 1.0, %v233
    %v235 = vadd.f32 %v212, %v106
    %v236 = vxor.u32 %v235, 2147483648
    %v237 = vmul.f32 %v236, 1.442695
    %v238 = vpow.pop %v237
    %v239 = vadd.f32 %v238, 1.0
    %v240 = vrcp.pop %v239
    %v241 = vmul.f32 %v239, %v240
    %v242 = vsub.f32 1.0, %v241
    %v243 = vmul.f32 %v240, %v242
    %v244 = vadd.f32 %v240, %v243
    %vm245 = vweird.f32 %v239
    %vm246 = vweird.f32 %v240
    %vm247 = vmor %vm245, %vm246
    %v248 = vsel %vm247, %v240, %v244
    %v249 = vand.u32 2147483647, %v239
    %vm250 = vcmp.eq.f32.partialorder %v249, 8.507059e+37
    %v251 = vand.u32 %v239, 2147483648
    %v252 = vor.u32 1.1754944e-38, %v251
    %v253 = vsel %vm250, %v252, %v248
    %v254 = vmul.f32 1.0, %v253
    %v255 = vmul.f32 %v102, %v234
    %v256 = vpack.c.bf16 %v255, %v255
    %v273 = vunpack.c.l.b16 %v86
    %v274 = vunpack.c.l.b16 %v87
    %v275 = vunpack.c.l.b16 %v88
    %v276 = vunpack.c.l.b16 %v89
    %v277 = vunpack.c.l.b16 %v90
    %v278 = vunpack.c.l.b16 %v91
    %v279 = vunpack.c.l.b16 %v92
    %v280 = vunpack.c.l.b16 %v93
    %v281 = vunpack.c.l.b16 %v94
    %v282 = vunpack.c.l.b16 %v95
    %v283 = vunpack.c.l.b16 %v96
    %v284 = vunpack.c.l.b16 %v97
    %v285 = vunpack.c.l.b16 %v98
    %v286 = vunpack.c.l.b16 %v99
    %v287 = vunpack.c.l.b16 %v100
    %v288 = vunpack.c.l.b16 %v101
    %v289 = vpack.c.b16 %v274, %v273
    %v290 = vpack.c.b16 %v276, %v275
    %v291 = vpack.c.b16 %v278, %v277
    %v292 = vpack.c.b16 %v280, %v279
    %v293 = vpack.c.b16 %v282, %v281
    %v294 = vpack.c.b16 %v284, %v283
    %v295 = vpack.c.b16 %v286, %v285
    %v296 = vpack.c.b16 %v288, %v287
    %305 = vmatpush.bf16.msra.mxu0 %v296
    %306 = vmatpush.bf16.msra.mxu0 %v295
    %307 = vmatpush.bf16.msra.mxu0 %v294
    %308 = vmatpush.bf16.msra.mxu0 %v293
    %309 = vmatpush.bf16.msra.mxu0 %v292
    %310 = vmatpush.bf16.msra.mxu0 %v291
    %311 = vmatpush.bf16.msra.mxu0 %v290
    %312 = vmatpush.bf16.msra.mxu0 %v289
    %313 = vmatmul.bf16.gmra.mxu0 %v256
    %v314 = vpop.f32.mrf.mxu0
    %v315 = vadd.f32 %v107, %v314
    %v316 = vpop.f32.mrf.mxu0
    %317 = vdwg.mxu0
    %v318 = vtanh.pop %v315
    %v319 = vsub.f32 1.0, %v254
    %v320 = vmul.f32 %v319, %v102
    %v321 = vmul.f32 %v254, %v318
    %v322 = vadd.f32 %v320, %v321
    %s323 = smul.u32 0, 8
    %p324 = scmp.lt.s32.totalorder %s323, %s64
    %s325 = scalar_select %p324, 1, 0
    %v326 = vstv %s325
    %vm327 = vcmp.eq.s32.totalorder %v326, 1
    %v328 = vsel %vm327, %v322, %v102
    %s329 = scalar_lea.vmem [#allocation5], 12
    %v330 = vld [vmem:[%s329] sm:$0xff]
    %v331 = vld [vmem:[%s329 + $0x8] sm:$0xf]
    %v332 = vunpack.c.l.bf16 %v330
    %v333 = vunpack.c.h.bf16 %v330
    %v334 = vunpack.c.l.bf16 %v331
    %v335 = vpack.c.bf16 %v328, %v328
    %336 = vmatpush.bf16.msra.mxu0 %v171
    %337 = vmatpush.bf16.msra.mxu0 %v169
    %338 = vmatpush.bf16.msra.mxu0 %v167
    %339 = vmatpush.bf16.msra.mxu0 %v165
    %340 = vmatpush.bf16.msra.mxu0 %v163
    %341 = vmatpush.bf16.msra.mxu0 %v161
    %342 = vmatpush.bf16.msra.mxu0 %v159
    %343 = vmatpush.bf16.msra.mxu0 %v157
    %344 = vmatmul.bf16.gmra.mxu0 %v335
    %v345 = vpop.f32.mrf.mxu0
    %v346 = vadd.f32 0.0, %v345
    %v347 = vpop.f32.mrf.mxu0
    %348 = vdwg.mxu0
    %349 = vmatpush.bf16.msra.mxu0 %v172
    %350 = vmatpush.bf16.msra.mxu0 %v170
    %351 = vmatpush.bf16.msra.mxu0 %v168
    %352 = vmatpush.bf16.msra.mxu0 %v166
    %353 = vmatpush.bf16.msra.mxu0 %v164
    %354 = vmatpush.bf16.msra.mxu0 %v162
    %355 = vmatpush.bf16.msra.mxu0 %v160
    %356 = vmatpush.bf16.msra.mxu0 %v158
    %357 = vmatmul.bf16.gmra.mxu0 %v335
    %v358 = vpop.f32.mrf.mxu0
    %v359 = vadd.f32 0.0, %v358
    %v360 = vpop.f32.mrf.mxu0
    %361 = vdwg.mxu0
    %v362 = vadd.f32 %v346, %v332
    %v363 = vxor.u32 %v362, 2147483648
    %v364 = vmul.f32 %v363, 1.442695
    %v365 = vpow.pop %v364
    %v366 = vadd.f32 %v365, 1.0
    %v367 = vrcp.pop %v366
    %v368 = vmul.f32 %v366, %v367
    %v369 = vsub.f32 1.0, %v368
    %v370 = vmul.f32 %v367, %v369
    %v371 = vadd.f32 %v367, %v370
    %vm372 = vweird.f32 %v366
    %vm373 = vweird.f32 %v367
    %vm374 = vmor %vm372, %vm373
    %v375 = vsel %vm374, %v367, %v371
    %v376 = vand.u32 2147483647, %v366
    %vm377 = vcmp.eq.f32.partialorder %v376, 8.507059e+37
    %v378 = vand.u32 %v366, 2147483648
    %v379 = vor.u32 1.1754944e-38, %v378
    %v380 = vsel %vm377, %v379, %v375
    %v381 = vmul.f32 1.0, %v380
    %v382 = vadd.f32 %v359, %v333
    %v383 = vxor.u32 %v382, 2147483648
    %v384 = vmul.f32 %v383, 1.442695
    %v385 = vpow.pop %v384
    %v386 = vadd.f32 %v385, 1.0
    %v387 = vrcp.pop %v386
    %v388 = vmul.f32 %v386, %v387
    %v389 = vsub.f32 1.0, %v388
    %v390 = vmul.f32 %v387, %v389
    %v391 = vadd.f32 %v387, %v390
    %vm392 = vweird.f32 %v386
    %vm393 = vweird.f32 %v387
    %vm394 = vmor %vm392, %vm393
    %v395 = vsel %vm394, %v387, %v391
    %v396 = vand.u32 2147483647, %v386
    %vm397 = vcmp.eq.f32.partialorder %v396, 8.507059e+37
    %v398 = vand.u32 %v386, 2147483648
    %v399 = vor.u32 1.1754944e-38, %v398
    %v400 = vsel %vm397, %v399, %v395
    %v401 = vmul.f32 1.0, %v400
    %v402 = vmul.f32 %v328, %v381
    %v403 = vpack.c.bf16 %v402, %v402
    %404 = vmatpush.bf16.msra.mxu0 %v296
    %405 = vmatpush.bf16.msra.mxu0 %v295
    %406 = vmatpush.bf16.msra.mxu0 %v294
    %407 = vmatpush.bf16.msra.mxu0 %v293
    %408 = vmatpush.bf16.msra.mxu0 %v292
    %409 = vmatpush.bf16.msra.mxu0 %v291
    %410 = vmatpush.bf16.msra.mxu0 %v290
    %411 = vmatpush.bf16.msra.mxu0 %v289
    %412 = vmatmul.bf16.gmra.mxu0 %v403
    %v413 = vpop.f32.mrf.mxu0
    %v414 = vadd.f32 %v334, %v413
    %v415 = vpop.f32.mrf.mxu0
    %416 = vdwg.mxu0
    %v417 = vtanh.pop %v414
    %v418 = vsub.f32 1.0, %v401
    %v419 = vmul.f32 %v418, %v328
    %v420 = vmul.f32 %v401, %v417
    %v421 = vadd.f32 %v419, %v420
    %s422 = sadd.s32 %s323, 1
    %p423 = scmp.lt.s32.totalorder %s422, %s64
    %s424 = scalar_select %p423, 1, 0
    %v425 = vstv %s424
    %vm426 = vcmp.eq.s32.totalorder %v425, 1
    %v427 = vsel %vm426, %v421, %v328
    %s428 = scalar_lea.vmem [#allocation5], 24
    %v429 = vld [vmem:[%s428] sm:$0xff]
    %v430 = vld [vmem:[%s428 + $0x8] sm:$0xf]
    %v431 = vunpack.c.l.bf16 %v429
    %v432 = vunpack.c.h.bf16 %v429
    %v433 = vunpack.c.l.bf16 %v430
    %v434 = vpack.c.bf16 %v427, %v427
    %435 = vmatpush.bf16.msra.mxu0 %v171
    %436 = vmatpush.bf16.msra.mxu0 %v169
    %437 = vmatpush.bf16.msra.mxu0 %v167
    %438 = vmatpush.bf16.msra.mxu0 %v165
    %439 = vmatpush.bf16.msra.mxu0 %v163
    %440 = vmatpush.bf16.msra.mxu0 %v161
    %441 = vmatpush.bf16.msra.mxu0 %v159
    %442 = vmatpush.bf16.msra.mxu0 %v157
    %443 = vmatmul.bf16.gmra.mxu0 %v434
    %v444 = vpop.f32.mrf.mxu0
    %v445 = vadd.f32 0.0, %v444
    %v446 = vpop.f32.mrf.mxu0
    %447 = vdwg.mxu0
    %448 = vmatpush.bf16.msra.mxu0 %v172
    %449 = vmatpush.bf16.msra.mxu0 %v170
    %450 = vmatpush.bf16.msra.mxu0 %v168
    %451 = vmatpush.bf16.msra.mxu0 %v166
    %452 = vmatpush.bf16.msra.mxu0 %v164
    %453 = vmatpush.bf16.msra.mxu0 %v162
    %454 = vmatpush.bf16.msra.mxu0 %v160
    %455 = vmatpush.bf16.msra.mxu0 %v158
    %456 = vmatmul.bf16.gmra.mxu0 %v434
    %v457 = vpop.f32.mrf.mxu0
    %v458 = vadd.f32 0.0, %v457
    %v459 = vpop.f32.mrf.mxu0
    %460 = vdwg.mxu0
    %v461 = vadd.f32 %v445, %v431
    %v462 = vxor.u32 %v461, 2147483648
    %v463 = vmul.f32 %v462, 1.442695
    %v464 = vpow.pop %v463
    %v465 = vadd.f32 %v464, 1.0
    %v466 = vrcp.pop %v465
    %v467 = vmul.f32 %v465, %v466
    %v468 = vsub.f32 1.0, %v467
    %v469 = vmul.f32 %v466, %v468
    %v470 = vadd.f32 %v466, %v469
    %vm471 = vweird.f32 %v465
    %vm472 = vweird.f32 %v466
    %vm473 = vmor %vm471, %vm472
    %v474 = vsel %vm473, %v466, %v470
    %v475 = vand.u32 2147483647, %v465
    %vm476 = vcmp.eq.f32.partialorder %v475, 8.507059e+37
    %v477 = vand.u32 %v465, 2147483648
    %v478 = vor.u32 1.1754944e-38, %v477
    %v479 = vsel %vm476, %v478, %v474
    %v480 = vmul.f32 1.0, %v479
    %v481 = vadd.f32 %v458, %v432
    %v482 = vxor.u32 %v481, 2147483648
    %v483 = vmul.f32 %v482, 1.442695
    %v484 = vpow.pop %v483
    %v485 = vadd.f32 %v484, 1.0
    %v486 = vrcp.pop %v485
    %v487 = vmul.f32 %v485, %v486
    %v488 = vsub.f32 1.0, %v487
    %v489 = vmul.f32 %v486, %v488
    %v490 = vadd.f32 %v486, %v489
    %vm491 = vweird.f32 %v485
    %vm492 = vweird.f32 %v486
    %vm493 = vmor %vm491, %vm492
    %v494 = vsel %vm493, %v486, %v490
    %v495 = vand.u32 2147483647, %v485
    %vm496 = vcmp.eq.f32.partialorder %v495, 8.507059e+37
    %v497 = vand.u32 %v485, 2147483648
    %v498 = vor.u32 1.1754944e-38, %v497
    %v499 = vsel %vm496, %v498, %v494
    %v500 = vmul.f32 1.0, %v499
    %v501 = vmul.f32 %v427, %v480
    %v502 = vpack.c.bf16 %v501, %v501
    %503 = vmatpush.bf16.msra.mxu0 %v296
    %504 = vmatpush.bf16.msra.mxu0 %v295
    %505 = vmatpush.bf16.msra.mxu0 %v294
    %506 = vmatpush.bf16.msra.mxu0 %v293
    %507 = vmatpush.bf16.msra.mxu0 %v292
    %508 = vmatpush.bf16.msra.mxu0 %v291
    %509 = vmatpush.bf16.msra.mxu0 %v290
    %510 = vmatpush.bf16.msra.mxu0 %v289
    %511 = vmatmul.bf16.gmra.mxu0 %v502
    %v512 = vpop.f32.mrf.mxu0
    %v513 = vadd.f32 %v433, %v512
    %v514 = vpop.f32.mrf.mxu0
    %515 = vdwg.mxu0
    %v516 = vtanh.pop %v513
    %v517 = vsub.f32 1.0, %v500
    %v518 = vmul.f32 %v517, %v427
    %v519 = vmul.f32 %v500, %v516
    %v520 = vadd.f32 %v518, %v519
    %s521 = sadd.s32 %s323, 2
    %p522 = scmp.lt.s32.totalorder %s521, %s64
    %s523 = scalar_select %p522, 1, 0
    %v524 = vstv %s523
    %vm525 = vcmp.eq.s32.totalorder %v524, 1
    %v526 = vsel %vm525, %v520, %v427
    %s527 = scalar_lea.vmem [#allocation5], 36
    %v528 = vld [vmem:[%s527] sm:$0xff]
    %v529 = vld [vmem:[%s527 + $0x8] sm:$0xf]
    %v530 = vunpack.c.l.bf16 %v528
    %v531 = vunpack.c.h.bf16 %v528
    %v532 = vunpack.c.l.bf16 %v529
    %v533 = vpack.c.bf16 %v526, %v526
    %534 = vmatpush.bf16.msra.mxu0 %v171
    %535 = vmatpush.bf16.msra.mxu0 %v169
    %536 = vmatpush.bf16.msra.mxu0 %v167
    %537 = vmatpush.bf16.msra.mxu0 %v165
    %538 = vmatpush.bf16.msra.mxu0 %v163
    %539 = vmatpush.bf16.msra.mxu0 %v161
    %540 = vmatpush.bf16.msra.mxu0 %v159
    %541 = vmatpush.bf16.msra.mxu0 %v157
    %542 = vmatmul.bf16.gmra.mxu0 %v533
    %v543 = vpop.f32.mrf.mxu0
    %v544 = vadd.f32 0.0, %v543
    %v545 = vpop.f32.mrf.mxu0
    %546 = vdwg.mxu0
    %547 = vmatpush.bf16.msra.mxu0 %v172
    %548 = vmatpush.bf16.msra.mxu0 %v170
    %549 = vmatpush.bf16.msra.mxu0 %v168
    %550 = vmatpush.bf16.msra.mxu0 %v166
    %551 = vmatpush.bf16.msra.mxu0 %v164
    %552 = vmatpush.bf16.msra.mxu0 %v162
    %553 = vmatpush.bf16.msra.mxu0 %v160
    %554 = vmatpush.bf16.msra.mxu0 %v158
    %555 = vmatmul.bf16.gmra.mxu0 %v533
    %v556 = vpop.f32.mrf.mxu0
    %v557 = vadd.f32 0.0, %v556
    %v558 = vpop.f32.mrf.mxu0
    %559 = vdwg.mxu0
    %v560 = vadd.f32 %v544, %v530
    %v561 = vxor.u32 %v560, 2147483648
    %v562 = vmul.f32 %v561, 1.442695
    %v563 = vpow.pop %v562
    %v564 = vadd.f32 %v563, 1.0
    %v565 = vrcp.pop %v564
    %v566 = vmul.f32 %v564, %v565
    %v567 = vsub.f32 1.0, %v566
    %v568 = vmul.f32 %v565, %v567
    %v569 = vadd.f32 %v565, %v568
    %vm570 = vweird.f32 %v564
    %vm571 = vweird.f32 %v565
    %vm572 = vmor %vm570, %vm571
    %v573 = vsel %vm572, %v565, %v569
    %v574 = vand.u32 2147483647, %v564
    %vm575 = vcmp.eq.f32.partialorder %v574, 8.507059e+37
    %v576 = vand.u32 %v564, 2147483648
    %v577 = vor.u32 1.1754944e-38, %v576
    %v578 = vsel %vm575, %v577, %v573
    %v579 = vmul.f32 1.0, %v578
    %v580 = vadd.f32 %v557, %v531
    %v581 = vxor.u32 %v580, 2147483648
    %v582 = vmul.f32 %v581, 1.442695
    %v583 = vpow.pop %v582
    %v584 = vadd.f32 %v583, 1.0
    %v585 = vrcp.pop %v584
    %v586 = vmul.f32 %v584, %v585
    %v587 = vsub.f32 1.0, %v586
    %v588 = vmul.f32 %v585, %v587
    %v589 = vadd.f32 %v585, %v588
    %vm590 = vweird.f32 %v584
    %vm591 = vweird.f32 %v585
    %vm592 = vmor %vm590, %vm591
    %v593 = vsel %vm592, %v585, %v589
    %v594 = vand.u32 2147483647, %v584
    %vm595 = vcmp.eq.f32.partialorder %v594, 8.507059e+37
    %v596 = vand.u32 %v584, 2147483648
    %v597 = vor.u32 1.1754944e-38, %v596
    %v598 = vsel %vm595, %v597, %v593
    %v599 = vmul.f32 1.0, %v598
    %v600 = vmul.f32 %v526, %v579
    %v601 = vpack.c.bf16 %v600, %v600
    %602 = vmatpush.bf16.msra.mxu0 %v296
    %603 = vmatpush.bf16.msra.mxu0 %v295
    %604 = vmatpush.bf16.msra.mxu0 %v294
    %605 = vmatpush.bf16.msra.mxu0 %v293
    %606 = vmatpush.bf16.msra.mxu0 %v292
    %607 = vmatpush.bf16.msra.mxu0 %v291
    %608 = vmatpush.bf16.msra.mxu0 %v290
    %609 = vmatpush.bf16.msra.mxu0 %v289
    %610 = vmatmul.bf16.gmra.mxu0 %v601
    %v611 = vpop.f32.mrf.mxu0
    %v612 = vadd.f32 %v532, %v611
    %v613 = vpop.f32.mrf.mxu0
    %614 = vdwg.mxu0
    %v615 = vtanh.pop %v612
    %v616 = vsub.f32 1.0, %v599
    %v617 = vmul.f32 %v616, %v526
    %v618 = vmul.f32 %v599, %v615
    %v619 = vadd.f32 %v617, %v618
    %s620 = sadd.s32 %s323, 3
    %p621 = scmp.lt.s32.totalorder %s620, %s64
    %s622 = scalar_select %p621, 1, 0
    %v623 = vstv %s622
    %vm624 = vcmp.eq.s32.totalorder %v623, 1
    %v625 = vsel %vm624, %v619, %v526
    %s626 = scalar_lea.vmem [#allocation5], 48
    %v627 = vld [vmem:[%s626] sm:$0xff]
    %v628 = vld [vmem:[%s626 + $0x8] sm:$0xf]
    %v629 = vunpack.c.l.bf16 %v627
    %v630 = vunpack.c.h.bf16 %v627
    %v631 = vunpack.c.l.bf16 %v628
    %v632 = vpack.c.bf16 %v625, %v625
    %633 = vmatpush.bf16.msra.mxu0 %v171
    %634 = vmatpush.bf16.msra.mxu0 %v169
    %635 = vmatpush.bf16.msra.mxu0 %v167
    %636 = vmatpush.bf16.msra.mxu0 %v165
    %637 = vmatpush.bf16.msra.mxu0 %v163
    %638 = vmatpush.bf16.msra.mxu0 %v161
    %639 = vmatpush.bf16.msra.mxu0 %v159
    %640 = vmatpush.bf16.msra.mxu0 %v157
    %641 = vmatmul.bf16.gmra.mxu0 %v632
    %v642 = vpop.f32.mrf.mxu0
    %v643 = vadd.f32 0.0, %v642
    %v644 = vpop.f32.mrf.mxu0
    %645 = vdwg.mxu0
    %646 = vmatpush.bf16.msra.mxu0 %v172
    %647 = vmatpush.bf16.msra.mxu0 %v170
    %648 = vmatpush.bf16.msra.mxu0 %v168
    %649 = vmatpush.bf16.msra.mxu0 %v166
    %650 = vmatpush.bf16.msra.mxu0 %v164
    %651 = vmatpush.bf16.msra.mxu0 %v162
    %652 = vmatpush.bf16.msra.mxu0 %v160
    %653 = vmatpush.bf16.msra.mxu0 %v158
    %654 = vmatmul.bf16.gmra.mxu0 %v632
    %v655 = vpop.f32.mrf.mxu0
    %v656 = vadd.f32 0.0, %v655
    %v657 = vpop.f32.mrf.mxu0
    %658 = vdwg.mxu0
    %v659 = vadd.f32 %v643, %v629
    %v660 = vxor.u32 %v659, 2147483648
    %v661 = vmul.f32 %v660, 1.442695
    %v662 = vpow.pop %v661
    %v663 = vadd.f32 %v662, 1.0
    %v664 = vrcp.pop %v663
    %v665 = vmul.f32 %v663, %v664
    %v666 = vsub.f32 1.0, %v665
    %v667 = vmul.f32 %v664, %v666
    %v668 = vadd.f32 %v664, %v667
    %vm669 = vweird.f32 %v663
    %vm670 = vweird.f32 %v664
    %vm671 = vmor %vm669, %vm670
    %v672 = vsel %vm671, %v664, %v668
    %v673 = vand.u32 2147483647, %v663
    %vm674 = vcmp.eq.f32.partialorder %v673, 8.507059e+37
    %v675 = vand.u32 %v663, 2147483648
    %v676 = vor.u32 1.1754944e-38, %v675
    %v677 = vsel %vm674, %v676, %v672
    %v678 = vmul.f32 1.0, %v677
    %v679 = vadd.f32 %v656, %v630
    %v680 = vxor.u32 %v679, 2147483648
    %v681 = vmul.f32 %v680, 1.442695
    %v682 = vpow.pop %v681
    %v683 = vadd.f32 %v682, 1.0
    %v684 = vrcp.pop %v683
    %v685 = vmul.f32 %v683, %v684
    %v686 = vsub.f32 1.0, %v685
    %v687 = vmul.f32 %v684, %v686
    %v688 = vadd.f32 %v684, %v687
    %vm689 = vweird.f32 %v683
    %vm690 = vweird.f32 %v684
    %vm691 = vmor %vm689, %vm690
    %v692 = vsel %vm691, %v684, %v688
    %v693 = vand.u32 2147483647, %v683
    %vm694 = vcmp.eq.f32.partialorder %v693, 8.507059e+37
    %v695 = vand.u32 %v683, 2147483648
    %v696 = vor.u32 1.1754944e-38, %v695
    %v697 = vsel %vm694, %v696, %v692
    %v698 = vmul.f32 1.0, %v697
    %v699 = vmul.f32 %v625, %v678
    %v700 = vpack.c.bf16 %v699, %v699
    %701 = vmatpush.bf16.msra.mxu0 %v296
    %702 = vmatpush.bf16.msra.mxu0 %v295
    %703 = vmatpush.bf16.msra.mxu0 %v294
    %704 = vmatpush.bf16.msra.mxu0 %v293
    %705 = vmatpush.bf16.msra.mxu0 %v292
    %706 = vmatpush.bf16.msra.mxu0 %v291
    %707 = vmatpush.bf16.msra.mxu0 %v290
    %708 = vmatpush.bf16.msra.mxu0 %v289
    %709 = vmatmul.bf16.gmra.mxu0 %v700
    %v710 = vpop.f32.mrf.mxu0
    %v711 = vadd.f32 %v631, %v710
    %v712 = vpop.f32.mrf.mxu0
    %713 = vdwg.mxu0
    %v714 = vtanh.pop %v711
    %v715 = vsub.f32 1.0, %v698
    %v716 = vmul.f32 %v715, %v625
    %v717 = vmul.f32 %v698, %v714
    %v718 = vadd.f32 %v716, %v717
    %s719 = sadd.s32 %s323, 4
    %p720 = scmp.lt.s32.totalorder %s719, %s64
    %s721 = scalar_select %p720, 1, 0
    %v722 = vstv %s721
    %vm723 = vcmp.eq.s32.totalorder %v722, 1
    %v724 = vsel %vm723, %v718, %v625
    %s725 = scalar_lea.vmem [#allocation5], 60
    %v726 = vld [vmem:[%s725] sm:$0xff]
    %v727 = vld [vmem:[%s725 + $0x8] sm:$0xf]
    %v728 = vunpack.c.l.bf16 %v726
    %v729 = vunpack.c.h.bf16 %v726
    %v730 = vunpack.c.l.bf16 %v727
    %v731 = vpack.c.bf16 %v724, %v724
    %732 = vmatpush.bf16.msra.mxu0 %v171
    %733 = vmatpush.bf16.msra.mxu0 %v169
    %734 = vmatpush.bf16.msra.mxu0 %v167
    %735 = vmatpush.bf16.msra.mxu0 %v165
    %736 = vmatpush.bf16.msra.mxu0 %v163
    %737 = vmatpush.bf16.msra.mxu0 %v161
    %738 = vmatpush.bf16.msra.mxu0 %v159
    %739 = vmatpush.bf16.msra.mxu0 %v157
    %740 = vmatmul.bf16.gmra.mxu0 %v731
    %v741 = vpop.f32.mrf.mxu0
    %v742 = vadd.f32 0.0, %v741
    %v743 = vpop.f32.mrf.mxu0
    %744 = vdwg.mxu0
    %745 = vmatpush.bf16.msra.mxu0 %v172
    %746 = vmatpush.bf16.msra.mxu0 %v170
    %747 = vmatpush.bf16.msra.mxu0 %v168
    %748 = vmatpush.bf16.msra.mxu0 %v166
    %749 = vmatpush.bf16.msra.mxu0 %v164
    %750 = vmatpush.bf16.msra.mxu0 %v162
    %751 = vmatpush.bf16.msra.mxu0 %v160
    %752 = vmatpush.bf16.msra.mxu0 %v158
    %753 = vmatmul.bf16.gmra.mxu0 %v731
    %v754 = vpop.f32.mrf.mxu0
    %v755 = vadd.f32 0.0, %v754
    %v756 = vpop.f32.mrf.mxu0
    %757 = vdwg.mxu0
    %v758 = vadd.f32 %v742, %v728
    %v759 = vxor.u32 %v758, 2147483648
    %v760 = vmul.f32 %v759, 1.442695
    %v761 = vpow.pop %v760
    %v762 = vadd.f32 %v761, 1.0
    %v763 = vrcp.pop %v762
    %v764 = vmul.f32 %v762, %v763
    %v765 = vsub.f32 1.0, %v764
    %v766 = vmul.f32 %v763, %v765
    %v767 = vadd.f32 %v763, %v766
    %vm768 = vweird.f32 %v762
    %vm769 = vweird.f32 %v763
    %vm770 = vmor %vm768, %vm769
    %v771 = vsel %vm770, %v763, %v767
    %v772 = vand.u32 2147483647, %v762
    %vm773 = vcmp.eq.f32.partialorder %v772, 8.507059e+37
    %v774 = vand.u32 %v762, 2147483648
    %v775 = vor.u32 1.1754944e-38, %v774
    %v776 = vsel %vm773, %v775, %v771
    %v777 = vmul.f32 1.0, %v776
    %v778 = vadd.f32 %v755, %v729
    %v779 = vxor.u32 %v778, 2147483648
    %v780 = vmul.f32 %v779, 1.442695
    %v781 = vpow.pop %v780
    %v782 = vadd.f32 %v781, 1.0
    %v783 = vrcp.pop %v782
    %v784 = vmul.f32 %v782, %v783
    %v785 = vsub.f32 1.0, %v784
    %v786 = vmul.f32 %v783, %v785
    %v787 = vadd.f32 %v783, %v786
    %vm788 = vweird.f32 %v782
    %vm789 = vweird.f32 %v783
    %vm790 = vmor %vm788, %vm789
    %v791 = vsel %vm790, %v783, %v787
    %v792 = vand.u32 2147483647, %v782
    %vm793 = vcmp.eq.f32.partialorder %v792, 8.507059e+37
    %v794 = vand.u32 %v782, 2147483648
    %v795 = vor.u32 1.1754944e-38, %v794
    %v796 = vsel %vm793, %v795, %v791
    %v797 = vmul.f32 1.0, %v796
    %v798 = vmul.f32 %v724, %v777
    %v799 = vpack.c.bf16 %v798, %v798
    %800 = vmatpush.bf16.msra.mxu0 %v296
    %801 = vmatpush.bf16.msra.mxu0 %v295
    %802 = vmatpush.bf16.msra.mxu0 %v294
    %803 = vmatpush.bf16.msra.mxu0 %v293
    %804 = vmatpush.bf16.msra.mxu0 %v292
    %805 = vmatpush.bf16.msra.mxu0 %v291
    %806 = vmatpush.bf16.msra.mxu0 %v290
    %807 = vmatpush.bf16.msra.mxu0 %v289
    %808 = vmatmul.bf16.gmra.mxu0 %v799
    %v809 = vpop.f32.mrf.mxu0
    %v810 = vadd.f32 %v730, %v809
    %v811 = vpop.f32.mrf.mxu0
    %812 = vdwg.mxu0
    %v813 = vtanh.pop %v810
    %v814 = vsub.f32 1.0, %v797
    %v815 = vmul.f32 %v814, %v724
    %v816 = vmul.f32 %v797, %v813
    %v817 = vadd.f32 %v815, %v816
    %s818 = sadd.s32 %s323, 5
    %p819 = scmp.lt.s32.totalorder %s818, %s64
    %s820 = scalar_select %p819, 1, 0
    %v821 = vstv %s820
    %vm822 = vcmp.eq.s32.totalorder %v821, 1
    %v823 = vsel %vm822, %v817, %v724
    %s824 = scalar_lea.vmem [#allocation5], 72
    %v825 = vld [vmem:[%s824] sm:$0xff]
    %v826 = vld [vmem:[%s824 + $0x8] sm:$0xf]
    %v827 = vunpack.c.l.bf16 %v825
    %v828 = vunpack.c.h.bf16 %v825
    %v829 = vunpack.c.l.bf16 %v826
    %v830 = vpack.c.bf16 %v823, %v823
    %831 = vmatpush.bf16.msra.mxu0 %v171
    %832 = vmatpush.bf16.msra.mxu0 %v169
    %833 = vmatpush.bf16.msra.mxu0 %v167
    %834 = vmatpush.bf16.msra.mxu0 %v165
    %835 = vmatpush.bf16.msra.mxu0 %v163
    %836 = vmatpush.bf16.msra.mxu0 %v161
    %837 = vmatpush.bf16.msra.mxu0 %v159
    %838 = vmatpush.bf16.msra.mxu0 %v157
    %839 = vmatmul.bf16.gmra.mxu0 %v830
    %v840 = vpop.f32.mrf.mxu0
    %v841 = vadd.f32 0.0, %v840
    %v842 = vpop.f32.mrf.mxu0
    %843 = vdwg.mxu0
    %844 = vmatpush.bf16.msra.mxu0 %v172
    %845 = vmatpush.bf16.msra.mxu0 %v170
    %846 = vmatpush.bf16.msra.mxu0 %v168
    %847 = vmatpush.bf16.msra.mxu0 %v166
    %848 = vmatpush.bf16.msra.mxu0 %v164
    %849 = vmatpush.bf16.msra.mxu0 %v162
    %850 = vmatpush.bf16.msra.mxu0 %v160
    %851 = vmatpush.bf16.msra.mxu0 %v158
    %852 = vmatmul.bf16.gmra.mxu0 %v830
    %v853 = vpop.f32.mrf.mxu0
    %v854 = vadd.f32 0.0, %v853
    %v855 = vpop.f32.mrf.mxu0
    %856 = vdwg.mxu0
    %v857 = vadd.f32 %v841, %v827
    %v858 = vxor.u32 %v857, 2147483648
    %v859 = vmul.f32 %v858, 1.442695
    %v860 = vpow.pop %v859
    %v861 = vadd.f32 %v860, 1.0
    %v862 = vrcp.pop %v861
    %v863 = vmul.f32 %v861, %v862
    %v864 = vsub.f32 1.0, %v863
    %v865 = vmul.f32 %v862, %v864
    %v866 = vadd.f32 %v862, %v865
    %vm867 = vweird.f32 %v861
    %vm868 = vweird.f32 %v862
    %vm869 = vmor %vm867, %vm868
    %v870 = vsel %vm869, %v862, %v866
    %v871 = vand.u32 2147483647, %v861
    %vm872 = vcmp.eq.f32.partialorder %v871, 8.507059e+37
    %v873 = vand.u32 %v861, 2147483648
    %v874 = vor.u32 1.1754944e-38, %v873
    %v875 = vsel %vm872, %v874, %v870
    %v876 = vmul.f32 1.0, %v875
    %v877 = vadd.f32 %v854, %v828
    %v878 = vxor.u32 %v877, 2147483648
    %v879 = vmul.f32 %v878, 1.442695
    %v880 = vpow.pop %v879
    %v881 = vadd.f32 %v880, 1.0
    %v882 = vrcp.pop %v881
    %v883 = vmul.f32 %v881, %v882
    %v884 = vsub.f32 1.0, %v883
    %v885 = vmul.f32 %v882, %v884
    %v886 = vadd.f32 %v882, %v885
    %vm887 = vweird.f32 %v881
    %vm888 = vweird.f32 %v882
    %vm889 = vmor %vm887, %vm888
    %v890 = vsel %vm889, %v882, %v886
    %v891 = vand.u32 2147483647, %v881
    %vm892 = vcmp.eq.f32.partialorder %v891, 8.507059e+37
    %v893 = vand.u32 %v881, 2147483648
    %v894 = vor.u32 1.1754944e-38, %v893
    %v895 = vsel %vm892, %v894, %v890
    %v896 = vmul.f32 1.0, %v895
    %v897 = vmul.f32 %v823, %v876
    %v898 = vpack.c.bf16 %v897, %v897
    %899 = vmatpush.bf16.msra.mxu0 %v296
    %900 = vmatpush.bf16.msra.mxu0 %v295
    %901 = vmatpush.bf16.msra.mxu0 %v294
    %902 = vmatpush.bf16.msra.mxu0 %v293
    %903 = vmatpush.bf16.msra.mxu0 %v292
    %904 = vmatpush.bf16.msra.mxu0 %v291
    %905 = vmatpush.bf16.msra.mxu0 %v290
    %906 = vmatpush.bf16.msra.mxu0 %v289
    %907 = vmatmul.bf16.gmra.mxu0 %v898
    %v908 = vpop.f32.mrf.mxu0
    %v909 = vadd.f32 %v829, %v908
    %v910 = vpop.f32.mrf.mxu0
    %911 = vdwg.mxu0
    %v912 = vtanh.pop %v909
    %v913 = vsub.f32 1.0, %v896
    %v914 = vmul.f32 %v913, %v823
    %v915 = vmul.f32 %v896, %v912
    %v916 = vadd.f32 %v914, %v915
    %s917 = sadd.s32 %s323, 6
    %p918 = scmp.lt.s32.totalorder %s917, %s64
    %s919 = scalar_select %p918, 1, 0
    %v920 = vstv %s919
    %vm921 = vcmp.eq.s32.totalorder %v920, 1
    %v922 = vsel %vm921, %v916, %v823
    %s923 = scalar_lea.vmem [#allocation5], 84
    %v924 = vld [vmem:[%s923] sm:$0xff]
    %v925 = vld [vmem:[%s923 + $0x8] sm:$0xf]
    %v926 = vunpack.c.l.bf16 %v924
    %v927 = vunpack.c.h.bf16 %v924
    %v928 = vunpack.c.l.bf16 %v925
    %v929 = vpack.c.bf16 %v922, %v922
    %930 = vmatpush.bf16.msra.mxu0 %v171
    %931 = vmatpush.bf16.msra.mxu0 %v169
    %932 = vmatpush.bf16.msra.mxu0 %v167
    %933 = vmatpush.bf16.msra.mxu0 %v165
    %934 = vmatpush.bf16.msra.mxu0 %v163
    %935 = vmatpush.bf16.msra.mxu0 %v161
    %936 = vmatpush.bf16.msra.mxu0 %v159
    %937 = vmatpush.bf16.msra.mxu0 %v157
    %938 = vmatmul.bf16.gmra.mxu0 %v929
    %v939 = vpop.f32.mrf.mxu0
    %v940 = vadd.f32 0.0, %v939
    %v941 = vpop.f32.mrf.mxu0
    %942 = vdwg.mxu0
    %943 = vmatpush.bf16.msra.mxu0 %v172
    %944 = vmatpush.bf16.msra.mxu0 %v170
    %945 = vmatpush.bf16.msra.mxu0 %v168
    %946 = vmatpush.bf16.msra.mxu0 %v166
    %947 = vmatpush.bf16.msra.mxu0 %v164
    %948 = vmatpush.bf16.msra.mxu0 %v162
    %949 = vmatpush.bf16.msra.mxu0 %v160
    %950 = vmatpush.bf16.msra.mxu0 %v158
    %951 = vmatmul.bf16.gmra.mxu0 %v929
    %v952 = vpop.f32.mrf.mxu0
    %v953 = vadd.f32 0.0, %v952
    %v954 = vpop.f32.mrf.mxu0
    %955 = vdwg.mxu0
    %v956 = vadd.f32 %v940, %v926
    %v957 = vxor.u32 %v956, 2147483648
    %v958 = vmul.f32 %v957, 1.442695
    %v959 = vpow.pop %v958
    %v960 = vadd.f32 %v959, 1.0
    %v961 = vrcp.pop %v960
    %v962 = vmul.f32 %v960, %v961
    %v963 = vsub.f32 1.0, %v962
    %v964 = vmul.f32 %v961, %v963
    %v965 = vadd.f32 %v961, %v964
    %vm966 = vweird.f32 %v960
    %vm967 = vweird.f32 %v961
    %vm968 = vmor %vm966, %vm967
    %v969 = vsel %vm968, %v961, %v965
    %v970 = vand.u32 2147483647, %v960
    %vm971 = vcmp.eq.f32.partialorder %v970, 8.507059e+37
    %v972 = vand.u32 %v960, 2147483648
    %v973 = vor.u32 1.1754944e-38, %v972
    %v974 = vsel %vm971, %v973, %v969
    %v975 = vmul.f32 1.0, %v974
    %v976 = vadd.f32 %v953, %v927
    %v977 = vxor.u32 %v976, 2147483648
    %v978 = vmul.f32 %v977, 1.442695
    %v979 = vpow.pop %v978
    %v980 = vadd.f32 %v979, 1.0
    %v981 = vrcp.pop %v980
    %v982 = vmul.f32 %v980, %v981
    %v983 = vsub.f32 1.0, %v982
    %v984 = vmul.f32 %v981, %v983
    %v985 = vadd.f32 %v981, %v984
    %vm986 = vweird.f32 %v980
    %vm987 = vweird.f32 %v981
    %vm988 = vmor %vm986, %vm987
    %v989 = vsel %vm988, %v981, %v985
    %v990 = vand.u32 2147483647, %v980
    %vm991 = vcmp.eq.f32.partialorder %v990, 8.507059e+37
    %v992 = vand.u32 %v980, 2147483648
    %v993 = vor.u32 1.1754944e-38, %v992
    %v994 = vsel %vm991, %v993, %v989
    %v995 = vmul.f32 1.0, %v994
    %v996 = vmul.f32 %v922, %v975
    %v997 = vpack.c.bf16 %v996, %v996
    %998 = vmatpush.bf16.msra.mxu0 %v296
    %999 = vmatpush.bf16.msra.mxu0 %v295
    %1000 = vmatpush.bf16.msra.mxu0 %v294
    %1001 = vmatpush.bf16.msra.mxu0 %v293
    %1002 = vmatpush.bf16.msra.mxu0 %v292
    %1003 = vmatpush.bf16.msra.mxu0 %v291
    %1004 = vmatpush.bf16.msra.mxu0 %v290
    %1005 = vmatpush.bf16.msra.mxu0 %v289
    %1006 = vmatmul.bf16.gmra.mxu0 %v997
    %v1007 = vpop.f32.mrf.mxu0
    %v1008 = vadd.f32 %v928, %v1007
    %v1009 = vpop.f32.mrf.mxu0
    %1010 = vdwg.mxu0
    %v1011 = vtanh.pop %v1008
    %v1012 = vsub.f32 1.0, %v995
    %v1013 = vmul.f32 %v1012, %v922
    %v1014 = vmul.f32 %v995, %v1011
    %v1015 = vadd.f32 %v1013, %v1014
    %s1016 = sadd.s32 %s323, 7
    %p1017 = scmp.lt.s32.totalorder %s1016, %s64
    %s1018 = scalar_select %p1017, 1, 0
    %v1019 = vstv %s1018
    %vm1020 = vcmp.eq.s32.totalorder %v1019, 1
    %v1021 = vsel %vm1020, %v1015, %v922
    %1022 = vst [vmem:[#allocation2] sm:$0xff] %v1021
    // Predicated region
    $region30: #{tpu_custom_call.1} parent=1 // pred_check
      %p1023 = pneg %p65
    $region31: #{tpu_custom_call.1} parent=1 // pred_check_branch
      %1025 = sbr.rel (%p1023) target = $region33
    $region32: #{tpu_custom_call.1} parent=1 // pred_region
      %1026 = vst [vmem:[#allocation11] sm:$0xff] %v1021
    $region33: #{tpu_custom_call.1} parent=1 // pred_fallthru
      _
    // Predicated region
    $region34: #{tpu_custom_call.1} parent=1 // pred_check
      _
    $region35: #{tpu_custom_call.1} parent=1 // pred_check_branch
      %1028 = sbr.rel (0) target = $region37
    $region36: #{tpu_custom_call.1} parent=1 // pred_region
      %1030 = vsyncadd [#allocation7], 0
      %s1032 = sshll.u32 [#allocation11], 4
      %s1033 = int_to_ptr.vmem [resolvable:$true] %s1032
      %s1034 = sshll.u32 %s4, 4
      %s1035 = int_to_ptr.hbm [resolvable:$true] %s1034
      %1037 = dma.vmem_to_hbm [thread:$0]  %s1033, 128, %s1035, [#allocation7]
    $region37: #{tpu_custom_call.1} parent=1 // pred_fallthru
      _
    // Predicated region
    $region38: #{tpu_custom_call.1} parent=1 // pred_check
      _
    $region39: #{tpu_custom_call.1} parent=1 // pred_check_branch
      %1039 = sbr.rel (0) target = $region41
    $region40: #{tpu_custom_call.1} parent=1 // pred_region
      %1041 = dma.done [#allocation7], 128
    $region41: #{tpu_custom_call.1} parent=1 // pred_fallthru
      _
    %1042 = vsyncpa [#allocation6], 1
    %1043 = vsyncpa [#allocation9], 1
    %1044 = vsyncpa [#allocation7], 1

// kernel: tpu_custom_call.1
$region0: #{tpu_custom_call.1}
  #allocation0 [shape = 'u32[]', space=smem, size = 0x4, offset = 0x4, fixed_abs, tag = 'smem constant byte address 0x4 - core index']
  #allocation1 [shape = 'u32[72,128]{1,0:T(1,128)}', space=vmem, size = 0x9000, scoped, tag = 'internal scratch']
  #allocation2 [shape = 'f32[8,128]{1,0:T(8,128)}', space=vmem, size = 0x1000, scoped, tag = 'scratch operand']
  #allocation3 [shape = 's32[1]{0}', space=sflag, size = 0x4, scoped, tag = 'scoped memory for tpu_custom_call.1']
  #allocation4 [shape = 's32[1]{0:T(128)S(6)}', space=smem, size = 0x200, scoped, tag = 'prefetched SMEM operand 0']
  %s0 = inlined_call_operand.<no memory space> [shape: s32[1], index: 0, kind: input, shape index: {}]
  %s1 = inlined_call_operand.hbm [shape: bf16[8,8,384], index: 1, kind: input, shape index: {}]
  %s2 = inlined_call_operand.hbm [shape: bf16[128,256], index: 2, kind: input, shape index: {}]
  %s3 = inlined_call_operand.hbm [shape: bf16[128,128], index: 3, kind: input, shape index: {}]
  %s4 = inlined_call_operand.hbm [shape: f32[8,128], index: 4, kind: output, shape index: {}]
  %s5 = sld [smem:[#allocation0]]
  $region42: #{tpu_custom_call.1} parent=0
    _
  %s7 = ssub.s32 1, %s5
  %s8 = scalar_select 0, %s7, %s5
  %9 = sst [smem:[#allocation4]] %s0
  $region1: #{tpu_custom_call.1} parent=0
    #allocation5 [shape = 'u8[49152]{0}', space=vmem, size = 0xc000, scoped, tag = 'input window, operand 1, single buffered']
    #allocation6 [shape = 's32[1]{0}', space=sflag, size = 0x4, scoped, tag = 'scoped memory for tpu_custom_call.1']
    #allocation7 [shape = 's32[1]{0}', space=sflag, size = 0x4, scoped, tag = 'scoped memory for tpu_custom_call.1']
    #allocation8 [shape = 'u8[65536]{0}', space=vmem, size = 0x10000, scoped, tag = 'input window, operand 2, single buffered']
    #allocation9 [shape = 's32[1]{0}', space=sflag, size = 0x4, scoped, tag = 'scoped memory for tpu_custom_call.1']
    #allocation10 [shape = 'u8[32768]{0}', space=vmem, size = 0x8000, scoped, tag = 'input window, operand 3, single buffered']
    #allocation11 [shape = 'u8[4096]{0}', space=vmem, size = 0x1000, scoped, tag = 'output window, operand 0, single buffered']
    %10 = vsyncpa [#allocation6], 0
    %11 = vsyncpa [#allocation9], 0
    %12 = vsyncpa [#allocation7], 0
    // Predicated region
    $region2: #{tpu_custom_call.1} parent=1 // pred_check
      _
    $region3: #{tpu_custom_call.1} parent=1 // pred_check_branch
      %14 = sbr.rel (0) target = $region5
    $region4: #{tpu_custom_call.1} parent=1 // pred_region
      %16 = vsyncadd [#allocation6], 0
      %s17 = sshll.u32 %s1, 4
      %s18 = int_to_ptr.hbm [resolvable:$true] %s17
      %s19 = sshll.u32 [#allocation5], 4
      %s20 = int_to_ptr.vmem [resolvable:$true] %s19
      %25 = dma.hbm_to_vmem [thread:$0]  %s18, 1536, %s20, [#allocation6], 192, 192, 12
    $region5: #{tpu_custom_call.1} parent=1 // pred_fallthru
      _
    // Predicated region
    $region6: #{tpu_custom_call.1} parent=1 // pred_check
      _
    $region7: #{tpu_custom_call.1} parent=1 // pred_check_branch
      %27 = sbr.rel (0) target = $region9
    $region8: #{tpu_custom_call.1} parent=1 // pred_region
      %29 = vsyncadd [#allocation9], 0
      %s30 = sshll.u32 %s2, 4
      %s31 = int_to_ptr.hbm [resolvable:$true] %s30
      %s32 = sshll.u32 [#allocation8], 4
      %s33 = int_to_ptr.vmem [resolvable:$true] %s32
      %38 = dma.hbm_to_vmem [thread:$0]  %s31, 2048, %s33, [#allocation9], 128, 128, 8
    $region9: #{tpu_custom_call.1} parent=1 // pred_fallthru
      _
    // Predicated region
    $region10: #{tpu_custom_call.1} parent=1 // pred_check
      _
    $region11: #{tpu_custom_call.1} parent=1 // pred_check_branch
      %40 = sbr.rel (0) target = $region13
    $region12: #{tpu_custom_call.1} parent=1 // pred_region
      %42 = vsyncadd [#allocation9], 0
      %s43 = sshll.u32 %s3, 4
      %s44 = int_to_ptr.hbm [resolvable:$true] %s43
      %s45 = sshll.u32 [#allocation10], 4
      %s46 = int_to_ptr.vmem [resolvable:$true] %s45
      %51 = dma.hbm_to_vmem [thread:$0]  %s44, 1024, %s46, [#allocation9], 64, 64, 4
    $region13: #{tpu_custom_call.1} parent=1 // pred_fallthru
      _
    // Predicated region
    $region14: #{tpu_custom_call.1} parent=1 // pred_check
      _
    $region15: #{tpu_custom_call.1} parent=1 // pred_check_branch
      %53 = sbr.rel (0) target = $region17
    $region16: #{tpu_custom_call.1} parent=1 // pred_region
      %55 = dma.done [#allocation6], 1536
    $region17: #{tpu_custom_call.1} parent=1 // pred_fallthru
      _
    // Predicated region
    $region18: #{tpu_custom_call.1} parent=1 // pred_check
      _
    $region19: #{tpu_custom_call.1} parent=1 // pred_check_branch
      %57 = sbr.rel (0) target = $region21
    $region20: #{tpu_custom_call.1} parent=1 // pred_region
      %59 = dma.done [#allocation9], 2048
    $region21: #{tpu_custom_call.1} parent=1 // pred_fallthru
      _
    // Predicated region
    $region22: #{tpu_custom_call.1} parent=1 // pred_check
      _
    $region23: #{tpu_custom_call.1} parent=1 // pred_check_branch
      %61 = sbr.rel (0) target = $region25
    $region24: #{tpu_custom_call.1} parent=1 // pred_region
      %63 = dma.done [#allocation9], 1024
    $region25: #{tpu_custom_call.1} parent=1 // pred_fallthru
      _
    %s64 = sld [smem:[#allocation4]]
    %p65 = scmp.eq.s32.totalorder 0, 0
    // Predicated region
    $region26: #{tpu_custom_call.1} parent=1 // pred_check
      %p66 = pneg %p65
    $region27: #{tpu_custom_call.1} parent=1 // pred_check_branch
      %68 = sbr.rel (%p66) target = $region29
    $region28: #{tpu_custom_call.1} parent=1 // pred_region
      %69 = vst [vmem:[#allocation2] sm:$0xff] 0.0
    $region29: #{tpu_custom_call.1} parent=1 // pred_fallthru
      _
    %v70 = vld [vmem:[#allocation8] sm:$0xff]
    %v71 = vld [vmem:[#allocation8 + $0x8] sm:$0xff]
    %v72 = vld [vmem:[#allocation8 + $0x10] sm:$0xff]
    %v73 = vld [vmem:[#allocation8 + $0x18] sm:$0xff]
    %v74 = vld [vmem:[#allocation8 + $0x20] sm:$0xff]
    %v75 = vld [vmem:[#allocation8 + $0x28] sm:$0xff]
    %v76 = vld [vmem:[#allocation8 + $0x30] sm:$0xff]
    %v77 = vld [vmem:[#allocation8 + $0x38] sm:$0xff]
    %v78 = vld [vmem:[#allocation8 + $0x40] sm:$0xff]
    %v79 = vld [vmem:[#allocation8 + $0x48] sm:$0xff]
    %v80 = vld [vmem:[#allocation8 + $0x50] sm:$0xff]
    %v81 = vld [vmem:[#allocation8 + $0x58] sm:$0xff]
    %v82 = vld [vmem:[#allocation8 + $0x60] sm:$0xff]
    %v83 = vld [vmem:[#allocation8 + $0x68] sm:$0xff]
    %v84 = vld [vmem:[#allocation8 + $0x70] sm:$0xff]
    %v85 = vld [vmem:[#allocation8 + $0x78] sm:$0xff]
    %v86 = vld [vmem:[#allocation10] sm:$0xf]
    %v87 = vld [vmem:[#allocation10 + $0x4] sm:$0xf]
    %v88 = vld [vmem:[#allocation10 + $0x8] sm:$0xf]
    %v89 = vld [vmem:[#allocation10 + $0xc] sm:$0xf]
    %v90 = vld [vmem:[#allocation10 + $0x10] sm:$0xf]
    %v91 = vld [vmem:[#allocation10 + $0x14] sm:$0xf]
    %v92 = vld [vmem:[#allocation10 + $0x18] sm:$0xf]
    %v93 = vld [vmem:[#allocation10 + $0x1c] sm:$0xf]
    %v94 = vld [vmem:[#allocation10 + $0x20] sm:$0xf]
    %v95 = vld [vmem:[#allocation10 + $0x24] sm:$0xf]
    %v96 = vld [vmem:[#allocation10 + $0x28] sm:$0xf]
    %v97 = vld [vmem:[#allocation10 + $0x2c] sm:$0xf]
    %v98 = vld [vmem:[#allocation10 + $0x30] sm:$0xf]
    %v99 = vld [vmem:[#allocation10 + $0x34] sm:$0xf]
    %v100 = vld [vmem:[#allocation10 + $0x38] sm:$0xf]
    %v101 = vld [vmem:[#allocation10 + $0x3c] sm:$0xf]
    %v102 = vld [vmem:[#allocation2] sm:$0xff]
    %v103 = vld [vmem:[#allocation5] sm:$0xff]
    %v104 = vld [vmem:[#allocation5 + $0x8] sm:$0xf]
    %v105 = vunpack.c.l.bf16 %v103
    %v106 = vunpack.c.h.bf16 %v103
    %v107 = vunpack.c.l.bf16 %v104
    %v108 = vpack.c.bf16 %v102, %v102
    %v125 = vunpack.c.l.b16 %v70
    %v126 = vunpack.c.h.b16 %v70
    %v127 = vunpack.c.l.b16 %v71
    %v128 = vunpack.c.h.b16 %v71
    %v129 = vunpack.c.l.b16 %v72
    %v130 = vunpack.c.h.b16 %v72
    %v131 = vunpack.c.l.b16 %v73
    %v132 = vunpack.c.h.b16 %v73
    %v133 = vunpack.c.l.b16 %v74
    %v134 = vunpack.c.h.b16 %v74
    %v135 = vunpack.c.l.b16 %v75
    %v136 = vunpack.c.h.b16 %v75
    %v137 = vunpack.c.l.b16 %v76
    %v138 = vunpack.c.h.b16 %v76
    %v139 = vunpack.c.l.b16 %v77
    %v140 = vunpack.c.h.b16 %v77
    %v141 = vunpack.c.l.b16 %v78
    %v142 = vunpack.c.h.b16 %v78
    %v143 = vunpack.c.l.b16 %v79
    %v144 = vunpack.c.h.b16 %v79
    %v145 = vunpack.c.l.b16 %v80
    %v146 = vunpack.c.h.b16 %v80
    %v147 = vunpack.c.l.b16 %v81
    %v148 = vunpack.c.h.b16 %v81
    %v149 = vunpack.c.l.b16 %v82
    %v150 = vunpack.c.h.b16 %v82
    %v151 = vunpack.c.l.b16 %v83
    %v152 = vunpack.c.h.b16 %v83
    %v153 = vunpack.c.l.b16 %v84
    %v154 = vunpack.c.h.b16 %v84
    %v155 = vunpack.c.l.b16 %v85
    %v156 = vunpack.c.h.b16 %v85
    %v157 = vpack.c.b16 %v127, %v125
    %v158 = vpack.c.b16 %v128, %v126
    %v159 = vpack.c.b16 %v131, %v129
    %v160 = vpack.c.b16 %v132, %v130
    %v161 = vpack.c.b16 %v135, %v133
    %v162 = vpack.c.b16 %v136, %v134
    %v163 = vpack.c.b16 %v139, %v137
    %v164 = vpack.c.b16 %v140, %v138
    %v165 = vpack.c.b16 %v143, %v141
    %v166 = vpack.c.b16 %v144, %v142
    %v167 = vpack.c.b16 %v147, %v145
    %v168 = vpack.c.b16 %v148, %v146
    %v169 = vpack.c.b16 %v151, %v149
    %v170 = vpack.c.b16 %v152, %v150
    %v171 = vpack.c.b16 %v155, %v153
    %v172 = vpack.c.b16 %v156, %v154
    %189 = vmatpush.bf16.msra.mxu0 %v171
    %190 = vmatpush.bf16.msra.mxu0 %v169
    %191 = vmatpush.bf16.msra.mxu0 %v167
    %192 = vmatpush.bf16.msra.mxu0 %v165
    %193 = vmatpush.bf16.msra.mxu0 %v163
    %194 = vmatpush.bf16.msra.mxu0 %v161
    %195 = vmatpush.bf16.msra.mxu0 %v159
    %196 = vmatpush.bf16.msra.mxu0 %v157
    %197 = vmatmul.bf16.gmra.mxu0 %v108
    %v198 = vpop.f32.mrf.mxu0
    %v199 = vadd.f32 0.0, %v198
    %v200 = vpop.f32.mrf.mxu0
    %201 = vdwg.mxu0
    %202 = vmatpush.bf16.msra.mxu0 %v172
    %203 = vmatpush.bf16.msra.mxu0 %v170
    %204 = vmatpush.bf16.msra.mxu0 %v168
    %205 = vmatpush.bf16.msra.mxu0 %v166
    %206 = vmatpush.bf16.msra.mxu0 %v164
    %207 = vmatpush.bf16.msra.mxu0 %v162
    %208 = vmatpush.bf16.msra.mxu0 %v160
    %209 = vmatpush.bf16.msra.mxu0 %v158
    %210 = vmatmul.bf16.gmra.mxu0 %v108
    %v211 = vpop.f32.mrf.mxu0
    %v212 = vadd.f32 0.0, %v211
    %v213 = vpop.f32.mrf.mxu0
    %214 = vdwg.mxu0
    %v215 = vadd.f32 %v199, %v105
    %v216 = vxor.u32 %v215, 2147483648
    %v217 = vmul.f32 %v216, 1.442695
    %v218 = vpow.pop %v217
    %v219 = vadd.f32 %v218, 1.0
    %v220 = vrcp.pop %v219
    %v221 = vmul.f32 %v219, %v220
    %v222 = vsub.f32 1.0, %v221
    %v223 = vmul.f32 %v220, %v222
    %v224 = vadd.f32 %v220, %v223
    %vm225 = vweird.f32 %v219
    %vm226 = vweird.f32 %v220
    %vm227 = vmor %vm225, %vm226
    %v228 = vsel %vm227, %v220, %v224
    %v229 = vand.u32 2147483647, %v219
    %vm230 = vcmp.eq.f32.partialorder %v229, 8.507059e+37
    %v231 = vand.u32 %v219, 2147483648
    %v232 = vor.u32 1.1754944e-38, %v231
    %v233 = vsel %vm230, %v232, %v228
    %v234 = vmul.f32 1.0, %v233
    %v235 = vadd.f32 %v212, %v106
    %v236 = vxor.u32 %v235, 2147483648
    %v237 = vmul.f32 %v236, 1.442695
    %v238 = vpow.pop %v237
    %v239 = vadd.f32 %v238, 1.0
    %v240 = vrcp.pop %v239
    %v241 = vmul.f32 %v239, %v240
    %v242 = vsub.f32 1.0, %v241
    %v243 = vmul.f32 %v240, %v242
    %v244 = vadd.f32 %v240, %v243
    %vm245 = vweird.f32 %v239
    %vm246 = vweird.f32 %v240
    %vm247 = vmor %vm245, %vm246
    %v248 = vsel %vm247, %v240, %v244
    %v249 = vand.u32 2147483647, %v239
    %vm250 = vcmp.eq.f32.partialorder %v249, 8.507059e+37
    %v251 = vand.u32 %v239, 2147483648
    %v252 = vor.u32 1.1754944e-38, %v251
    %v253 = vsel %vm250, %v252, %v248
    %v254 = vmul.f32 1.0, %v253
    %v255 = vmul.f32 %v102, %v234
    %v256 = vpack.c.bf16 %v255, %v255
    %v273 = vunpack.c.l.b16 %v86
    %v274 = vunpack.c.l.b16 %v87
    %v275 = vunpack.c.l.b16 %v88
    %v276 = vunpack.c.l.b16 %v89
    %v277 = vunpack.c.l.b16 %v90
    %v278 = vunpack.c.l.b16 %v91
    %v279 = vunpack.c.l.b16 %v92
    %v280 = vunpack.c.l.b16 %v93
    %v281 = vunpack.c.l.b16 %v94
    %v282 = vunpack.c.l.b16 %v95
    %v283 = vunpack.c.l.b16 %v96
    %v284 = vunpack.c.l.b16 %v97
    %v285 = vunpack.c.l.b16 %v98
    %v286 = vunpack.c.l.b16 %v99
    %v287 = vunpack.c.l.b16 %v100
    %v288 = vunpack.c.l.b16 %v101
    %v289 = vpack.c.b16 %v274, %v273
    %v290 = vpack.c.b16 %v276, %v275
    %v291 = vpack.c.b16 %v278, %v277
    %v292 = vpack.c.b16 %v280, %v279
    %v293 = vpack.c.b16 %v282, %v281
    %v294 = vpack.c.b16 %v284, %v283
    %v295 = vpack.c.b16 %v286, %v285
    %v296 = vpack.c.b16 %v288, %v287
    %305 = vmatpush.bf16.msra.mxu0 %v296
    %306 = vmatpush.bf16.msra.mxu0 %v295
    %307 = vmatpush.bf16.msra.mxu0 %v294
    %308 = vmatpush.bf16.msra.mxu0 %v293
    %309 = vmatpush.bf16.msra.mxu0 %v292
    %310 = vmatpush.bf16.msra.mxu0 %v291
    %311 = vmatpush.bf16.msra.mxu0 %v290
    %312 = vmatpush.bf16.msra.mxu0 %v289
    %313 = vmatmul.bf16.gmra.mxu0 %v256
    %v314 = vpop.f32.mrf.mxu0
    %v315 = vadd.f32 %v107, %v314
    %v316 = vpop.f32.mrf.mxu0
    %317 = vdwg.mxu0
    %v318 = vtanh.pop %v315
    %v319 = vsub.f32 1.0, %v254
    %v320 = vmul.f32 %v319, %v102
    %v321 = vmul.f32 %v254, %v318
    %v322 = vadd.f32 %v320, %v321
    %s323 = smul.u32 0, 8
    %p324 = scmp.lt.s32.totalorder %s323, %s64
    %s325 = scalar_select %p324, 1, 0
    %v326 = vstv %s325
    %vm327 = vcmp.eq.s32.totalorder %v326, 1
    %v328 = vsel %vm327, %v322, %v102
    %s329 = scalar_lea.vmem [#allocation5], 12
    %v330 = vld [vmem:[%s329] sm:$0xff]
    %v331 = vld [vmem:[%s329 + $0x8] sm:$0xf]
    %v332 = vunpack.c.l.bf16 %v330
    %v333 = vunpack.c.h.bf16 %v330
    %v334 = vunpack.c.l.bf16 %v331
    %v335 = vpack.c.bf16 %v328, %v328
    %336 = vmatpush.bf16.msra.mxu0 %v171
    %337 = vmatpush.bf16.msra.mxu0 %v169
    %338 = vmatpush.bf16.msra.mxu0 %v167
    %339 = vmatpush.bf16.msra.mxu0 %v165
    %340 = vmatpush.bf16.msra.mxu0 %v163
    %341 = vmatpush.bf16.msra.mxu0 %v161
    %342 = vmatpush.bf16.msra.mxu0 %v159
    %343 = vmatpush.bf16.msra.mxu0 %v157
    %344 = vmatmul.bf16.gmra.mxu0 %v335
    %v345 = vpop.f32.mrf.mxu0
    %v346 = vadd.f32 0.0, %v345
    %v347 = vpop.f32.mrf.mxu0
    %348 = vdwg.mxu0
    %349 = vmatpush.bf16.msra.mxu0 %v172
    %350 = vmatpush.bf16.msra.mxu0 %v170
    %351 = vmatpush.bf16.msra.mxu0 %v168
    %352 = vmatpush.bf16.msra.mxu0 %v166
    %353 = vmatpush.bf16.msra.mxu0 %v164
    %354 = vmatpush.bf16.msra.mxu0 %v162
    %355 = vmatpush.bf16.msra.mxu0 %v160
    %356 = vmatpush.bf16.msra.mxu0 %v158
    %357 = vmatmul.bf16.gmra.mxu0 %v335
    %v358 = vpop.f32.mrf.mxu0
    %v359 = vadd.f32 0.0, %v358
    %v360 = vpop.f32.mrf.mxu0
    %361 = vdwg.mxu0
    %v362 = vadd.f32 %v346, %v332
    %v363 = vxor.u32 %v362, 2147483648
    %v364 = vmul.f32 %v363, 1.442695
    %v365 = vpow.pop %v364
    %v366 = vadd.f32 %v365, 1.0
    %v367 = vrcp.pop %v366
    %v368 = vmul.f32 %v366, %v367
    %v369 = vsub.f32 1.0, %v368
    %v370 = vmul.f32 %v367, %v369
    %v371 = vadd.f32 %v367, %v370
    %vm372 = vweird.f32 %v366
    %vm373 = vweird.f32 %v367
    %vm374 = vmor %vm372, %vm373
    %v375 = vsel %vm374, %v367, %v371
    %v376 = vand.u32 2147483647, %v366
    %vm377 = vcmp.eq.f32.partialorder %v376, 8.507059e+37
    %v378 = vand.u32 %v366, 2147483648
    %v379 = vor.u32 1.1754944e-38, %v378
    %v380 = vsel %vm377, %v379, %v375
    %v381 = vmul.f32 1.0, %v380
    %v382 = vadd.f32 %v359, %v333
    %v383 = vxor.u32 %v382, 2147483648
    %v384 = vmul.f32 %v383, 1.442695
    %v385 = vpow.pop %v384
    %v386 = vadd.f32 %v385, 1.0
    %v387 = vrcp.pop %v386
    %v388 = vmul.f32 %v386, %v387
    %v389 = vsub.f32 1.0, %v388
    %v390 = vmul.f32 %v387, %v389
    %v391 = vadd.f32 %v387, %v390
    %vm392 = vweird.f32 %v386
    %vm393 = vweird.f32 %v387
    %vm394 = vmor %vm392, %vm393
    %v395 = vsel %vm394, %v387, %v391
    %v396 = vand.u32 2147483647, %v386
    %vm397 = vcmp.eq.f32.partialorder %v396, 8.507059e+37
    %v398 = vand.u32 %v386, 2147483648
    %v399 = vor.u32 1.1754944e-38, %v398
    %v400 = vsel %vm397, %v399, %v395
    %v401 = vmul.f32 1.0, %v400
    %v402 = vmul.f32 %v328, %v381
    %v403 = vpack.c.bf16 %v402, %v402
    %404 = vmatpush.bf16.msra.mxu0 %v296
    %405 = vmatpush.bf16.msra.mxu0 %v295
    %406 = vmatpush.bf16.msra.mxu0 %v294
    %407 = vmatpush.bf16.msra.mxu0 %v293
    %408 = vmatpush.bf16.msra.mxu0 %v292
    %409 = vmatpush.bf16.msra.mxu0 %v291
    %410 = vmatpush.bf16.msra.mxu0 %v290
    %411 = vmatpush.bf16.msra.mxu0 %v289
    %412 = vmatmul.bf16.gmra.mxu0 %v403
    %v413 = vpop.f32.mrf.mxu0
    %v414 = vadd.f32 %v334, %v413
    %v415 = vpop.f32.mrf.mxu0
    %416 = vdwg.mxu0
    %v417 = vtanh.pop %v414
    %v418 = vsub.f32 1.0, %v401
    %v419 = vmul.f32 %v418, %v328
    %v420 = vmul.f32 %v401, %v417
    %v421 = vadd.f32 %v419, %v420
    %s422 = sadd.s32 %s323, 1
    %p423 = scmp.lt.s32.totalorder %s422, %s64
    %s424 = scalar_select %p423, 1, 0
    %v425 = vstv %s424
    %vm426 = vcmp.eq.s32.totalorder %v425, 1
    %v427 = vsel %vm426, %v421, %v328
    %s428 = scalar_lea.vmem [#allocation5], 24
    %v429 = vld [vmem:[%s428] sm:$0xff]
    %v430 = vld [vmem:[%s428 + $0x8] sm:$0xf]
    %v431 = vunpack.c.l.bf16 %v429
    %v432 = vunpack.c.h.bf16 %v429
    %v433 = vunpack.c.l.bf16 %v430
    %v434 = vpack.c.bf16 %v427, %v427
    %435 = vmatpush.bf16.msra.mxu0 %v171
    %436 = vmatpush.bf16.msra.mxu0 %v169
    %437 = vmatpush.bf16.msra.mxu0 %v167
    %438 = vmatpush.bf16.msra.mxu0 %v165
    %439 = vmatpush.bf16.msra.mxu0 %v163
    %440 = vmatpush.bf16.msra.mxu0 %v161
    %441 = vmatpush.bf16.msra.mxu0 %v159
    %442 = vmatpush.bf16.msra.mxu0 %v157
    %443 = vmatmul.bf16.gmra.mxu0 %v434
    %v444 = vpop.f32.mrf.mxu0
    %v445 = vadd.f32 0.0, %v444
    %v446 = vpop.f32.mrf.mxu0
    %447 = vdwg.mxu0
    %448 = vmatpush.bf16.msra.mxu0 %v172
    %449 = vmatpush.bf16.msra.mxu0 %v170
    %450 = vmatpush.bf16.msra.mxu0 %v168
    %451 = vmatpush.bf16.msra.mxu0 %v166
    %452 = vmatpush.bf16.msra.mxu0 %v164
    %453 = vmatpush.bf16.msra.mxu0 %v162
    %454 = vmatpush.bf16.msra.mxu0 %v160
    %455 = vmatpush.bf16.msra.mxu0 %v158
    %456 = vmatmul.bf16.gmra.mxu0 %v434
    %v457 = vpop.f32.mrf.mxu0
    %v458 = vadd.f32 0.0, %v457
    %v459 = vpop.f32.mrf.mxu0
    %460 = vdwg.mxu0
    %v461 = vadd.f32 %v445, %v431
    %v462 = vxor.u32 %v461, 2147483648
    %v463 = vmul.f32 %v462, 1.442695
    %v464 = vpow.pop %v463
    %v465 = vadd.f32 %v464, 1.0
    %v466 = vrcp.pop %v465
    %v467 = vmul.f32 %v465, %v466
    %v468 = vsub.f32 1.0, %v467
    %v469 = vmul.f32 %v466, %v468
    %v470 = vadd.f32 %v466, %v469
    %vm471 = vweird.f32 %v465
    %vm472 = vweird.f32 %v466
    %vm473 = vmor %vm471, %vm472
    %v474 = vsel %vm473, %v466, %v470
    %v475 = vand.u32 2147483647, %v465
    %vm476 = vcmp.eq.f32.partialorder %v475, 8.507059e+37
    %v477 = vand.u32 %v465, 2147483648
    %v478 = vor.u32 1.1754944e-38, %v477
    %v479 = vsel %vm476, %v478, %v474
    %v480 = vmul.f32 1.0, %v479
    %v481 = vadd.f32 %v458, %v432
    %v482 = vxor.u32 %v481, 2147483648
    %v483 = vmul.f32 %v482, 1.442695
    %v484 = vpow.pop %v483
    %v485 = vadd.f32 %v484, 1.0
    %v486 = vrcp.pop %v485
    %v487 = vmul.f32 %v485, %v486
    %v488 = vsub.f32 1.0, %v487
    %v489 = vmul.f32 %v486, %v488
    %v490 = vadd.f32 %v486, %v489
    %vm491 = vweird.f32 %v485
    %vm492 = vweird.f32 %v486
    %vm493 = vmor %vm491, %vm492
    %v494 = vsel %vm493, %v486, %v490
    %v495 = vand.u32 2147483647, %v485
    %vm496 = vcmp.eq.f32.partialorder %v495, 8.507059e+37
    %v497 = vand.u32 %v485, 2147483648
    %v498 = vor.u32 1.1754944e-38, %v497
    %v499 = vsel %vm496, %v498, %v494
    %v500 = vmul.f32 1.0, %v499
    %v501 = vmul.f32 %v427, %v480
    %v502 = vpack.c.bf16 %v501, %v501
    %503 = vmatpush.bf16.msra.mxu0 %v296
    %504 = vmatpush.bf16.msra.mxu0 %v295
    %505 = vmatpush.bf16.msra.mxu0 %v294
    %506 = vmatpush.bf16.msra.mxu0 %v293
    %507 = vmatpush.bf16.msra.mxu0 %v292
    %508 = vmatpush.bf16.msra.mxu0 %v291
    %509 = vmatpush.bf16.msra.mxu0 %v290
    %510 = vmatpush.bf16.msra.mxu0 %v289
    %511 = vmatmul.bf16.gmra.mxu0 %v502
    %v512 = vpop.f32.mrf.mxu0
    %v513 = vadd.f32 %v433, %v512
    %v514 = vpop.f32.mrf.mxu0
    %515 = vdwg.mxu0
    %v516 = vtanh.pop %v513
    %v517 = vsub.f32 1.0, %v500
    %v518 = vmul.f32 %v517, %v427
    %v519 = vmul.f32 %v500, %v516
    %v520 = vadd.f32 %v518, %v519
    %s521 = sadd.s32 %s323, 2
    %p522 = scmp.lt.s32.totalorder %s521, %s64
    %s523 = scalar_select %p522, 1, 0
    %v524 = vstv %s523
    %vm525 = vcmp.eq.s32.totalorder %v524, 1
    %v526 = vsel %vm525, %v520, %v427
    %s527 = scalar_lea.vmem [#allocation5], 36
    %v528 = vld [vmem:[%s527] sm:$0xff]
    %v529 = vld [vmem:[%s527 + $0x8] sm:$0xf]
    %v530 = vunpack.c.l.bf16 %v528
    %v531 = vunpack.c.h.bf16 %v528
    %v532 = vunpack.c.l.bf16 %v529
    %v533 = vpack.c.bf16 %v526, %v526
    %534 = vmatpush.bf16.msra.mxu0 %v171
    %535 = vmatpush.bf16.msra.mxu0 %v169
    %536 = vmatpush.bf16.msra.mxu0 %v167
    %537 = vmatpush.bf16.msra.mxu0 %v165
    %538 = vmatpush.bf16.msra.mxu0 %v163
    %539 = vmatpush.bf16.msra.mxu0 %v161
    %540 = vmatpush.bf16.msra.mxu0 %v159
    %541 = vmatpush.bf16.msra.mxu0 %v157
    %542 = vmatmul.bf16.gmra.mxu0 %v533
    %v543 = vpop.f32.mrf.mxu0
    %v544 = vadd.f32 0.0, %v543
    %v545 = vpop.f32.mrf.mxu0
    %546 = vdwg.mxu0
    %547 = vmatpush.bf16.msra.mxu0 %v172
    %548 = vmatpush.bf16.msra.mxu0 %v170
    %549 = vmatpush.bf16.msra.mxu0 %v168
    %550 = vmatpush.bf16.msra.mxu0 %v166
    %551 = vmatpush.bf16.msra.mxu0 %v164
    %552 = vmatpush.bf16.msra.mxu0 %v162
    %553 = vmatpush.bf16.msra.mxu0 %v160
    %554 = vmatpush.bf16.msra.mxu0 %v158
    %555 = vmatmul.bf16.gmra.mxu0 %v533
    %v556 = vpop.f32.mrf.mxu0
    %v557 = vadd.f32 0.0, %v556
    %v558 = vpop.f32.mrf.mxu0
    %559 = vdwg.mxu0
    %v560 = vadd.f32 %v544, %v530
    %v561 = vxor.u32 %v560, 2147483648
    %v562 = vmul.f32 %v561, 1.442695
    %v563 = vpow.pop %v562
    %v564 = vadd.f32 %v563, 1.0
    %v565 = vrcp.pop %v564
    %v566 = vmul.f32 %v564, %v565
    %v567 = vsub.f32 1.0, %v566
    %v568 = vmul.f32 %v565, %v567
    %v569 = vadd.f32 %v565, %v568
    %vm570 = vweird.f32 %v564
    %vm571 = vweird.f32 %v565
    %vm572 = vmor %vm570, %vm571
    %v573 = vsel %vm572, %v565, %v569
    %v574 = vand.u32 2147483647, %v564
    %vm575 = vcmp.eq.f32.partialorder %v574, 8.507059e+37
    %v576 = vand.u32 %v564, 2147483648
    %v577 = vor.u32 1.1754944e-38, %v576
    %v578 = vsel %vm575, %v577, %v573
    %v579 = vmul.f32 1.0, %v578
    %v580 = vadd.f32 %v557, %v531
    %v581 = vxor.u32 %v580, 2147483648
    %v582 = vmul.f32 %v581, 1.442695
    %v583 = vpow.pop %v582
    %v584 = vadd.f32 %v583, 1.0
    %v585 = vrcp.pop %v584
    %v586 = vmul.f32 %v584, %v585
    %v587 = vsub.f32 1.0, %v586
    %v588 = vmul.f32 %v585, %v587
    %v589 = vadd.f32 %v585, %v588
    %vm590 = vweird.f32 %v584
    %vm591 = vweird.f32 %v585
    %vm592 = vmor %vm590, %vm591
    %v593 = vsel %vm592, %v585, %v589
    %v594 = vand.u32 2147483647, %v584
    %vm595 = vcmp.eq.f32.partialorder %v594, 8.507059e+37
    %v596 = vand.u32 %v584, 2147483648
    %v597 = vor.u32 1.1754944e-38, %v596
    %v598 = vsel %vm595, %v597, %v593
    %v599 = vmul.f32 1.0, %v598
    %v600 = vmul.f32 %v526, %v579
    %v601 = vpack.c.bf16 %v600, %v600
    %602 = vmatpush.bf16.msra.mxu0 %v296
    %603 = vmatpush.bf16.msra.mxu0 %v295
    %604 = vmatpush.bf16.msra.mxu0 %v294
    %605 = vmatpush.bf16.msra.mxu0 %v293
    %606 = vmatpush.bf16.msra.mxu0 %v292
    %607 = vmatpush.bf16.msra.mxu0 %v291
    %608 = vmatpush.bf16.msra.mxu0 %v290
    %609 = vmatpush.bf16.msra.mxu0 %v289
    %610 = vmatmul.bf16.gmra.mxu0 %v601
    %v611 = vpop.f32.mrf.mxu0
    %v612 = vadd.f32 %v532, %v611
    %v613 = vpop.f32.mrf.mxu0
    %614 = vdwg.mxu0
    %v615 = vtanh.pop %v612
    %v616 = vsub.f32 1.0, %v599
    %v617 = vmul.f32 %v616, %v526
    %v618 = vmul.f32 %v599, %v615
    %v619 = vadd.f32 %v617, %v618
    %s620 = sadd.s32 %s323, 3
    %p621 = scmp.lt.s32.totalorder %s620, %s64
    %s622 = scalar_select %p621, 1, 0
    %v623 = vstv %s622
    %vm624 = vcmp.eq.s32.totalorder %v623, 1
    %v625 = vsel %vm624, %v619, %v526
    %s626 = scalar_lea.vmem [#allocation5], 48
    %v627 = vld [vmem:[%s626] sm:$0xff]
    %v628 = vld [vmem:[%s626 + $0x8] sm:$0xf]
    %v629 = vunpack.c.l.bf16 %v627
    %v630 = vunpack.c.h.bf16 %v627
    %v631 = vunpack.c.l.bf16 %v628
    %v632 = vpack.c.bf16 %v625, %v625
    %633 = vmatpush.bf16.msra.mxu0 %v171
    %634 = vmatpush.bf16.msra.mxu0 %v169
    %635 = vmatpush.bf16.msra.mxu0 %v167
    %636 = vmatpush.bf16.msra.mxu0 %v165
    %637 = vmatpush.bf16.msra.mxu0 %v163
    %638 = vmatpush.bf16.msra.mxu0 %v161
    %639 = vmatpush.bf16.msra.mxu0 %v159
    %640 = vmatpush.bf16.msra.mxu0 %v157
    %641 = vmatmul.bf16.gmra.mxu0 %v632
    %v642 = vpop.f32.mrf.mxu0
    %v643 = vadd.f32 0.0, %v642
    %v644 = vpop.f32.mrf.mxu0
    %645 = vdwg.mxu0
    %646 = vmatpush.bf16.msra.mxu0 %v172
    %647 = vmatpush.bf16.msra.mxu0 %v170
    %648 = vmatpush.bf16.msra.mxu0 %v168
    %649 = vmatpush.bf16.msra.mxu0 %v166
    %650 = vmatpush.bf16.msra.mxu0 %v164
    %651 = vmatpush.bf16.msra.mxu0 %v162
    %652 = vmatpush.bf16.msra.mxu0 %v160
    %653 = vmatpush.bf16.msra.mxu0 %v158
    %654 = vmatmul.bf16.gmra.mxu0 %v632
    %v655 = vpop.f32.mrf.mxu0
    %v656 = vadd.f32 0.0, %v655
    %v657 = vpop.f32.mrf.mxu0
    %658 = vdwg.mxu0
    %v659 = vadd.f32 %v643, %v629
    %v660 = vxor.u32 %v659, 2147483648
    %v661 = vmul.f32 %v660, 1.442695
    %v662 = vpow.pop %v661
    %v663 = vadd.f32 %v662, 1.0
    %v664 = vrcp.pop %v663
    %v665 = vmul.f32 %v663, %v664
    %v666 = vsub.f32 1.0, %v665
    %v667 = vmul.f32 %v664, %v666
    %v668 = vadd.f32 %v664, %v667
    %vm669 = vweird.f32 %v663
    %vm670 = vweird.f32 %v664
    %vm671 = vmor %vm669, %vm670
    %v672 = vsel %vm671, %v664, %v668
    %v673 = vand.u32 2147483647, %v663
    %vm674 = vcmp.eq.f32.partialorder %v673, 8.507059e+37
    %v675 = vand.u32 %v663, 2147483648
    %v676 = vor.u32 1.1754944e-38, %v675
    %v677 = vsel %vm674, %v676, %v672
    %v678 = vmul.f32 1.0, %v677
    %v679 = vadd.f32 %v656, %v630
    %v680 = vxor.u32 %v679, 2147483648
    %v681 = vmul.f32 %v680, 1.442695
    %v682 = vpow.pop %v681
    %v683 = vadd.f32 %v682, 1.0
    %v684 = vrcp.pop %v683
    %v685 = vmul.f32 %v683, %v684
    %v686 = vsub.f32 1.0, %v685
    %v687 = vmul.f32 %v684, %v686
    %v688 = vadd.f32 %v684, %v687
    %vm689 = vweird.f32 %v683
    %vm690 = vweird.f32 %v684
    %vm691 = vmor %vm689, %vm690
    %v692 = vsel %vm691, %v684, %v688
    %v693 = vand.u32 2147483647, %v683
    %vm694 = vcmp.eq.f32.partialorder %v693, 8.507059e+37
    %v695 = vand.u32 %v683, 2147483648
    %v696 = vor.u32 1.1754944e-38, %v695
    %v697 = vsel %vm694, %v696, %v692
    %v698 = vmul.f32 1.0, %v697
    %v699 = vmul.f32 %v625, %v678
    %v700 = vpack.c.bf16 %v699, %v699
    %701 = vmatpush.bf16.msra.mxu0 %v296
    %702 = vmatpush.bf16.msra.mxu0 %v295
    %703 = vmatpush.bf16.msra.mxu0 %v294
    %704 = vmatpush.bf16.msra.mxu0 %v293
    %705 = vmatpush.bf16.msra.mxu0 %v292
    %706 = vmatpush.bf16.msra.mxu0 %v291
    %707 = vmatpush.bf16.msra.mxu0 %v290
    %708 = vmatpush.bf16.msra.mxu0 %v289
    %709 = vmatmul.bf16.gmra.mxu0 %v700
    %v710 = vpop.f32.mrf.mxu0
    %v711 = vadd.f32 %v631, %v710
    %v712 = vpop.f32.mrf.mxu0
    %713 = vdwg.mxu0
    %v714 = vtanh.pop %v711
    %v715 = vsub.f32 1.0, %v698
    %v716 = vmul.f32 %v715, %v625
    %v717 = vmul.f32 %v698, %v714
    %v718 = vadd.f32 %v716, %v717
    %s719 = sadd.s32 %s323, 4
    %p720 = scmp.lt.s32.totalorder %s719, %s64
    %s721 = scalar_select %p720, 1, 0
    %v722 = vstv %s721
    %vm723 = vcmp.eq.s32.totalorder %v722, 1
    %v724 = vsel %vm723, %v718, %v625
    %s725 = scalar_lea.vmem [#allocation5], 60
    %v726 = vld [vmem:[%s725] sm:$0xff]
    %v727 = vld [vmem:[%s725 + $0x8] sm:$0xf]
    %v728 = vunpack.c.l.bf16 %v726
    %v729 = vunpack.c.h.bf16 %v726
    %v730 = vunpack.c.l.bf16 %v727
    %v731 = vpack.c.bf16 %v724, %v724
    %732 = vmatpush.bf16.msra.mxu0 %v171
    %733 = vmatpush.bf16.msra.mxu0 %v169
    %734 = vmatpush.bf16.msra.mxu0 %v167
    %735 = vmatpush.bf16.msra.mxu0 %v165
    %736 = vmatpush.bf16.msra.mxu0 %v163
    %737 = vmatpush.bf16.msra.mxu0 %v161
    %738 = vmatpush.bf16.msra.mxu0 %v159
    %739 = vmatpush.bf16.msra.mxu0 %v157
    %740 = vmatmul.bf16.gmra.mxu0 %v731
    %v741 = vpop.f32.mrf.mxu0
    %v742 = vadd.f32 0.0, %v741
    %v743 = vpop.f32.mrf.mxu0
    %744 = vdwg.mxu0
    %745 = vmatpush.bf16.msra.mxu0 %v172
    %746 = vmatpush.bf16.msra.mxu0 %v170
    %747 = vmatpush.bf16.msra.mxu0 %v168
    %748 = vmatpush.bf16.msra.mxu0 %v166
    %749 = vmatpush.bf16.msra.mxu0 %v164
    %750 = vmatpush.bf16.msra.mxu0 %v162
    %751 = vmatpush.bf16.msra.mxu0 %v160
    %752 = vmatpush.bf16.msra.mxu0 %v158
    %753 = vmatmul.bf16.gmra.mxu0 %v731
    %v754 = vpop.f32.mrf.mxu0
    %v755 = vadd.f32 0.0, %v754
    %v756 = vpop.f32.mrf.mxu0
    %757 = vdwg.mxu0
    %v758 = vadd.f32 %v742, %v728
    %v759 = vxor.u32 %v758, 2147483648
    %v760 = vmul.f32 %v759, 1.442695
    %v761 = vpow.pop %v760
    %v762 = vadd.f32 %v761, 1.0
    %v763 = vrcp.pop %v762
    %v764 = vmul.f32 %v762, %v763
    %v765 = vsub.f32 1.0, %v764
    %v766 = vmul.f32 %v763, %v765
    %v767 = vadd.f32 %v763, %v766
    %vm768 = vweird.f32 %v762
    %vm769 = vweird.f32 %v763
    %vm770 = vmor %vm768, %vm769
    %v771 = vsel %vm770, %v763, %v767
    %v772 = vand.u32 2147483647, %v762
    %vm773 = vcmp.eq.f32.partialorder %v772, 8.507059e+37
    %v774 = vand.u32 %v762, 2147483648
    %v775 = vor.u32 1.1754944e-38, %v774
    %v776 = vsel %vm773, %v775, %v771
    %v777 = vmul.f32 1.0, %v776
    %v778 = vadd.f32 %v755, %v729
    %v779 = vxor.u32 %v778, 2147483648
    %v780 = vmul.f32 %v779, 1.442695
    %v781 = vpow.pop %v780
    %v782 = vadd.f32 %v781, 1.0
    %v783 = vrcp.pop %v782
    %v784 = vmul.f32 %v782, %v783
    %v785 = vsub.f32 1.0, %v784
    %v786 = vmul.f32 %v783, %v785
    %v787 = vadd.f32 %v783, %v786
    %vm788 = vweird.f32 %v782
    %vm789 = vweird.f32 %v783
    %vm790 = vmor %vm788, %vm789
    %v791 = vsel %vm790, %v783, %v787
    %v792 = vand.u32 2147483647, %v782
    %vm793 = vcmp.eq.f32.partialorder %v792, 8.507059e+37
    %v794 = vand.u32 %v782, 2147483648
    %v795 = vor.u32 1.1754944e-38, %v794
    %v796 = vsel %vm793, %v795, %v791
    %v797 = vmul.f32 1.0, %v796
    %v798 = vmul.f32 %v724, %v777
    %v799 = vpack.c.bf16 %v798, %v798
    %800 = vmatpush.bf16.msra.mxu0 %v296
    %801 = vmatpush.bf16.msra.mxu0 %v295
    %802 = vmatpush.bf16.msra.mxu0 %v294
    %803 = vmatpush.bf16.msra.mxu0 %v293
    %804 = vmatpush.bf16.msra.mxu0 %v292
    %805 = vmatpush.bf16.msra.mxu0 %v291
    %806 = vmatpush.bf16.msra.mxu0 %v290
    %807 = vmatpush.bf16.msra.mxu0 %v289
    %808 = vmatmul.bf16.gmra.mxu0 %v799
    %v809 = vpop.f32.mrf.mxu0
    %v810 = vadd.f32 %v730, %v809
    %v811 = vpop.f32.mrf.mxu0
    %812 = vdwg.mxu0
    %v813 = vtanh.pop %v810
    %v814 = vsub.f32 1.0, %v797
    %v815 = vmul.f32 %v814, %v724
    %v816 = vmul.f32 %v797, %v813
    %v817 = vadd.f32 %v815, %v816
    %s818 = sadd.s32 %s323, 5
    %p819 = scmp.lt.s32.totalorder %s818, %s64
    %s820 = scalar_select %p819, 1, 0
    %v821 = vstv %s820
    %vm822 = vcmp.eq.s32.totalorder %v821, 1
    %v823 = vsel %vm822, %v817, %v724
    %s824 = scalar_lea.vmem [#allocation5], 72
    %v825 = vld [vmem:[%s824] sm:$0xff]
    %v826 = vld [vmem:[%s824 + $0x8] sm:$0xf]
    %v827 = vunpack.c.l.bf16 %v825
    %v828 = vunpack.c.h.bf16 %v825
    %v829 = vunpack.c.l.bf16 %v826
    %v830 = vpack.c.bf16 %v823, %v823
    %831 = vmatpush.bf16.msra.mxu0 %v171
    %832 = vmatpush.bf16.msra.mxu0 %v169
    %833 = vmatpush.bf16.msra.mxu0 %v167
    %834 = vmatpush.bf16.msra.mxu0 %v165
    %835 = vmatpush.bf16.msra.mxu0 %v163
    %836 = vmatpush.bf16.msra.mxu0 %v161
    %837 = vmatpush.bf16.msra.mxu0 %v159
    %838 = vmatpush.bf16.msra.mxu0 %v157
    %839 = vmatmul.bf16.gmra.mxu0 %v830
    %v840 = vpop.f32.mrf.mxu0
    %v841 = vadd.f32 0.0, %v840
    %v842 = vpop.f32.mrf.mxu0
    %843 = vdwg.mxu0
    %844 = vmatpush.bf16.msra.mxu0 %v172
    %845 = vmatpush.bf16.msra.mxu0 %v170
    %846 = vmatpush.bf16.msra.mxu0 %v168
    %847 = vmatpush.bf16.msra.mxu0 %v166
    %848 = vmatpush.bf16.msra.mxu0 %v164
    %849 = vmatpush.bf16.msra.mxu0 %v162
    %850 = vmatpush.bf16.msra.mxu0 %v160
    %851 = vmatpush.bf16.msra.mxu0 %v158
    %852 = vmatmul.bf16.gmra.mxu0 %v830
    %v853 = vpop.f32.mrf.mxu0
    %v854 = vadd.f32 0.0, %v853
    %v855 = vpop.f32.mrf.mxu0
    %856 = vdwg.mxu0
    %v857 = vadd.f32 %v841, %v827
    %v858 = vxor.u32 %v857, 2147483648
    %v859 = vmul.f32 %v858, 1.442695
    %v860 = vpow.pop %v859
    %v861 = vadd.f32 %v860, 1.0
    %v862 = vrcp.pop %v861
    %v863 = vmul.f32 %v861, %v862
    %v864 = vsub.f32 1.0, %v863
    %v865 = vmul.f32 %v862, %v864
    %v866 = vadd.f32 %v862, %v865
    %vm867 = vweird.f32 %v861
    %vm868 = vweird.f32 %v862
    %vm869 = vmor %vm867, %vm868
    %v870 = vsel %vm869, %v862, %v866
    %v871 = vand.u32 2147483647, %v861
    %vm872 = vcmp.eq.f32.partialorder %v871, 8.507059e+37
    %v873 = vand.u32 %v861, 2147483648
    %v874 = vor.u32 1.1754944e-38, %v873
    %v875 = vsel %vm872, %v874, %v870
    %v876 = vmul.f32 1.0, %v875
    %v877 = vadd.f32 %v854, %v828
    %v878 = vxor.u32 %v877, 2147483648
    %v879 = vmul.f32 %v878, 1.442695
    %v880 = vpow.pop %v879
    %v881 = vadd.f32 %v880, 1.0
    %v882 = vrcp.pop %v881
    %v883 = vmul.f32 %v881, %v882
    %v884 = vsub.f32 1.0, %v883
    %v885 = vmul.f32 %v882, %v884
    %v886 = vadd.f32 %v882, %v885
    %vm887 = vweird.f32 %v881
    %vm888 = vweird.f32 %v882
    %vm889 = vmor %vm887, %vm888
    %v890 = vsel %vm889, %v882, %v886
    %v891 = vand.u32 2147483647, %v881
    %vm892 = vcmp.eq.f32.partialorder %v891, 8.507059e+37
    %v893 = vand.u32 %v881, 2147483648
    %v894 = vor.u32 1.1754944e-38, %v893
    %v895 = vsel %vm892, %v894, %v890
    %v896 = vmul.f32 1.0, %v895
    %v897 = vmul.f32 %v823, %v876
    %v898 = vpack.c.bf16 %v897, %v897
    %899 = vmatpush.bf16.msra.mxu0 %v296
    %900 = vmatpush.bf16.msra.mxu0 %v295
    %901 = vmatpush.bf16.msra.mxu0 %v294
    %902 = vmatpush.bf16.msra.mxu0 %v293
    %903 = vmatpush.bf16.msra.mxu0 %v292
    %904 = vmatpush.bf16.msra.mxu0 %v291
    %905 = vmatpush.bf16.msra.mxu0 %v290
    %906 = vmatpush.bf16.msra.mxu0 %v289
    %907 = vmatmul.bf16.gmra.mxu0 %v898
    %v908 = vpop.f32.mrf.mxu0
    %v909 = vadd.f32 %v829, %v908
    %v910 = vpop.f32.mrf.mxu0
    %911 = vdwg.mxu0
    %v912 = vtanh.pop %v909
    %v913 = vsub.f32 1.0, %v896
    %v914 = vmul.f32 %v913, %v823
    %v915 = vmul.f32 %v896, %v912
    %v916 = vadd.f32 %v914, %v915
    %s917 = sadd.s32 %s323, 6
    %p918 = scmp.lt.s32.totalorder %s917, %s64
    %s919 = scalar_select %p918, 1, 0
    %v920 = vstv %s919
    %vm921 = vcmp.eq.s32.totalorder %v920, 1
    %v922 = vsel %vm921, %v916, %v823
    %s923 = scalar_lea.vmem [#allocation5], 84
    %v924 = vld [vmem:[%s923] sm:$0xff]
    %v925 = vld [vmem:[%s923 + $0x8] sm:$0xf]
    %v926 = vunpack.c.l.bf16 %v924
    %v927 = vunpack.c.h.bf16 %v924
    %v928 = vunpack.c.l.bf16 %v925
    %v929 = vpack.c.bf16 %v922, %v922
    %930 = vmatpush.bf16.msra.mxu0 %v171
    %931 = vmatpush.bf16.msra.mxu0 %v169
    %932 = vmatpush.bf16.msra.mxu0 %v167
    %933 = vmatpush.bf16.msra.mxu0 %v165
    %934 = vmatpush.bf16.msra.mxu0 %v163
    %935 = vmatpush.bf16.msra.mxu0 %v161
    %936 = vmatpush.bf16.msra.mxu0 %v159
    %937 = vmatpush.bf16.msra.mxu0 %v157
    %938 = vmatmul.bf16.gmra.mxu0 %v929
    %v939 = vpop.f32.mrf.mxu0
    %v940 = vadd.f32 0.0, %v939
    %v941 = vpop.f32.mrf.mxu0
    %942 = vdwg.mxu0
    %943 = vmatpush.bf16.msra.mxu0 %v172
    %944 = vmatpush.bf16.msra.mxu0 %v170
    %945 = vmatpush.bf16.msra.mxu0 %v168
    %946 = vmatpush.bf16.msra.mxu0 %v166
    %947 = vmatpush.bf16.msra.mxu0 %v164
    %948 = vmatpush.bf16.msra.mxu0 %v162
    %949 = vmatpush.bf16.msra.mxu0 %v160
    %950 = vmatpush.bf16.msra.mxu0 %v158
    %951 = vmatmul.bf16.gmra.mxu0 %v929
    %v952 = vpop.f32.mrf.mxu0
    %v953 = vadd.f32 0.0, %v952
    %v954 = vpop.f32.mrf.mxu0
    %955 = vdwg.mxu0
    %v956 = vadd.f32 %v940, %v926
    %v957 = vxor.u32 %v956, 2147483648
    %v958 = vmul.f32 %v957, 1.442695
    %v959 = vpow.pop %v958
    %v960 = vadd.f32 %v959, 1.0
    %v961 = vrcp.pop %v960
    %v962 = vmul.f32 %v960, %v961
    %v963 = vsub.f32 1.0, %v962
    %v964 = vmul.f32 %v961, %v963
    %v965 = vadd.f32 %v961, %v964
    %vm966 = vweird.f32 %v960
    %vm967 = vweird.f32 %v961
    %vm968 = vmor %vm966, %vm967
    %v969 = vsel %vm968, %v961, %v965
    %v970 = vand.u32 2147483647, %v960
    %vm971 = vcmp.eq.f32.partialorder %v970, 8.507059e+37
    %v972 = vand.u32 %v960, 2147483648
    %v973 = vor.u32 1.1754944e-38, %v972
    %v974 = vsel %vm971, %v973, %v969
    %v975 = vmul.f32 1.0, %v974
    %v976 = vadd.f32 %v953, %v927
    %v977 = vxor.u32 %v976, 2147483648
    %v978 = vmul.f32 %v977, 1.442695
    %v979 = vpow.pop %v978
    %v980 = vadd.f32 %v979, 1.0
    %v981 = vrcp.pop %v980
    %v982 = vmul.f32 %v980, %v981
    %v983 = vsub.f32 1.0, %v982
    %v984 = vmul.f32 %v981, %v983
    %v985 = vadd.f32 %v981, %v984
    %vm986 = vweird.f32 %v980
    %vm987 = vweird.f32 %v981
    %vm988 = vmor %vm986, %vm987
    %v989 = vsel %vm988, %v981, %v985
    %v990 = vand.u32 2147483647, %v980
    %vm991 = vcmp.eq.f32.partialorder %v990, 8.507059e+37
    %v992 = vand.u32 %v980, 2147483648
    %v993 = vor.u32 1.1754944e-38, %v992
    %v994 = vsel %vm991, %v993, %v989
    %v995 = vmul.f32 1.0, %v994
    %v996 = vmul.f32 %v922, %v975
    %v997 = vpack.c.bf16 %v996, %v996
    %998 = vmatpush.bf16.msra.mxu0 %v296
    %999 = vmatpush.bf16.msra.mxu0 %v295
    %1000 = vmatpush.bf16.msra.mxu0 %v294
    %1001 = vmatpush.bf16.msra.mxu0 %v293
    %1002 = vmatpush.bf16.msra.mxu0 %v292
    %1003 = vmatpush.bf16.msra.mxu0 %v291
    %1004 = vmatpush.bf16.msra.mxu0 %v290
    %1005 = vmatpush.bf16.msra.mxu0 %v289
    %1006 = vmatmul.bf16.gmra.mxu0 %v997
    %v1007 = vpop.f32.mrf.mxu0
    %v1008 = vadd.f32 %v928, %v1007
    %v1009 = vpop.f32.mrf.mxu0
    %1010 = vdwg.mxu0
    %v1011 = vtanh.pop %v1008
    %v1012 = vsub.f32 1.0, %v995
    %v1013 = vmul.f32 %v1012, %v922
    %v1014 = vmul.f32 %v995, %v1011
    %v1015 = vadd.f32 %v1013, %v1014
    %s1016 = sadd.s32 %s323, 7
    %p1017 = scmp.lt.s32.totalorder %s1016, %s64
    %s1018 = scalar_select %p1017, 1, 0
    %v1019 = vstv %s1018
    %vm1020 = vcmp.eq.s32.totalorder %v1019, 1
    %v1021 = vsel %vm1020, %v1015, %v922
    %1022 = vst [vmem:[#allocation2] sm:$0xff] %v1021
    // Predicated region
    $region30: #{tpu_custom_call.1} parent=1 // pred_check
      %p1023 = pneg %p65
    $region31: #{tpu_custom_call.1} parent=1 // pred_check_branch
      %1025 = sbr.rel (%p1023) target = $region33
    $region32: #{tpu_custom_call.1} parent=1 // pred_region
      %1026 = vst [vmem:[#allocation11] sm:$0xff] %v1021
    $region33: #{tpu_custom_call.1} parent=1 // pred_fallthru
      _
    // Predicated region
    $region34: #{tpu_custom_call.1} parent=1 // pred_check
      _
    $region35: #{tpu_custom_call.1} parent=1 // pred_check_branch
      %1028 = sbr.rel (0) target = $region37
    $region36: #{tpu_custom_call.1} parent=1 // pred_region
      %1030 = vsyncadd [#allocation7], 0
      %s1032 = sshll.u32 [#allocation11], 4
      %s1033 = int_to_ptr.vmem [resolvable:$true] %s1032
      %s1034 = sshll.u32 %s4, 4
      %s1035 = int_to_ptr.hbm [resolvable:$true] %s1034
      %1037 = dma.vmem_to_hbm [thread:$0]  %s1033, 128, %s1035, [#allocation7]
    $region37: #{tpu_custom_call.1} parent=1 // pred_fallthru
      _
    // Predicated region
    $region38: #{tpu_custom_call.1} parent=1 // pred_check
      _
    $region39: #{tpu_custom_call.1} parent=1 // pred_check_branch
      %1039 = sbr.rel (0) target = $region41
    $region40: #{tpu_custom_call.1} parent=1 // pred_region
      %1041 = dma.done [#allocation7], 128
    $region41: #{tpu_custom_call.1} parent=1 // pred_fallthru
      _
    %1042 = vsyncpa [#allocation6], 1
    %1043 = vsyncpa [#allocation9], 1
    %1044 = vsyncpa [#allocation7], 1

</llo_original>
